<compile_context>
chip_gen: v7x
topology: tpu7x:2x2x1
jax: 0.10.0
libtpu: 0.0.40
codegen_flags: <defaults>
</compile_context>

<pallas_src>
import functools

import jax
import jax.numpy as jnp
from jax.experimental import pallas as pl
from jax.experimental.pallas import tpu as pltpu

_EPS = 1e-6
_VMEM_LIMIT = 32 * 1024 * 1024


# --------------------------------------------------------------------------------------
# pass 1: per-(image, channel) sum / sum-of-squares of x (GroupNorm-1 statistics)
# --------------------------------------------------------------------------------------
def _stats_kernel(x_ref, stats_ref):
    t = pl.program_id(1)

    @pl.when(t == 0)
    def _():
        stats_ref[...] = jnp.zeros_like(stats_ref)

    th, w, c = x_ref.shape[1], x_ref.shape[2], x_ref.shape[3]
    x = x_ref[0].astype(jnp.float32).reshape(th * w, c)
    stats_ref[0] += jnp.concatenate(
        [jnp.sum(x, axis=0, keepdims=True),
         jnp.sum(x * x, axis=0, keepdims=True)], axis=0)


# --------------------------------------------------------------------------------------
# pass 2: h1 = conv1(swish(norm1(x))) per (batch, row-tile), accumulating norm2 stats
# --------------------------------------------------------------------------------------
def _conv1_kernel(xt_ref, xtop_ref, xbot_ref, sc_ref, sh_ref, w_ref, cb_ref,
                  h1_ref, stats_ref, pad_ref):
    t = pl.program_id(1)
    nt = pl.num_programs(1)
    th, w, cin = xt_ref.shape[1], xt_ref.shape[2], xt_ref.shape[3]
    cout = h1_ref.shape[3]

    sc = sc_ref[0]                                   # (1, Cin) folded GroupNorm scale
    sh = sh_ref[0]                                   # (1, Cin) folded GroupNorm shift

    def norm_swish(v):                               # v: (rows, W, Cin) f32
        u = v * sc + sh
        return u * jax.nn.sigmoid(u)

    # Zero only the left/right border columns, once per image (they are never written
    # by the per-tile interior stores) -> no full scratch zero-fill per step.
    @pl.when(t == 0)
    def _():
        pad_ref[:, 0:1, :] = jnp.zeros((th + 2, 1, cin), pad_ref.dtype)
        pad_ref[:, w + 1:w + 2, :] = jnp.zeros((th + 2, 1, cin), pad_ref.dtype)

    g_mid = norm_swish(xt_ref[0].astype(jnp.float32))        # (TH, W, Cin)
    g_top = norm_swish(xtop_ref[0].astype(jnp.float32))      # (1, W, Cin) halo row above
    g_bot = norm_swish(xbot_ref[0].astype(jnp.float32))      # (1, W, Cin) halo row below
    # conv zero-padding at the image top/bottom edges
    g_top = g_top * (t > 0).astype(jnp.float32)
    g_bot = g_bot * (t < nt - 1).astype(jnp.float32)

    pad_ref[1:th + 1, 1:w + 1, :] = g_mid
    pad_ref[0:1, 1:w + 1, :] = g_top
    pad_ref[th + 1:th + 2, 1:w + 1, :] = g_bot

    # 3x3 conv: fold the 3 dx taps into K (K = 3*Cin) -> 3 bf16 MXU matmuls, f32 acc.
    acc = jnp.zeros((th * w, cout), jnp.float32)
    for dy in range(3):
        slab = pad_ref[dy:dy + th]                           # (TH, W+2, Cin)
        lhs = jnp.concatenate(
            [slab[:, 0:w], slab[:, 1:w + 1], slab[:, 2:w + 2]], axis=-1)
        acc = acc + jnp.dot(
            lhs.reshape(th * w, 3 * cin).astype(w_ref.dtype), w_ref[dy],
            preferred_element_type=jnp.float32)
    h1 = acc + cb_ref[...]                                   # (TH*W, Cout)

    # accumulate norm2 statistics (per-channel sum / sum of squares) across row tiles
    @pl.when(t == 0)
    def _():
        stats_ref[...] = jnp.zeros_like(stats_ref)

    stats_ref[0] += jnp.concatenate(
        [jnp.sum(h1, axis=0, keepdims=True),
         jnp.sum(h1 * h1, axis=0, keepdims=True)], axis=0)

    h1_ref[0] = h1.reshape(th, w, cout).astype(h1_ref.dtype)


# --------------------------------------------------------------------------------------
# pass 3: out = shortcut(x) + conv2(swish(norm2(h1))) per (batch, row-tile)
# --------------------------------------------------------------------------------------
def _conv2_kernel(project, h1t_ref, htop_ref, hbot_ref, xt_ref, sc_ref, sh_ref,
                  w_ref, cb_ref, *rest):
    if project:
        wsc_ref, bsc_ref, out_ref, pad_ref = rest
    else:
        out_ref, pad_ref = rest
    t = pl.program_id(1)
    nt = pl.num_programs(1)
    th, w, cout = h1t_ref.shape[1], h1t_ref.shape[2], h1t_ref.shape[3]
    cin = xt_ref.shape[3]

    sc = sc_ref[0]
    sh = sh_ref[0]

    def norm_swish(v):
        u = v * sc + sh
        return u * jax.nn.sigmoid(u)

    # Border columns re-zeroed every step (two 1-wide columns, cheap) so this pass
    # carries no scratch state across grid steps and both grid axes can be "parallel".
    pad_ref[:, 0:1, :] = jnp.zeros((th + 2, 1, cout), pad_ref.dtype)
    pad_ref[:, w + 1:w + 2, :] = jnp.zeros((th + 2, 1, cout), pad_ref.dtype)

    g_mid = norm_swish(h1t_ref[0].astype(jnp.float32))
    g_top = norm_swish(htop_ref[0].astype(jnp.float32))
    g_bot = norm_swish(hbot_ref[0].astype(jnp.float32))
    g_top = g_top * (t > 0).astype(jnp.float32)
    g_bot = g_bot * (t < nt - 1).astype(jnp.float32)
    # dropout(p=0.0) is the identity and is elided here.

    pad_ref[1:th + 1, 1:w + 1, :] = g_mid
    pad_ref[0:1, 1:w + 1, :] = g_top
    pad_ref[th + 1:th + 2, 1:w + 1, :] = g_bot

    acc = jnp.zeros((th * w, cout), jnp.float32)
    for dy in range(3):
        slab = pad_ref[dy:dy + th]                           # (TH, W+2, Cout)
        lhs = jnp.concatenate(
            [slab[:, 0:w], slab[:, 1:w + 1], slab[:, 2:w + 2]], axis=-1)
        acc = acc + jnp.dot(
            lhs.reshape(th * w, 3 * cout).astype(w_ref.dtype), w_ref[dy],
            preferred_element_type=jnp.float32)
    h2 = acc + cb_ref[...]                                   # (TH*W, Cout)

    xf = xt_ref[0].astype(jnp.float32).reshape(th * w, cin)
    if project:
        # 1x1 nin_shortcut projection (only when Cin != Cout)
        xs = jnp.dot(xf.astype(wsc_ref.dtype), wsc_ref[...],
                     preferred_element_type=jnp.float32) + bsc_ref[...]
    else:
        # identity shortcut: plain residual add, no identity-matrix matmul
        xs = xf

    out_ref[0] = (xs + h2).reshape(th, w, cout).astype(out_ref.dtype)


# --------------------------------------------------------------------------------------
# wrapper
# --------------------------------------------------------------------------------------
def _row_halos(a, tile_h, n_tiles):
    """For (B, H, W, C) `a`, return (top, bot) of shape (B, nT, W, C): the single row
    just above / below each row-tile. Contents at the image border are irrelevant
    (the kernels zero them); only ~2*nT rows per image are gathered."""
    b, h, w, c = a.shape
    zrow = jnp.zeros((b, 1, w, c), a.dtype)
    if n_tiles == 1:
        return zrow, zrow
    top = jnp.concatenate([zrow, a[:, tile_h - 1:h - 1:tile_h]], axis=1)
    bot = jnp.concatenate([a[:, tile_h:h:tile_h], zrow], axis=1)
    return top, bot


def _fold_norm(stats, gamma, beta, n):
    """Fold per-channel GroupNorm (num_groups == C) + affine into scale/shift."""
    mean = stats[:, 0, :] / n
    var = stats[:, 1, :] / n - mean * mean
    scale = gamma[None, :] * jax.lax.rsqrt(var + _EPS)
    shift = beta[None, :] - mean * scale
    return (scale[:, None, :].astype(jnp.float32),
            shift[:, None, :].astype(jnp.float32))          # (B, 1, C)


def resnet_block_forward(x, params, *, tile_h=None):
    """ResnetBlock forward. x: (B, H, W, Cin) float32, NHWC. Returns (B, H, W, Cout)."""
    B, H, W, Cin = x.shape
    Cout = params["conv1_w"].shape[-1]
    project = Cin != Cout
    TH = tile_h if tile_h is not None else (8 if H % 8 == 0 else H)
    assert H % TH == 0, (H, TH)
    nT = H // TH
    f32, bf16 = jnp.float32, jnp.bfloat16

    x = x.astype(f32)
    n_pix = H * W

    # ---- pass 1: norm1 statistics --------------------------------------------------
    stats1 = pl.pallas_call(
        _stats_kernel,
        out_shape=jax.ShapeDtypeStruct((B, 2, Cin), f32),
        grid_spec=pltpu.PrefetchScalarGridSpec(
            num_scalar_prefetch=0,
            grid=(B, nT),
            in_specs=[pl.BlockSpec((1, TH, W, Cin), lambda b, t: (b, t, 0, 0))],
            out_specs=pl.BlockSpec((1, 2, Cin), lambda b, t: (b, 0, 0)),
        ),
        compiler_params=pltpu.CompilerParams(
            dimension_semantics=("parallel", "arbitrary"),
            vmem_limit_bytes=_VMEM_LIMIT),
    )(x)
    sc1, sh1 = _fold_norm(stats1, params["norm1_g"], params["norm1_b"], n_pix)

    x_top, x_bot = _row_halos(x, TH, nT)
    w1 = params["conv1_w"].reshape(3, 3 * Cin, Cout).astype(bf16)
    cb1 = params["conv1_b"].reshape(1, Cout).astype(f32)

    # ---- pass 2: conv1 (+ fused norm2-stats accumulation) ---------------------------
    h1, stats2 = pl.pallas_call(
        _conv1_kernel,
        out_shape=(jax.ShapeDtypeStruct((B, H, W, Cout), bf16),
                   jax.ShapeDtypeStruct((B, 2, Cout), f32)),
        grid_spec=pltpu.PrefetchScalarGridSpec(
            num_scalar_prefetch=0,
            grid=(B, nT),
            in_specs=[
                pl.BlockSpec((1, TH, W, Cin), lambda b, t: (b, t, 0, 0)),
                pl.BlockSpec((1, 1, W, Cin), lambda b, t: (b, t, 0, 0)),
                pl.BlockSpec((1, 1, W, Cin), lambda b, t: (b, t, 0, 0)),
                pl.BlockSpec((1, 1, Cin), lambda b, t: (b, 0, 0)),
                pl.BlockSpec((1, 1, Cin), lambda b, t: (b, 0, 0)),
                pl.BlockSpec((3, 3 * Cin, Cout), lambda b, t: (0, 0, 0),
                             pipeline_mode=pl.Buffered(1)),
                pl.BlockSpec((1, Cout), lambda b, t: (0, 0)),
            ],
            out_specs=(pl.BlockSpec((1, TH, W, Cout), lambda b, t: (b, t, 0, 0)),
                       pl.BlockSpec((1, 2, Cout), lambda b, t: (b, 0, 0))),
            scratch_shapes=[pltpu.VMEM((TH + 2, W + 2, Cin), f32)],
        ),
        compiler_params=pltpu.CompilerParams(
            dimension_semantics=("parallel", "arbitrary"),
            vmem_limit_bytes=_VMEM_LIMIT),
    )(x, x_top, x_bot, sc1, sh1, w1, cb1)

    sc2, sh2 = _fold_norm(stats2, params["norm2_g"], params["norm2_b"], n_pix)
    h1_top, h1_bot = _row_halos(h1, TH, nT)
    w2 = params["conv2_w"].reshape(3, 3 * Cout, Cout).astype(bf16)
    cb2 = params["conv2_b"].reshape(1, Cout).astype(f32)

    in_specs = [
        pl.BlockSpec((1, TH, W, Cout), lambda b, t: (b, t, 0, 0)),
        pl.BlockSpec((1, 1, W, Cout), lambda b, t: (b, t, 0, 0)),
        pl.BlockSpec((1, 1, W, Cout), lambda b, t: (b, t, 0, 0)),
        pl.BlockSpec((1, TH, W, Cin), lambda b, t: (b, t, 0, 0)),
        pl.BlockSpec((1, 1, Cout), lambda b, t: (b, 0, 0)),
        pl.BlockSpec((1, 1, Cout), lambda b, t: (b, 0, 0)),
        pl.BlockSpec((3, 3 * Cout, Cout), lambda b, t: (0, 0, 0),
                     pipeline_mode=pl.Buffered(1)),
        pl.BlockSpec((1, Cout), lambda b, t: (0, 0)),
    ]
    args = [h1, h1_top, h1_bot, x, sc2, sh2, w2, cb2]
    if project:
        in_specs += [pl.BlockSpec((Cin, Cout), lambda b, t: (0, 0),
                                  pipeline_mode=pl.Buffered(1)),
                     pl.BlockSpec((1, Cout), lambda b, t: (0, 0))]
        args += [params["nin_w"].astype(bf16),
                 params["nin_b"].reshape(1, Cout).astype(f32)]

    # ---- pass 3: conv2 + shortcut + residual add ------------------------------------
    out = pl.pallas_call(
        functools.partial(_conv2_kernel, project),
        out_shape=jax.ShapeDtypeStruct((B, H, W, Cout), f32),
        grid_spec=pltpu.PrefetchScalarGridSpec(
            num_scalar_prefetch=0,
            grid=(B, nT),
            in_specs=in_specs,
            out_specs=pl.BlockSpec((1, TH, W, Cout), lambda b, t: (b, t, 0, 0)),
            scratch_shapes=[pltpu.VMEM((TH + 2, W + 2, Cout), f32)],
        ),
        compiler_params=pltpu.CompilerParams(
            dimension_semantics=("parallel", "parallel"),
            vmem_limit_bytes=_VMEM_LIMIT),
    )(*args)
    return out


def resnet_block_forward_nchw(x_nchw, params, *, tile_h=None):
    """Drop-in compatibility wrapper for the PyTorch NCHW layout. For best performance
    keep the surrounding model NHWC end-to-end and call resnet_block_forward directly
    (these transposes are full HBM round-trips)."""
    x = jnp.transpose(x_nchw, (0, 2, 3, 1))
    y = resnet_block_forward(x, params, tile_h=tile_h)
    return jnp.transpose(y, (0, 3, 1, 2))


# --------------------------------------------------------------------------------------
# pure-JAX reference (NHWC), mirroring the PyTorch module semantics
# --------------------------------------------------------------------------------------
def _ref_forward_nhwc(x, params):
    cin = x.shape[-1]
    cout = params["conv1_w"].shape[-1]

    def gn(h, g, b):    # GroupNorm with num_groups == num_channels (per-channel)
        m = jnp.mean(h, axis=(1, 2), keepdims=True)
        v = jnp.mean(jnp.square(h - m), axis=(1, 2), keepdims=True)
        return (h - m) * jax.lax.rsqrt(v + _EPS) * g + b

    def conv3(h, w, b):
        y = jax.lax.conv_general_dilated(
            h, w, window_strides=(1, 1), padding=((1, 1), (1, 1)),
            dimension_numbers=("NHWC", "HWIO", "NHWC"))
        return y + b

    h = gn(x, params["norm1_g"], params["norm1_b"])
    h = h * jax.nn.sigmoid(h)
    h = conv3(h, params["conv1_w"], params["conv1_b"])
    h = gn(h, params["norm2_g"], params["norm2_b"])
    h = h * jax.nn.sigmoid(h)
    h = conv3(h, params["conv2_w"], params["conv2_b"])
    if cin != cout:
        xs = jnp.einsum("bhwc,cd->bhwd", x, params["nin_w"]) + params["nin_b"]
    else:
        xs = x
    return xs + h


def make_params(key, cin, cout):
    ks = jax.random.split(key, 8)
    p = {
        "norm1_g": 1.0 + 0.1 * jax.random.normal(ks[0], (cin,), jnp.float32),
        "norm1_b": 0.1 * jax.random.normal(ks[1], (cin,), jnp.float32),
        "conv1_w": 0.1 * jax.random.normal(ks[2], (3, 3, cin, cout), jnp.float32),
        "conv1_b": 0.05 * jax.random.normal(ks[3], (cout,), jnp.float32),
        "norm2_g": 1.0 + 0.1 * jax.random.normal(ks[4], (cout,), jnp.float32),
        "norm2_b": 0.1 * jax.random.normal(ks[5], (cout,), jnp.float32),
        "conv2_w": 0.1 * jax.random.normal(ks[6], (3, 3, cout, cout), jnp.float32),
        "conv2_b": 0.05 * jax.random.normal(ks[7], (cout,), jnp.float32),
    }
    if cin != cout:
        kk = jax.random.split(ks[0], 2)
        p["nin_w"] = 0.1 * jax.random.normal(kk[0], (cin, cout), jnp.float32)
        p["nin_b"] = 0.05 * jax.random.normal(kk[1], (cout,), jnp.float32)
    return p


if __name__ == "__main__":
    key = jax.random.PRNGKey(0)
    kx1, kp1, kx2, kp2 = jax.random.split(key, 4)
    fwd = jax.jit(resnet_block_forward)

    # bf16 MXU matmuls (f32 accumulation) -> slightly relaxed tolerance vs pure f32.
    ATOL = RTOL = 5e-2

    # Case 1: Cin != Cout -> exercises the 1x1 nin_shortcut projection path.
    B, H, W, Cin, Cout = 2, 16, 16, 4, 8
    x1 = jax.random.normal(kx1, (B, H, W, Cin), jnp.float32)
    p1 = make_params(kp1, Cin, Cout)
    out1 = jax.block_until_ready(fwd(x1, p1))
    ref1 = jax.block_until_ready(_ref_forward_nhwc(x1, p1))
    assert out1.shape == (B, H, W, Cout), out1.shape
    assert jnp.allclose(out1, ref1, atol=ATOL, rtol=RTOL), (
        float(jnp.max(jnp.abs(out1 - ref1))))

    # Case 2: Cin == Cout -> identity shortcut (no projection matmul in the kernel).
    C = 8
    x2 = jax.random.normal(kx2, (B, H, W, C), jnp.float32)
    p2 = make_params(kp2, C, C)
    out2 = jax.block_until_ready(fwd(x2, p2))
    ref2 = jax.block_until_ready(_ref_forward_nhwc(x2, p2))
    assert out2.shape == (B, H, W, C), out2.shape
    assert jnp.allclose(out2, ref2, atol=ATOL, rtol=RTOL), (
        float(jnp.max(jnp.abs(out2 - ref2))))

    # NCHW drop-in wrapper matches the NHWC path.
    out_nchw = jax.block_until_ready(
        resnet_block_forward_nchw(jnp.transpose(x1, (0, 3, 1, 2)), p1))
    assert jnp.allclose(out_nchw, jnp.transpose(out1, (0, 3, 1, 2)),
                        atol=1e-5, rtol=1e-5)

    print("KERNEL_OK")
</pallas_src>

<mosaic_0001>
module attributes {stable_mosaic.version = 11 : i64} {
  func.func @_stats_kernel(%arg0: i32, %arg1: i32, %arg2: memref<1x8x16x4xf32, #tpu.memory_space<vmem>>, %arg3: memref<1x2x4xf32, #tpu.memory_space<vmem>>) attributes {dimension_semantics = [#tpu.dimension_semantics<parallel>, #tpu.dimension_semantics<arbitrary>], iteration_bounds = array<i64: 2, 2>, scalar_prefetch = 0 : i64, scratch_operands = 0 : i64, tpu.core_type = #tpu.core_type<tc>, window_params = [{transform_indices = @transform_0, window_bounds = array<i64: 1, 8, 16, 4>}, {transform_indices = @transform_1, window_bounds = array<i64: 1, 2, 4>}]} {
    %c0_i32 = arith.constant 0 : i32
    %0 = arith.cmpi eq, %arg1, %c0_i32 : i32
    %1 = arith.extui %0 : i1 to i32
    %c0_i32_0 = arith.constant 0 : i32
    %2 = arith.cmpi ne, %1, %c0_i32_0 : i32
    scf.if %2 {
      %cst_11 = arith.constant 0.000000e+00 : f32
      %18 = vector.broadcast %cst_11 : f32 to vector<1x2x4xf32>
      %c0_12 = arith.constant 0 : index
      %c0_13 = arith.constant 0 : index
      %c0_14 = arith.constant 0 : index
      %19 = vector.load %arg3[%c0_12, %c0_13, %c0_14] : memref<1x2x4xf32, #tpu.memory_space<vmem>>, vector<1x2x4xf32>
      tpu.vector_store %arg3[%c0_12, %c0_13, %c0_14], %18 {strides = array<i32>} : memref<1x2x4xf32, #tpu.memory_space<vmem>>, vector<1x2x4xf32>,
    } else {
    }
    %c0 = arith.constant 0 : index
    %c0_1 = arith.constant 0 : index
    %c0_2 = arith.constant 0 : index
    %c0_3 = arith.constant 0 : index
    %3 = vector.load %arg2[%c0, %c0_1, %c0_2, %c0_3] : memref<1x8x16x4xf32, #tpu.memory_space<vmem>>, vector<1x8x16x4xf32>
    %4 = vector.shape_cast %3 : vector<1x8x16x4xf32> to vector<8x16x4xf32>
    %5 = vector.shape_cast %4 : vector<8x16x4xf32> to vector<128x4xf32>
    %c0_4 = arith.constant 0 : index
    %c0_5 = arith.constant 0 : index
    %c0_6 = arith.constant 0 : index
    %6 = vector.load %arg3[%c0_4, %c0_5, %c0_6] : memref<1x2x4xf32, #tpu.memory_space<vmem>>, vector<1x2x4xf32>
    %7 = vector.shape_cast %6 : vector<1x2x4xf32> to vector<2x4xf32>
    %cst = arith.constant dense<0.000000e+00> : vector<4xf32>
    %8 = vector.multi_reduction <add>, %5, %cst [0] : vector<128x4xf32> to vector<4xf32>
    %9 = vector.shape_cast %8 : vector<4xf32> to vector<1x4xf32>
    %10 = arith.mulf %5, %5 : vector<128x4xf32>
    %cst_7 = arith.constant dense<0.000000e+00> : vector<4xf32>
    %11 = vector.multi_reduction <add>, %10, %cst_7 [0] : vector<128x4xf32> to vector<4xf32>
    %12 = vector.shape_cast %11 : vector<4xf32> to vector<1x4xf32>
    %13 = tpu.concatenate %9, %12 in 0 : vector<1x4xf32>, vector<1x4xf32> -> vector<2x4xf32>
    %14 = arith.addf %7, %13 : vector<2x4xf32>
    %c0_8 = arith.constant 0 : index
    %c0_9 = arith.constant 0 : index
    %c0_10 = arith.constant 0 : index
    %15 = vector.load %arg3[%c0_8, %c0_9, %c0_10] : memref<1x2x4xf32, #tpu.memory_space<vmem>>, vector<1x2x4xf32>
    %16 = vector.shape_cast %15 : vector<1x2x4xf32> to vector<2x4xf32>
    %17 = vector.shape_cast %14 : vector<2x4xf32> to vector<1x2x4xf32>
    tpu.vector_store %arg3[%c0_8, %c0_9, %c0_10], %17 {strides = array<i32>} : memref<1x2x4xf32, #tpu.memory_space<vmem>>, vector<1x2x4xf32>,
    return
  }
  func.func @transform_0(%arg0: i32, %arg1: i32) -> (i32, i32, i32, i32) {
    %c0_i32 = arith.constant 0 : i32
    %c0_i32_0 = arith.constant 0 : i32
    %c0_i32_1 = arith.constant 0 : i32
    return %arg0, %arg1, %c0_i32, %c0_i32_0 : i32, i32, i32, i32
  }
  func.func @transform_1(%arg0: i32, %arg1: i32) -> (i32, i32, i32) {
    %c0_i32 = arith.constant 0 : i32
    %c0_i32_0 = arith.constant 0 : i32
    %c0_i32_1 = arith.constant 0 : i32
    return %arg0, %c0_i32, %c0_i32_0 : i32, i32, i32
  }
}

module attributes {stable_mosaic.version = 11 : i64} {
  func.func @_conv1_kernel(%arg0: i32, %arg1: i32, %arg2: memref<1x8x16x4xf32, #tpu.memory_space<vmem>>, %arg3: memref<1x1x16x4xf32, #tpu.memory_space<vmem>>, %arg4: memref<1x1x16x4xf32, #tpu.memory_space<vmem>>, %arg5: memref<1x1x4xf32, #tpu.memory_space<vmem>>, %arg6: memref<1x1x4xf32, #tpu.memory_space<vmem>>, %arg7: memref<3x12x8xbf16, #tpu.memory_space<vmem>>, %arg8: memref<1x8xf32, #tpu.memory_space<vmem>>, %arg9: memref<1x8x16x8xbf16, #tpu.memory_space<vmem>>, %arg10: memref<1x2x8xf32, #tpu.memory_space<vmem>>, %arg11: memref<10x18x4xf32, #tpu.memory_space<vmem>>) attributes {dimension_semantics = [#tpu.dimension_semantics<parallel>, #tpu.dimension_semantics<arbitrary>], iteration_bounds = array<i64: 2, 2>, scalar_prefetch = 0 : i64, scratch_operands = 1 : i64, tpu.core_type = #tpu.core_type<tc>, window_params = [{transform_indices = @transform_0, window_bounds = array<i64: 1, 8, 16, 4>}, {transform_indices = @transform_1, window_bounds = array<i64: 1, 1, 16, 4>}, {transform_indices = @transform_2, window_bounds = array<i64: 1, 1, 16, 4>}, {transform_indices = @transform_3, window_bounds = array<i64: 1, 1, 4>}, {transform_indices = @transform_4, window_bounds = array<i64: 1, 1, 4>}, {pipeline_mode = #tpu.pipeline_mode<synchronous>, transform_indices = @transform_5, window_bounds = array<i64: 3, 12, 8>}, {pipeline_mode = #tpu.pipeline_mode<synchronous>, transform_indices = @transform_6, window_bounds = array<i64: 1, 8>}, {transform_indices = @transform_7, window_bounds = array<i64: 1, 8, 16, 8>}, {transform_indices = @transform_8, window_bounds = array<i64: 1, 2, 8>}]} {
    %c0 = arith.constant 0 : index
    %c0_0 = arith.constant 0 : index
    %c0_1 = arith.constant 0 : index
    %0 = vector.load %arg5[%c0, %c0_0, %c0_1] : memref<1x1x4xf32, #tpu.memory_space<vmem>>, vector<1x1x4xf32>
    %1 = vector.shape_cast %0 : vector<1x1x4xf32> to vector<1x4xf32>
    %c0_2 = arith.constant 0 : index
    %c0_3 = arith.constant 0 : index
    %c0_4 = arith.constant 0 : index
    %2 = vector.load %arg6[%c0_2, %c0_3, %c0_4] : memref<1x1x4xf32, #tpu.memory_space<vmem>>, vector<1x1x4xf32>
    %3 = vector.shape_cast %2 : vector<1x1x4xf32> to vector<1x4xf32>
    %c0_i32 = arith.constant 0 : i32
    %4 = arith.cmpi eq, %arg1, %c0_i32 : i32
    %5 = arith.extui %4 : i1 to i32
    %c0_i32_5 = arith.constant 0 : i32
    %6 = arith.cmpi ne, %5, %c0_i32_5 : i32
    scf.if %6 {
      %cst_65 = arith.constant 0.000000e+00 : f32
      %119 = vector.broadcast %cst_65 : f32 to vector<10x1x4xf32>
      %c0_66 = arith.constant 0 : index
      %c0_67 = arith.constant 0 : index
      %c0_68 = arith.constant 0 : index
      %120 = vector.load %arg11[%c0_66, %c0_67, %c0_68] : memref<10x18x4xf32, #tpu.memory_space<vmem>>, vector<10x1x4xf32>
      tpu.vector_store %arg11[%c0_66, %c0_67, %c0_68], %119 {strides = array<i32>} : memref<10x18x4xf32, #tpu.memory_space<vmem>>, vector<10x1x4xf32>,
      %cst_69 = arith.constant 0.000000e+00 : f32
      %121 = vector.broadcast %cst_69 : f32 to vector<10x1x4xf32>
      %c0_70 = arith.constant 0 : index
      %c17 = arith.constant 17 : index
      %c0_71 = arith.constant 0 : index
      %122 = vector.load %arg11[%c0_70, %c17, %c0_71] : memref<10x18x4xf32, #tpu.memory_space<vmem>>, vector<10x1x4xf32>
      tpu.vector_store %arg11[%c0_70, %c17, %c0_71], %121 {strides = array<i32>} : memref<10x18x4xf32, #tpu.memory_space<vmem>>, vector<10x1x4xf32>,
    } else {
    }
    %c0_6 = arith.constant 0 : index
    %c0_7 = arith.constant 0 : index
    %c0_8 = arith.constant 0 : index
    %c0_9 = arith.constant 0 : index
    %7 = vector.load %arg2[%c0_6, %c0_7, %c0_8, %c0_9] : memref<1x8x16x4xf32, #tpu.memory_space<vmem>>, vector<1x8x16x4xf32>
    %8 = vector.shape_cast %7 : vector<1x8x16x4xf32> to vector<8x16x4xf32>
    %9 = vector.shape_cast %1 : vector<1x4xf32> to vector<1x1x4xf32>
    %10 = vector.broadcast %9 : vector<1x1x4xf32> to vector<8x16x4xf32>
    %11 = arith.mulf %8, %10 : vector<8x16x4xf32>
    %12 = vector.shape_cast %3 : vector<1x4xf32> to vector<1x1x4xf32>
    %13 = vector.broadcast %12 : vector<1x1x4xf32> to vector<8x16x4xf32>
    %14 = arith.addf %11, %13 : vector<8x16x4xf32>
    %15 = arith.negf %14 : vector<8x16x4xf32>
    %16 = math.exp %15 : vector<8x16x4xf32>
    %cst = arith.constant 1.000000e+00 : f32
    %17 = vector.broadcast %cst : f32 to vector<8x16x4xf32>
    %18 = arith.addf %17, %16 : vector<8x16x4xf32>
    %19 = arith.divf %17, %18 : vector<8x16x4xf32>
    %20 = arith.mulf %14, %19 : vector<8x16x4xf32>
    %c0_10 = arith.constant 0 : index
    %c0_11 = arith.constant 0 : index
    %c0_12 = arith.constant 0 : index
    %c0_13 = arith.constant 0 : index
    %21 = vector.load %arg3[%c0_10, %c0_11, %c0_12, %c0_13] : memref<1x1x16x4xf32, #tpu.memory_space<vmem>>, vector<1x1x16x4xf32>
    %22 = vector.shape_cast %21 : vector<1x1x16x4xf32> to vector<1x16x4xf32>
    %23 = vector.shape_cast %1 : vector<1x4xf32> to vector<1x1x4xf32>
    %24 = vector.broadcast %23 : vector<1x1x4xf32> to vector<1x16x4xf32>
    %25 = arith.mulf %22, %24 : vector<1x16x4xf32>
    %26 = vector.shape_cast %3 : vector<1x4xf32> to vector<1x1x4xf32>
    %27 = vector.broadcast %26 : vector<1x1x4xf32> to vector<1x16x4xf32>
    %28 = arith.addf %25, %27 : vector<1x16x4xf32>
    %29 = arith.negf %28 : vector<1x16x4xf32>
    %30 = math.exp %29 : vector<1x16x4xf32>
    %cst_14 = arith.constant 1.000000e+00 : f32
    %31 = vector.broadcast %cst_14 : f32 to vector<1x16x4xf32>
    %32 = arith.addf %31, %30 : vector<1x16x4xf32>
    %33 = arith.divf %31, %32 : vector<1x16x4xf32>
    %34 = arith.mulf %28, %33 : vector<1x16x4xf32>
    %c0_15 = arith.constant 0 : index
    %c0_16 = arith.constant 0 : index
    %c0_17 = arith.constant 0 : index
    %c0_18 = arith.constant 0 : index
    %35 = vector.load %arg4[%c0_15, %c0_16, %c0_17, %c0_18] : memref<1x1x16x4xf32, #tpu.memory_space<vmem>>, vector<1x1x16x4xf32>
    %36 = vector.shape_cast %35 : vector<1x1x16x4xf32> to vector<1x16x4xf32>
    %37 = vector.shape_cast %1 : vector<1x4xf32> to vector<1x1x4xf32>
    %38 = vector.broadcast %37 : vector<1x1x4xf32> to vector<1x16x4xf32>
    %39 = arith.mulf %36, %38 : vector<1x16x4xf32>
    %40 = vector.shape_cast %3 : vector<1x4xf32> to vector<1x1x4xf32>
    %41 = vector.broadcast %40 : vector<1x1x4xf32> to vector<1x16x4xf32>
    %42 = arith.addf %39, %41 : vector<1x16x4xf32>
    %43 = arith.negf %42 : vector<1x16x4xf32>
    %44 = math.exp %43 : vector<1x16x4xf32>
    %cst_19 = arith.constant 1.000000e+00 : f32
    %45 = vector.broadcast %cst_19 : f32 to vector<1x16x4xf32>
    %46 = arith.addf %45, %44 : vector<1x16x4xf32>
    %47 = arith.divf %45, %46 : vector<1x16x4xf32>
    %48 = arith.mulf %42, %47 : vector<1x16x4xf32>
    %c0_i32_20 = arith.constant 0 : i32
    %49 = arith.cmpi sgt, %arg1, %c0_i32_20 : i32
    %50 = arith.extui %49 : i1 to i32
    %51 = arith.sitofp %50 : i32 to f32
    %52 = vector.broadcast %51 : f32 to vector<1x16x4xf32>
    %53 = arith.mulf %34, %52 : vector<1x16x4xf32>
    %c1_i32 = arith.constant 1 : i32
    %54 = arith.cmpi slt, %arg1, %c1_i32 : i32
    %55 = arith.extui %54 : i1 to i32
    %56 = arith.sitofp %55 : i32 to f32
    %57 = vector.broadcast %56 : f32 to vector<1x16x4xf32>
    %58 = arith.mulf %48, %57 : vector<1x16x4xf32>
    %c1 = arith.constant 1 : index
    %c1_21 = arith.constant 1 : index
    %c0_22 = arith.constant 0 : index
    %59 = vector.load %arg11[%c1, %c1_21, %c0_22] : memref<10x18x4xf32, #tpu.memory_space<vmem>>, vector<8x16x4xf32>
    tpu.vector_store %arg11[%c1, %c1_21, %c0_22], %20 {strides = array<i32>} : memref<10x18x4xf32, #tpu.memory_space<vmem>>, vector<8x16x4xf32>,
    %c0_23 = arith.constant 0 : index
    %c1_24 = arith.constant 1 : index
    %c0_25 = arith.constant 0 : index
    %60 = vector.load %arg11[%c0_23, %c1_24, %c0_25] : memref<10x18x4xf32, #tpu.memory_space<vmem>>, vector<1x16x4xf32>
    tpu.vector_store %arg11[%c0_23, %c1_24, %c0_25], %53 {strides = array<i32>} : memref<10x18x4xf32, #tpu.memory_space<vmem>>, vector<1x16x4xf32>,
    %c9 = arith.constant 9 : index
    %c1_26 = arith.constant 1 : index
    %c0_27 = arith.constant 0 : index
    %61 = vector.load %arg11[%c9, %c1_26, %c0_27] : memref<10x18x4xf32, #tpu.memory_space<vmem>>, vector<1x16x4xf32>
    tpu.vector_store %arg11[%c9, %c1_26, %c0_27], %58 {strides = array<i32>} : memref<10x18x4xf32, #tpu.memory_space<vmem>>, vector<1x16x4xf32>,
    %cst_28 = arith.constant 0.000000e+00 : f32
    %62 = vector.broadcast %cst_28 : f32 to vector<128x8xf32>
    %c0_29 = arith.constant 0 : index
    %c0_30 = arith.constant 0 : index
    %c0_31 = arith.constant 0 : index
    %63 = vector.load %arg11[%c0_29, %c0_30, %c0_31] : memref<10x18x4xf32, #tpu.memory_space<vmem>>, vector<8x18x4xf32>
    %64 = vector.extract_strided_slice %63 {offsets = [0, 0, 0], sizes = [8, 16, 4], strides = [1, 1, 1]} : vector<8x18x4xf32> to vector<8x16x4xf32>
    %65 = vector.extract_strided_slice %63 {offsets = [0, 1, 0], sizes = [8, 16, 4], strides = [1, 1, 1]} : vector<8x18x4xf32> to vector<8x16x4xf32>
    %66 = vector.extract_strided_slice %63 {offsets = [0, 2, 0], sizes = [8, 16, 4], strides = [1, 1, 1]} : vector<8x18x4xf32> to vector<8x16x4xf32>
    %67 = tpu.concatenate %64, %65, %66 in 2 : vector<8x16x4xf32>, vector<8x16x4xf32>, vector<8x16x4xf32> -> vector<8x16x12xf32>
    %68 = vector.shape_cast %67 : vector<8x16x12xf32> to vector<128x12xf32>
    %69 = arith.truncf %68 : vector<128x12xf32> to vector<128x12xbf16>
    %c0_32 = arith.constant 0 : index
    %c0_33 = arith.constant 0 : index
    %c0_34 = arith.constant 0 : index
    %70 = vector.load %arg7[%c0_32, %c0_33, %c0_34] : memref<3x12x8xbf16, #tpu.memory_space<vmem>>, vector<1x12x8xbf16>
    %71 = vector.shape_cast %70 : vector<1x12x8xbf16> to vector<12x8xbf16>
    %cst_35 = arith.constant dense<0.000000e+00> : vector<128x8xf32>
    %72 = tpu.matmul %69, %71, %cst_35 {dimension_numbers = #tpu.dot_dimension_numbers<[1], [0], [0], [1], [0, 0, 1, 1], [], []>} : vector<128x12xbf16>, vector<12x8xbf16>, vector<128x8xf32> -> vector<128x8xf32>
    %73 = arith.addf %62, %72 : vector<128x8xf32>
    %c1_36 = arith.constant 1 : index
    %c0_37 = arith.constant 0 : index
    %c0_38 = arith.constant 0 : index
    %74 = vector.load %arg11[%c1_36, %c0_37, %c0_38] : memref<10x18x4xf32, #tpu.memory_space<vmem>>, vector<8x18x4xf32>
    %75 = vector.extract_strided_slice %74 {offsets = [0, 0, 0], sizes = [8, 16, 4], strides = [1, 1, 1]} : vector<8x18x4xf32> to vector<8x16x4xf32>
    %76 = vector.extract_strided_slice %74 {offsets = [0, 1, 0], sizes = [8, 16, 4], strides = [1, 1, 1]} : vector<8x18x4xf32> to vector<8x16x4xf32>
    %77 = vector.extract_strided_slice %74 {offsets = [0, 2, 0], sizes = [8, 16, 4], strides = [1, 1, 1]} : vector<8x18x4xf32> to vector<8x16x4xf32>
    %78 = tpu.concatenate %75, %76, %77 in 2 : vector<8x16x4xf32>, vector<8x16x4xf32>, vector<8x16x4xf32> -> vector<8x16x12xf32>
    %79 = vector.shape_cast %78 : vector<8x16x12xf32> to vector<128x12xf32>
    %80 = arith.truncf %79 : vector<128x12xf32> to vector<128x12xbf16>
    %c1_39 = arith.constant 1 : index
    %c0_40 = arith.constant 0 : index
    %c0_41 = arith.constant 0 : index
    %81 = vector.load %arg7[%c1_39, %c0_40, %c0_41] : memref<3x12x8xbf16, #tpu.memory_space<vmem>>, vector<1x12x8xbf16>
    %82 = vector.shape_cast %81 : vector<1x12x8xbf16> to vector<12x8xbf16>
    %cst_42 = arith.constant dense<0.000000e+00> : vector<128x8xf32>
    %83 = tpu.matmul %80, %82, %cst_42 {dimension_numbers = #tpu.dot_dimension_numbers<[1], [0], [0], [1], [0, 0, 1, 1], [], []>} : vector<128x12xbf16>, vector<12x8xbf16>, vector<128x8xf32> -> vector<128x8xf32>
    %84 = arith.addf %73, %83 : vector<128x8xf32>
    %c2 = arith.constant 2 : index
    %c0_43 = arith.constant 0 : index
    %c0_44 = arith.constant 0 : index
    %85 = vector.load %arg11[%c2, %c0_43, %c0_44] : memref<10x18x4xf32, #tpu.memory_space<vmem>>, vector<8x18x4xf32>
    %86 = vector.extract_strided_slice %85 {offsets = [0, 0, 0], sizes = [8, 16, 4], strides = [1, 1, 1]} : vector<8x18x4xf32> to vector<8x16x4xf32>
    %87 = vector.extract_strided_slice %85 {offsets = [0, 1, 0], sizes = [8, 16, 4], strides = [1, 1, 1]} : vector<8x18x4xf32> to vector<8x16x4xf32>
    %88 = vector.extract_strided_slice %85 {offsets = [0, 2, 0], sizes = [8, 16, 4], strides = [1, 1, 1]} : vector<8x18x4xf32> to vector<8x16x4xf32>
    %89 = tpu.concatenate %86, %87, %88 in 2 : vector<8x16x4xf32>, vector<8x16x4xf32>, vector<8x16x4xf32> -> vector<8x16x12xf32>
    %90 = vector.shape_cast %89 : vector<8x16x12xf32> to vector<128x12xf32>
    %91 = arith.truncf %90 : vector<128x12xf32> to vector<128x12xbf16>
    %c2_45 = arith.constant 2 : index
    %c0_46 = arith.constant 0 : index
    %c0_47 = arith.constant 0 : index
    %92 = vector.load %arg7[%c2_45, %c0_46, %c0_47] : memref<3x12x8xbf16, #tpu.memory_space<vmem>>, vector<1x12x8xbf16>
    %93 = vector.shape_cast %92 : vector<1x12x8xbf16> to vector<12x8xbf16>
    %cst_48 = arith.constant dense<0.000000e+00> : vector<128x8xf32>
    %94 = tpu.matmul %91, %93, %cst_48 {dimension_numbers = #tpu.dot_dimension_numbers<[1], [0], [0], [1], [0, 0, 1, 1], [], []>} : vector<128x12xbf16>, vector<12x8xbf16>, vector<128x8xf32> -> vector<128x8xf32>
    %95 = arith.addf %84, %94 : vector<128x8xf32>
    %c0_49 = arith.constant 0 : index
    %c0_50 = arith.constant 0 : index
    %96 = vector.load %arg8[%c0_49, %c0_50] : memref<1x8xf32, #tpu.memory_space<vmem>>, vector<1x8xf32>
    %97 = vector.broadcast %96 : vector<1x8xf32> to vector<128x8xf32>
    %98 = arith.addf %95, %97 : vector<128x8xf32>
    %c0_i32_51 = arith.constant 0 : i32
    %99 = arith.cmpi eq, %arg1, %c0_i32_51 : i32
    %100 = arith.extui %99 : i1 to i32
    %c0_i32_52 = arith.constant 0 : i32
    %101 = arith.cmpi ne, %100, %c0_i32_52 : i32
    scf.if %101 {
      %cst_65 = arith.constant 0.000000e+00 : f32
      %119 = vector.broadcast %cst_65 : f32 to vector<1x2x8xf32>
      %c0_66 = arith.constant 0 : index
      %c0_67 = arith.constant 0 : index
      %c0_68 = arith.constant 0 : index
      %120 = vector.load %arg10[%c0_66, %c0_67, %c0_68] : memref<1x2x8xf32, #tpu.memory_space<vmem>>, vector<1x2x8xf32>
      tpu.vector_store %arg10[%c0_66, %c0_67, %c0_68], %119 {strides = array<i32>} : memref<1x2x8xf32, #tpu.memory_space<vmem>>, vector<1x2x8xf32>,
    } else {
    }
    %c0_53 = arith.constant 0 : index
    %c0_54 = arith.constant 0 : index
    %c0_55 = arith.constant 0 : index
    %102 = vector.load %arg10[%c0_53, %c0_54, %c0_55] : memref<1x2x8xf32, #tpu.memory_space<vmem>>, vector<1x2x8xf32>
    %103 = vector.shape_cast %102 : vector<1x2x8xf32> to vector<2x8xf32>
    %cst_56 = arith.constant dense<0.000000e+00> : vector<8xf32>
    %104 = vector.multi_reduction <add>, %98, %cst_56 [0] : vector<128x8xf32> to vector<8xf32>
    %105 = vector.shape_cast %104 : vector<8xf32> to vector<1x8xf32>
    %106 = arith.mulf %98, %98 : vector<128x8xf32>
    %cst_57 = arith.constant dense<0.000000e+00> : vector<8xf32>
    %107 = vector.multi_reduction <add>, %106, %cst_57 [0] : vector<128x8xf32> to vector<8xf32>
    %108 = vector.shape_cast %107 : vector<8xf32> to vector<1x8xf32>
    %109 = tpu.concatenate %105, %108 in 0 : vector<1x8xf32>, vector<1x8xf32> -> vector<2x8xf32>
    %110 = arith.addf %103, %109 : vector<2x8xf32>
    %c0_58 = arith.constant 0 : index
    %c0_59 = arith.constant 0 : index
    %c0_60 = arith.constant 0 : index
    %111 = vector.load %arg10[%c0_58, %c0_59, %c0_60] : memref<1x2x8xf32, #tpu.memory_space<vmem>>, vector<1x2x8xf32>
    %112 = vector.shape_cast %111 : vector<1x2x8xf32> to vector<2x8xf32>
    %113 = vector.shape_cast %110 : vector<2x8xf32> to vector<1x2x8xf32>
    tpu.vector_store %arg10[%c0_58, %c0_59, %c0_60], %113 {strides = array<i32>} : memref<1x2x8xf32, #tpu.memory_space<vmem>>, vector<1x2x8xf32>,
    %114 = vector.shape_cast %98 : vector<128x8xf32> to vector<8x16x8xf32>
    %115 = arith.truncf %114 : vector<8x16x8xf32> to vector<8x16x8xbf16>
    %c0_61 = arith.constant 0 : index
    %c0_62 = arith.constant 0 : index
    %c0_63 = arith.constant 0 : index
    %c0_64 = arith.constant 0 : index
    %116 = vector.load %arg9[%c0_61, %c0_62, %c0_63, %c0_64] : memref<1x8x16x8xbf16, #tpu.memory_space<vmem>>, vector<1x8x16x8xbf16>
    %117 = vector.shape_cast %116 : vector<1x8x16x8xbf16> to vector<8x16x8xbf16>
    %118 = vector.shape_cast %115 : vector<8x16x8xbf16> to vector<1x8x16x8xbf16>
    tpu.vector_store %arg9[%c0_61, %c0_62, %c0_63, %c0_64], %118 {strides = array<i32>} : memref<1x8x16x8xbf16, #tpu.memory_space<vmem>>, vector<1x8x16x8xbf16>,
    return
  }
  func.func @transform_0(%arg0: i32, %arg1: i32) -> (i32, i32, i32, i32) {
    %c0_i32 = arith.constant 0 : i32
    %c0_i32_0 = arith.constant 0 : i32
    %c0_i32_1 = arith.constant 0 : i32
    return %arg0, %arg1, %c0_i32, %c0_i32_0 : i32, i32, i32, i32
  }
  func.func @transform_1(%arg0: i32, %arg1: i32) -> (i32, i32, i32, i32) {
    %c0_i32 = arith.constant 0 : i32
    %c0_i32_0 = arith.constant 0 : i32
    %c0_i32_1 = arith.constant 0 : i32
    return %arg0, %arg1, %c0_i32, %c0_i32_0 : i32, i32, i32, i32
  }
  func.func @transform_2(%arg0: i32, %arg1: i32) -> (i32, i32, i32, i32) {
    %c0_i32 = arith.constant 0 : i32
    %c0_i32_0 = arith.constant 0 : i32
    %c0_i32_1 = arith.constant 0 : i32
    return %arg0, %arg1, %c0_i32, %c0_i32_0 : i32, i32, i32, i32
  }
  func.func @transform_3(%arg0: i32, %arg1: i32) -> (i32, i32, i32) {
    %c0_i32 = arith.constant 0 : i32
    %c0_i32_0 = arith.constant 0 : i32
    %c0_i32_1 = arith.constant 0 : i32
    return %arg0, %c0_i32, %c0_i32_0 : i32, i32, i32
  }
  func.func @transform_4(%arg0: i32, %arg1: i32) -> (i32, i32, i32) {
    %c0_i32 = arith.constant 0 : i32
    %c0_i32_0 = arith.constant 0 : i32
    %c0_i32_1 = arith.constant 0 : i32
    return %arg0, %c0_i32, %c0_i32_0 : i32, i32, i32
  }
  func.func @transform_5(%arg0: i32, %arg1: i32) -> (i32, i32, i32) {
    %c0_i32 = arith.constant 0 : i32
    %c0_i32_0 = arith.constant 0 : i32
    %c0_i32_1 = arith.constant 0 : i32
    %c0_i32_2 = arith.constant 0 : i32
    return %c0_i32, %c0_i32_0, %c0_i32_1 : i32, i32, i32
  }
  func.func @transform_6(%arg0: i32, %arg1: i32) -> (i32, i32) {
    %c0_i32 = arith.constant 0 : i32
    %c0_i32_0 = arith.constant 0 : i32
    %c0_i32_1 = arith.constant 0 : i32
    return %c0_i32, %c0_i32_0 : i32, i32
  }
  func.func @transform_7(%arg0: i32, %arg1: i32) -> (i32, i32, i32, i32) {
    %c0_i32 = arith.constant 0 : i32
    %c0_i32_0 = arith.constant 0 : i32
    %c0_i32_1 = arith.constant 0 : i32
    return %arg0, %arg1, %c0_i32, %c0_i32_0 : i32, i32, i32, i32
  }
  func.func @transform_8(%arg0: i32, %arg1: i32) -> (i32, i32, i32) {
    %c0_i32 = arith.constant 0 : i32
    %c0_i32_0 = arith.constant 0 : i32
    %c0_i32_1 = arith.constant 0 : i32
    return %arg0, %c0_i32, %c0_i32_0 : i32, i32, i32
  }
}

module attributes {stable_mosaic.version = 11 : i64} {
  func.func @_conv2_kernel(%arg0: i32, %arg1: i32, %arg2: memref<1x8x16x8xbf16, #tpu.memory_space<vmem>>, %arg3: memref<1x1x16x8xbf16, #tpu.memory_space<vmem>>, %arg4: memref<1x1x16x8xbf16, #tpu.memory_space<vmem>>, %arg5: memref<1x8x16x4xf32, #tpu.memory_space<vmem>>, %arg6: memref<1x1x8xf32, #tpu.memory_space<vmem>>, %arg7: memref<1x1x8xf32, #tpu.memory_space<vmem>>, %arg8: memref<3x24x8xbf16, #tpu.memory_space<vmem>>, %arg9: memref<1x8xf32, #tpu.memory_space<vmem>>, %arg10: memref<4x8xbf16, #tpu.memory_space<vmem>>, %arg11: memref<1x8xf32, #tpu.memory_space<vmem>>, %arg12: memref<1x8x16x8xf32, #tpu.memory_space<vmem>>, %arg13: memref<10x18x8xf32, #tpu.memory_space<vmem>>) attributes {dimension_semantics = [#tpu.dimension_semantics<parallel>, #tpu.dimension_semantics<parallel>], iteration_bounds = array<i64: 2, 2>, scalar_prefetch = 0 : i64, scratch_operands = 1 : i64, tpu.core_type = #tpu.core_type<tc>, window_params = [{transform_indices = @transform_0, window_bounds = array<i64: 1, 8, 16, 8>}, {transform_indices = @transform_1, window_bounds = array<i64: 1, 1, 16, 8>}, {transform_indices = @transform_2, window_bounds = array<i64: 1, 1, 16, 8>}, {transform_indices = @transform_3, window_bounds = array<i64: 1, 8, 16, 4>}, {transform_indices = @transform_4, window_bounds = array<i64: 1, 1, 8>}, {transform_indices = @transform_5, window_bounds = array<i64: 1, 1, 8>}, {pipeline_mode = #tpu.pipeline_mode<synchronous>, transform_indices = @transform_6, window_bounds = array<i64: 3, 24, 8>}, {pipeline_mode = #tpu.pipeline_mode<synchronous>, transform_indices = @transform_7, window_bounds = array<i64: 1, 8>}, {pipeline_mode = #tpu.pipeline_mode<synchronous>, transform_indices = @transform_8, window_bounds = array<i64: 4, 8>}, {pipeline_mode = #tpu.pipeline_mode<synchronous>, transform_indices = @transform_9, window_bounds = array<i64: 1, 8>}, {transform_indices = @transform_10, window_bounds = array<i64: 1, 8, 16, 8>}]} {
    %c0 = arith.constant 0 : index
    %c0_0 = arith.constant 0 : index
    %c0_1 = arith.constant 0 : index
    %0 = vector.load %arg6[%c0, %c0_0, %c0_1] : memref<1x1x8xf32, #tpu.memory_space<vmem>>, vector<1x1x8xf32>
    %1 = vector.shape_cast %0 : vector<1x1x8xf32> to vector<1x8xf32>
    %c0_2 = arith.constant 0 : index
    %c0_3 = arith.constant 0 : index
    %c0_4 = arith.constant 0 : index
    %2 = vector.load %arg7[%c0_2, %c0_3, %c0_4] : memref<1x1x8xf32, #tpu.memory_space<vmem>>, vector<1x1x8xf32>
    %3 = vector.shape_cast %2 : vector<1x1x8xf32> to vector<1x8xf32>
    %cst = arith.constant 0.000000e+00 : f32
    %4 = vector.broadcast %cst : f32 to vector<10x1x8xf32>
    %c0_5 = arith.constant 0 : index
    %c0_6 = arith.constant 0 : index
    %c0_7 = arith.constant 0 : index
    %5 = vector.load %arg13[%c0_5, %c0_6, %c0_7] : memref<10x18x8xf32, #tpu.memory_space<vmem>>, vector<10x1x8xf32>
    tpu.vector_store %arg13[%c0_5, %c0_6, %c0_7], %4 {strides = array<i32>} : memref<10x18x8xf32, #tpu.memory_space<vmem>>, vector<10x1x8xf32>,
    %cst_8 = arith.constant 0.000000e+00 : f32
    %6 = vector.broadcast %cst_8 : f32 to vector<10x1x8xf32>
    %c0_9 = arith.constant 0 : index
    %c17 = arith.constant 17 : index
    %c0_10 = arith.constant 0 : index
    %7 = vector.load %arg13[%c0_9, %c17, %c0_10] : memref<10x18x8xf32, #tpu.memory_space<vmem>>, vector<10x1x8xf32>
    tpu.vector_store %arg13[%c0_9, %c17, %c0_10], %6 {strides = array<i32>} : memref<10x18x8xf32, #tpu.memory_space<vmem>>, vector<10x1x8xf32>,
    %c0_11 = arith.constant 0 : index
    %c0_12 = arith.constant 0 : index
    %c0_13 = arith.constant 0 : index
    %c0_14 = arith.constant 0 : index
    %8 = vector.load %arg2[%c0_11, %c0_12, %c0_13, %c0_14] : memref<1x8x16x8xbf16, #tpu.memory_space<vmem>>, vector<1x8x16x8xbf16>
    %9 = vector.shape_cast %8 : vector<1x8x16x8xbf16> to vector<8x16x8xbf16>
    %10 = arith.extf %9 : vector<8x16x8xbf16> to vector<8x16x8xf32>
    %11 = vector.shape_cast %1 : vector<1x8xf32> to vector<1x1x8xf32>
    %12 = vector.broadcast %11 : vector<1x1x8xf32> to vector<8x16x8xf32>
    %13 = arith.mulf %10, %12 : vector<8x16x8xf32>
    %14 = vector.shape_cast %3 : vector<1x8xf32> to vector<1x1x8xf32>
    %15 = vector.broadcast %14 : vector<1x1x8xf32> to vector<8x16x8xf32>
    %16 = arith.addf %13, %15 : vector<8x16x8xf32>
    %17 = arith.negf %16 : vector<8x16x8xf32>
    %18 = math.exp %17 : vector<8x16x8xf32>
    %cst_15 = arith.constant 1.000000e+00 : f32
    %19 = vector.broadcast %cst_15 : f32 to vector<8x16x8xf32>
    %20 = arith.addf %19, %18 : vector<8x16x8xf32>
    %21 = arith.divf %19, %20 : vector<8x16x8xf32>
    %22 = arith.mulf %16, %21 : vector<8x16x8xf32>
    %c0_16 = arith.constant 0 : index
    %c0_17 = arith.constant 0 : index
    %c0_18 = arith.constant 0 : index
    %c0_19 = arith.constant 0 : index
    %23 = vector.load %arg3[%c0_16, %c0_17, %c0_18, %c0_19] : memref<1x1x16x8xbf16, #tpu.memory_space<vmem>>, vector<1x1x16x8xbf16>
    %24 = vector.shape_cast %23 : vector<1x1x16x8xbf16> to vector<1x16x8xbf16>
    %25 = arith.extf %24 : vector<1x16x8xbf16> to vector<1x16x8xf32>
    %26 = vector.shape_cast %1 : vector<1x8xf32> to vector<1x1x8xf32>
    %27 = vector.broadcast %26 : vector<1x1x8xf32> to vector<1x16x8xf32>
    %28 = arith.mulf %25, %27 : vector<1x16x8xf32>
    %29 = vector.shape_cast %3 : vector<1x8xf32> to vector<1x1x8xf32>
    %30 = vector.broadcast %29 : vector<1x1x8xf32> to vector<1x16x8xf32>
    %31 = arith.addf %28, %30 : vector<1x16x8xf32>
    %32 = arith.negf %31 : vector<1x16x8xf32>
    %33 = math.exp %32 : vector<1x16x8xf32>
    %cst_20 = arith.constant 1.000000e+00 : f32
    %34 = vector.broadcast %cst_20 : f32 to vector<1x16x8xf32>
    %35 = arith.addf %34, %33 : vector<1x16x8xf32>
    %36 = arith.divf %34, %35 : vector<1x16x8xf32>
    %37 = arith.mulf %31, %36 : vector<1x16x8xf32>
    %c0_21 = arith.constant 0 : index
    %c0_22 = arith.constant 0 : index
    %c0_23 = arith.constant 0 : index
    %c0_24 = arith.constant 0 : index
    %38 = vector.load %arg4[%c0_21, %c0_22, %c0_23, %c0_24] : memref<1x1x16x8xbf16, #tpu.memory_space<vmem>>, vector<1x1x16x8xbf16>
    %39 = vector.shape_cast %38 : vector<1x1x16x8xbf16> to vector<1x16x8xbf16>
    %40 = arith.extf %39 : vector<1x16x8xbf16> to vector<1x16x8xf32>
    %41 = vector.shape_cast %1 : vector<1x8xf32> to vector<1x1x8xf32>
    %42 = vector.broadcast %41 : vector<1x1x8xf32> to vector<1x16x8xf32>
    %43 = arith.mulf %40, %42 : vector<1x16x8xf32>
    %44 = vector.shape_cast %3 : vector<1x8xf32> to vector<1x1x8xf32>
    %45 = vector.broadcast %44 : vector<1x1x8xf32> to vector<1x16x8xf32>
    %46 = arith.addf %43, %45 : vector<1x16x8xf32>
    %47 = arith.negf %46 : vector<1x16x8xf32>
    %48 = math.exp %47 : vector<1x16x8xf32>
    %cst_25 = arith.constant 1.000000e+00 : f32
    %49 = vector.broadcast %cst_25 : f32 to vector<1x16x8xf32>
    %50 = arith.addf %49, %48 : vector<1x16x8xf32>
    %51 = arith.divf %49, %50 : vector<1x16x8xf32>
    %52 = arith.mulf %46, %51 : vector<1x16x8xf32>
    %c0_i32 = arith.constant 0 : i32
    %53 = arith.cmpi sgt, %arg1, %c0_i32 : i32
    %54 = arith.extui %53 : i1 to i32
    %55 = arith.sitofp %54 : i32 to f32
    %56 = vector.broadcast %55 : f32 to vector<1x16x8xf32>
    %57 = arith.mulf %37, %56 : vector<1x16x8xf32>
    %c1_i32 = arith.constant 1 : i32
    %58 = arith.cmpi slt, %arg1, %c1_i32 : i32
    %59 = arith.extui %58 : i1 to i32
    %60 = arith.sitofp %59 : i32 to f32
    %61 = vector.broadcast %60 : f32 to vector<1x16x8xf32>
    %62 = arith.mulf %52, %61 : vector<1x16x8xf32>
    %c1 = arith.constant 1 : index
    %c1_26 = arith.constant 1 : index
    %c0_27 = arith.constant 0 : index
    %63 = vector.load %arg13[%c1, %c1_26, %c0_27] : memref<10x18x8xf32, #tpu.memory_space<vmem>>, vector<8x16x8xf32>
    tpu.vector_store %arg13[%c1, %c1_26, %c0_27], %22 {strides = array<i32>} : memref<10x18x8xf32, #tpu.memory_space<vmem>>, vector<8x16x8xf32>,
    %c0_28 = arith.constant 0 : index
    %c1_29 = arith.constant 1 : index
    %c0_30 = arith.constant 0 : index
    %64 = vector.load %arg13[%c0_28, %c1_29, %c0_30] : memref<10x18x8xf32, #tpu.memory_space<vmem>>, vector<1x16x8xf32>
    tpu.vector_store %arg13[%c0_28, %c1_29, %c0_30], %57 {strides = array<i32>} : memref<10x18x8xf32, #tpu.memory_space<vmem>>, vector<1x16x8xf32>,
    %c9 = arith.constant 9 : index
    %c1_31 = arith.constant 1 : index
    %c0_32 = arith.constant 0 : index
    %65 = vector.load %arg13[%c9, %c1_31, %c0_32] : memref<10x18x8xf32, #tpu.memory_space<vmem>>, vector<1x16x8xf32>
    tpu.vector_store %arg13[%c9, %c1_31, %c0_32], %62 {strides = array<i32>} : memref<10x18x8xf32, #tpu.memory_space<vmem>>, vector<1x16x8xf32>,
    %cst_33 = arith.constant 0.000000e+00 : f32
    %66 = vector.broadcast %cst_33 : f32 to vector<128x8xf32>
    %c0_34 = arith.constant 0 : index
    %c0_35 = arith.constant 0 : index
    %c0_36 = arith.constant 0 : index
    %67 = vector.load %arg13[%c0_34, %c0_35, %c0_36] : memref<10x18x8xf32, #tpu.memory_space<vmem>>, vector<8x18x8xf32>
    %68 = vector.extract_strided_slice %67 {offsets = [0, 0, 0], sizes = [8, 16, 8], strides = [1, 1, 1]} : vector<8x18x8xf32> to vector<8x16x8xf32>
    %69 = vector.extract_strided_slice %67 {offsets = [0, 1, 0], sizes = [8, 16, 8], strides = [1, 1, 1]} : vector<8x18x8xf32> to vector<8x16x8xf32>
    %70 = vector.extract_strided_slice %67 {offsets = [0, 2, 0], sizes = [8, 16, 8], strides = [1, 1, 1]} : vector<8x18x8xf32> to vector<8x16x8xf32>
    %71 = tpu.concatenate %68, %69, %70 in 2 : vector<8x16x8xf32>, vector<8x16x8xf32>, vector<8x16x8xf32> -> vector<8x16x24xf32>
    %72 = vector.shape_cast %71 : vector<8x16x24xf32> to vector<128x24xf32>
    %73 = arith.truncf %72 : vector<128x24xf32> to vector<128x24xbf16>
    %c0_37 = arith.constant 0 : index
    %c0_38 = arith.constant 0 : index
    %c0_39 = arith.constant 0 : index
    %74 = vector.load %arg8[%c0_37, %c0_38, %c0_39] : memref<3x24x8xbf16, #tpu.memory_space<vmem>>, vector<1x24x8xbf16>
    %75 = vector.shape_cast %74 : vector<1x24x8xbf16> to vector<24x8xbf16>
    %cst_40 = arith.constant dense<0.000000e+00> : vector<128x8xf32>
    %76 = tpu.matmul %73, %75, %cst_40 {dimension_numbers = #tpu.dot_dimension_numbers<[1], [0], [0], [1], [0, 0, 1, 1], [], []>} : vector<128x24xbf16>, vector<24x8xbf16>, vector<128x8xf32> -> vector<128x8xf32>
    %77 = arith.addf %66, %76 : vector<128x8xf32>
    %c1_41 = arith.constant 1 : index
    %c0_42 = arith.constant 0 : index
    %c0_43 = arith.constant 0 : index
    %78 = vector.load %arg13[%c1_41, %c0_42, %c0_43] : memref<10x18x8xf32, #tpu.memory_space<vmem>>, vector<8x18x8xf32>
    %79 = vector.extract_strided_slice %78 {offsets = [0, 0, 0], sizes = [8, 16, 8], strides = [1, 1, 1]} : vector<8x18x8xf32> to vector<8x16x8xf32>
    %80 = vector.extract_strided_slice %78 {offsets = [0, 1, 0], sizes = [8, 16, 8], strides = [1, 1, 1]} : vector<8x18x8xf32> to vector<8x16x8xf32>
    %81 = vector.extract_strided_slice %78 {offsets = [0, 2, 0], sizes = [8, 16, 8], strides = [1, 1, 1]} : vector<8x18x8xf32> to vector<8x16x8xf32>
    %82 = tpu.concatenate %79, %80, %81 in 2 : vector<8x16x8xf32>, vector<8x16x8xf32>, vector<8x16x8xf32> -> vector<8x16x24xf32>
    %83 = vector.shape_cast %82 : vector<8x16x24xf32> to vector<128x24xf32>
    %84 = arith.truncf %83 : vector<128x24xf32> to vector<128x24xbf16>
    %c1_44 = arith.constant 1 : index
    %c0_45 = arith.constant 0 : index
    %c0_46 = arith.constant 0 : index
    %85 = vector.load %arg8[%c1_44, %c0_45, %c0_46] : memref<3x24x8xbf16, #tpu.memory_space<vmem>>, vector<1x24x8xbf16>
    %86 = vector.shape_cast %85 : vector<1x24x8xbf16> to vector<24x8xbf16>
    %cst_47 = arith.constant dense<0.000000e+00> : vector<128x8xf32>
    %87 = tpu.matmul %84, %86, %cst_47 {dimension_numbers = #tpu.dot_dimension_numbers<[1], [0], [0], [1], [0, 0, 1, 1], [], []>} : vector<128x24xbf16>, vector<24x8xbf16>, vector<128x8xf32> -> vector<128x8xf32>
    %88 = arith.addf %77, %87 : vector<128x8xf32>
    %c2 = arith.constant 2 : index
    %c0_48 = arith.constant 0 : index
    %c0_49 = arith.constant 0 : index
    %89 = vector.load %arg13[%c2, %c0_48, %c0_49] : memref<10x18x8xf32, #tpu.memory_space<vmem>>, vector<8x18x8xf32>
    %90 = vector.extract_strided_slice %89 {offsets = [0, 0, 0], sizes = [8, 16, 8], strides = [1, 1, 1]} : vector<8x18x8xf32> to vector<8x16x8xf32>
    %91 = vector.extract_strided_slice %89 {offsets = [0, 1, 0], sizes = [8, 16, 8], strides = [1, 1, 1]} : vector<8x18x8xf32> to vector<8x16x8xf32>
    %92 = vector.extract_strided_slice %89 {offsets = [0, 2, 0], sizes = [8, 16, 8], strides = [1, 1, 1]} : vector<8x18x8xf32> to vector<8x16x8xf32>
    %93 = tpu.concatenate %90, %91, %92 in 2 : vector<8x16x8xf32>, vector<8x16x8xf32>, vector<8x16x8xf32> -> vector<8x16x24xf32>
    %94 = vector.shape_cast %93 : vector<8x16x24xf32> to vector<128x24xf32>
    %95 = arith.truncf %94 : vector<128x24xf32> to vector<128x24xbf16>
    %c2_50 = arith.constant 2 : index
    %c0_51 = arith.constant 0 : index
    %c0_52 = arith.constant 0 : index
    %96 = vector.load %arg8[%c2_50, %c0_51, %c0_52] : memref<3x24x8xbf16, #tpu.memory_space<vmem>>, vector<1x24x8xbf16>
    %97 = vector.shape_cast %96 : vector<1x24x8xbf16> to vector<24x8xbf16>
    %cst_53 = arith.constant dense<0.000000e+00> : vector<128x8xf32>
    %98 = tpu.matmul %95, %97, %cst_53 {dimension_numbers = #tpu.dot_dimension_numbers<[1], [0], [0], [1], [0, 0, 1, 1], [], []>} : vector<128x24xbf16>, vector<24x8xbf16>, vector<128x8xf32> -> vector<128x8xf32>
    %99 = arith.addf %88, %98 : vector<128x8xf32>
    %c0_54 = arith.constant 0 : index
    %c0_55 = arith.constant 0 : index
    %100 = vector.load %arg9[%c0_54, %c0_55] : memref<1x8xf32, #tpu.memory_space<vmem>>, vector<1x8xf32>
    %101 = vector.broadcast %100 : vector<1x8xf32> to vector<128x8xf32>
    %102 = arith.addf %99, %101 : vector<128x8xf32>
    %c0_56 = arith.constant 0 : index
    %c0_57 = arith.constant 0 : index
    %c0_58 = arith.constant 0 : index
    %c0_59 = arith.constant 0 : index
    %103 = vector.load %arg5[%c0_56, %c0_57, %c0_58, %c0_59] : memref<1x8x16x4xf32, #tpu.memory_space<vmem>>, vector<1x8x16x4xf32>
    %104 = vector.shape_cast %103 : vector<1x8x16x4xf32> to vector<8x16x4xf32>
    %105 = vector.shape_cast %104 : vector<8x16x4xf32> to vector<128x4xf32>
    %106 = arith.truncf %105 : vector<128x4xf32> to vector<128x4xbf16>
    %c0_60 = arith.constant 0 : index
    %c0_61 = arith.constant 0 : index
    %107 = vector.load %arg10[%c0_60, %c0_61] : memref<4x8xbf16, #tpu.memory_space<vmem>>, vector<4x8xbf16>
    %cst_62 = arith.constant dense<0.000000e+00> : vector<128x8xf32>
    %108 = tpu.matmul %106, %107, %cst_62 {dimension_numbers = #tpu.dot_dimension_numbers<[1], [0], [0], [1], [0, 0, 1, 1], [], []>} : vector<128x4xbf16>, vector<4x8xbf16>, vector<128x8xf32> -> vector<128x8xf32>
    %c0_63 = arith.constant 0 : index
    %c0_64 = arith.constant 0 : index
    %109 = vector.load %arg11[%c0_63, %c0_64] : memref<1x8xf32, #tpu.memory_space<vmem>>, vector<1x8xf32>
    %110 = vector.broadcast %109 : vector<1x8xf32> to vector<128x8xf32>
    %111 = arith.addf %108, %110 : vector<128x8xf32>
    %112 = arith.addf %111, %102 : vector<128x8xf32>
    %113 = vector.shape_cast %112 : vector<128x8xf32> to vector<8x16x8xf32>
    %c0_65 = arith.constant 0 : index
    %c0_66 = arith.constant 0 : index
    %c0_67 = arith.constant 0 : index
    %c0_68 = arith.constant 0 : index
    %114 = vector.load %arg12[%c0_65, %c0_66, %c0_67, %c0_68] : memref<1x8x16x8xf32, #tpu.memory_space<vmem>>, vector<1x8x16x8xf32>
    %115 = vector.shape_cast %114 : vector<1x8x16x8xf32> to vector<8x16x8xf32>
    %116 = vector.shape_cast %113 : vector<8x16x8xf32> to vector<1x8x16x8xf32>
    tpu.vector_store %arg12[%c0_65, %c0_66, %c0_67, %c0_68], %116 {strides = array<i32>} : memref<1x8x16x8xf32, #tpu.memory_space<vmem>>, vector<1x8x16x8xf32>,
    return
  }
  func.func @transform_0(%arg0: i32, %arg1: i32) -> (i32, i32, i32, i32) {
    %c0_i32 = arith.constant 0 : i32
    %c0_i32_0 = arith.constant 0 : i32
    %c0_i32_1 = arith.constant 0 : i32
    return %arg0, %arg1, %c0_i32, %c0_i32_0 : i32, i32, i32, i32
  }
  func.func @transform_1(%arg0: i32, %arg1: i32) -> (i32, i32, i32, i32) {
    %c0_i32 = arith.constant 0 : i32
    %c0_i32_0 = arith.constant 0 : i32
    %c0_i32_1 = arith.constant 0 : i32
    return %arg0, %arg1, %c0_i32, %c0_i32_0 : i32, i32, i32, i32
  }
  func.func @transform_2(%arg0: i32, %arg1: i32) -> (i32, i32, i32, i32) {
    %c0_i32 = arith.constant 0 : i32
    %c0_i32_0 = arith.constant 0 : i32
    %c0_i32_1 = arith.constant 0 : i32
    return %arg0, %arg1, %c0_i32, %c0_i32_0 : i32, i32, i32, i32
  }
  func.func @transform_3(%arg0: i32, %arg1: i32) -> (i32, i32, i32, i32) {
    %c0_i32 = arith.constant 0 : i32
    %c0_i32_0 = arith.constant 0 : i32
    %c0_i32_1 = arith.constant 0 : i32
    return %arg0, %arg1, %c0_i32, %c0_i32_0 : i32, i32, i32, i32
  }
  func.func @transform_4(%arg0: i32, %arg1: i32) -> (i32, i32, i32) {
    %c0_i32 = arith.constant 0 : i32
    %c0_i32_0 = arith.constant 0 : i32
    %c0_i32_1 = arith.constant 0 : i32
    return %arg0, %c0_i32, %c0_i32_0 : i32, i32, i32
  }
  func.func @transform_5(%arg0: i32, %arg1: i32) -> (i32, i32, i32) {
    %c0_i32 = arith.constant 0 : i32
    %c0_i32_0 = arith.constant 0 : i32
    %c0_i32_1 = arith.constant 0 : i32
    return %arg0, %c0_i32, %c0_i32_0 : i32, i32, i32
  }
  func.func @transform_6(%arg0: i32, %arg1: i32) -> (i32, i32, i32) {
    %c0_i32 = arith.constant 0 : i32
    %c0_i32_0 = arith.constant 0 : i32
    %c0_i32_1 = arith.constant 0 : i32
    %c0_i32_2 = arith.constant 0 : i32
    return %c0_i32, %c0_i32_0, %c0_i32_1 : i32, i32, i32
  }
  func.func @transform_7(%arg0: i32, %arg1: i32) -> (i32, i32) {
    %c0_i32 = arith.constant 0 : i32
    %c0_i32_0 = arith.constant 0 : i32
    %c0_i32_1 = arith.constant 0 : i32
    return %c0_i32, %c0_i32_0 : i32, i32
  }
  func.func @transform_8(%arg0: i32, %arg1: i32) -> (i32, i32) {
    %c0_i32 = arith.constant 0 : i32
    %c0_i32_0 = arith.constant 0 : i32
    %c0_i32_1 = arith.constant 0 : i32
    return %c0_i32, %c0_i32_0 : i32, i32
  }
  func.func @transform_9(%arg0: i32, %arg1: i32) -> (i32, i32) {
    %c0_i32 = arith.constant 0 : i32
    %c0_i32_0 = arith.constant 0 : i32
    %c0_i32_1 = arith.constant 0 : i32
    return %c0_i32, %c0_i32_0 : i32, i32
  }
  func.func @transform_10(%arg0: i32, %arg1: i32) -> (i32, i32, i32, i32) {
    %c0_i32 = arith.constant 0 : i32
    %c0_i32_0 = arith.constant 0 : i32
    %c0_i32_1 = arith.constant 0 : i32
    return %arg0, %arg1, %c0_i32, %c0_i32_0 : i32, i32, i32, i32
  }
}

</mosaic_0001>

<llo_original>
// kernel: resnet_block_forward.3
$region0: #{resnet_block_forward.3}
  #allocation0 [shape = 'u32[]', space=smem, size = 0x4, offset = 0x4, fixed_abs, tag = 'smem constant byte address 0x4 - core index']
  #allocation1 [shape = 'u32[144,128]{1,0:T(1,128)}', space=vmem, size = 0x12000, scoped, tag = 'internal scratch']
  %s0 = inlined_call_operand.vmem [shape: f32[2,16,16,4], index: 0, kind: input, shape index: {}]
  %s1 = inlined_call_operand.vmem [shape: f32[2,2,4], index: 1, kind: output, shape index: {}]
  %s2 = sld [smem:[#allocation0]]
  $region41: #{resnet_block_forward.3} parent=0
    _
  %s4 = ssub.s32 1, %s2
  %s5 = scalar_select 0, %s4, %s2
  loop: start=0, step=1, limit=6
  $region2: #{resnet_block_forward.3} parent=0 // loop_pre_header
    _
  $region3: #{resnet_block_forward.3} parent=0 // loop_header
    %s7 = sphi 0, %s11
    %p8 = scmp.ge.s32.totalorder %s7, 6
    %s14 = sphi 0, %s26
    %s15 = sphi 0, %s22
    %s16 = sphi 0, %s14
    %s17 = sphi 0, %s15
    %s18 = sphi 0, %s16
    %s19 = sphi 0, %s17
    %s31 = sphi 0, %s33
    %s34 = sphi 0, %s31
    %s35 = sphi 0, %s34
    %s51 = sphi 0, %s35
    %s57 = sphi 0, %s59
    %s60 = sphi 0, %s57
    %s61 = sphi 0, %s60
    %s77 = sphi 0, %s61
  $region4: #{resnet_block_forward.3} parent=0 // loop_header_branch
    %10 = sbr.rel (%p8) target = $region8
  $region5: #{resnet_block_forward.3} parent=0 // loop_body
    %s12 = ssub.s32 %s7, 1
    %s13 = ssub.s32 %s7, 2
    %s20 = sadd.s32 1, %s15
    %p21 = scmp.ge.s32.totalorder %s20, 2
    %s22 = scalar_select %p21, 0, %s20
    %s23 = sadd.s32 1, %s14
    %s24 = scalar_select %p21, %s23, %s14
    %p25 = scmp.ge.s32.totalorder %s24, 2
    %s26 = scalar_select %p25, 0, %s24
    %s27 = ssub.s32 %s14, %s26
    %s28 = ssub.s32 %s15, %s22
    %s29 = sor.u32 %s27, %s28
    %p30 = scmp.eq.s32.totalorder %s29, 0
    %s32 = sadd.s32 %s31, 1
    %s33 = scalar_select %p30, %s31, %s32
    %p36 = pneg %p30
    %p37 = scmp.eq.s32.totalorder %s7, 3
    %p38 = por %p36, %p37
    %p39 = scmp.ne.s32.totalorder %s31, %s34
    %p40 = scmp.eq.s32.totalorder %s7, 0
    %p41 = por %p39, %p40
    %p42 = scmp.ne.s32.totalorder %s31, %s34
    %p43 = scmp.eq.s32.totalorder %s12, 3
    %p44 = por %p42, %p43
    %p45 = scmp.ne.s32.totalorder %s34, %s35
    %p46 = scmp.eq.s32.totalorder %s12, 0
    %p47 = por %p45, %p46
    %p48 = scmp.ne.s32.totalorder %s34, %s35
    %p49 = scmp.eq.s32.totalorder %s13, 3
    %p50 = por %p48, %p49
    %p52 = scmp.ne.s32.totalorder %s35, %s51
    %p53 = scmp.eq.s32.totalorder %s13, 0
    %p54 = por %p52, %p53
    %s55 = ssub.s32 %s14, %s26
    %p56 = scmp.eq.s32.totalorder %s55, 0
    %s58 = sadd.s32 %s57, 1
    %s59 = scalar_select %p56, %s57, %s58
    %p62 = pneg %p56
    %p63 = scmp.eq.s32.totalorder %s7, 3
    %p64 = por %p62, %p63
    %p65 = scmp.ne.s32.totalorder %s57, %s60
    %p66 = scmp.eq.s32.totalorder %s7, 0
    %p67 = por %p65, %p66
    %p68 = scmp.ne.s32.totalorder %s57, %s60
    %p69 = scmp.eq.s32.totalorder %s12, 3
    %p70 = por %p68, %p69
    %p71 = scmp.ne.s32.totalorder %s60, %s61
    %p72 = scmp.eq.s32.totalorder %s12, 0
    %p73 = por %p71, %p72
    %p74 = scmp.ne.s32.totalorder %s60, %s61
    %p75 = scmp.eq.s32.totalorder %s13, 3
    %p76 = por %p74, %p75
    %p78 = scmp.ne.s32.totalorder %s61, %s77
    %p79 = scmp.eq.s32.totalorder %s13, 0
    %p80 = por %p78, %p79
    %p81 = scmp.le.s32.totalorder 1, %s7
    %p82 = scmp.lt.s32.totalorder %s7, 5
    %p83 = pnand %p81, %p82
    %p84 = pneg %p83
    // Predicated region
    $region9: #{resnet_block_forward.3} parent=5 // pred_check
      _
    $region10: #{resnet_block_forward.3} parent=5 // pred_check_branch
      %86 = sbr.rel (%p83) target = $region12
    $region11: #{resnet_block_forward.3} parent=5 // pred_region
      %s87 = ssub.s32 %s7, 1
    $region12: #{resnet_block_forward.3} parent=5 // pred_fallthru
      _
    %p88 = scmp.lt.s32.totalorder %s7, 4
    // Predicated region
    $region13: #{resnet_block_forward.3} parent=5 // pred_check
      %p89 = pneg %p88
    $region14: #{resnet_block_forward.3} parent=5 // pred_check_branch
      %91 = sbr.rel (%p89) target = $region16
    $region15: #{resnet_block_forward.3} parent=5 // pred_region
      // Predicated region
      $region17: #{resnet_block_forward.3} parent=15 // pred_check
        %p92 = pneg %p41
      $region18: #{resnet_block_forward.3} parent=15 // pred_check_branch
        %94 = sbr.rel (%p92) target = $region20
      $region19: #{resnet_block_forward.3} parent=15 // pred_region
        %s95 = smul.u32 8, %s15
        %p96 = scmp.lt.s32.totalorder %s14, 1
        %s97 = scalar_select %p96, %s14, 1
        %p98 = scmp.lt.s32.totalorder %s95, 15
        %s99 = scalar_select %p98, %s95, 15
        %s100 = smul.addr %s99, 2
        %s101 = smul.addr %s97, 32
        %s102 = sadd.s32 %s100, %s101
        %s103 = smul.addr %s102, 8
        %s104 = scalar_lea.vmem %s0, %s103
        %s105 = smul.u32 8, %s15
      $region20: #{resnet_block_forward.3} parent=15 // pred_fallthru
        _
    $region16: #{resnet_block_forward.3} parent=5 // pred_fallthru
      _
    %p106 = scmp.le.s32.totalorder 1, %s7
    %p107 = scmp.lt.s32.totalorder %s7, 5
    %p108 = pnand %p106, %p107
    %p109 = pneg %p108
    // Predicated region
    $region21: #{resnet_block_forward.3} parent=5 // pred_check
      _
    $region22: #{resnet_block_forward.3} parent=5 // pred_check_branch
      %111 = sbr.rel (%p108) target = $region24
    $region23: #{resnet_block_forward.3} parent=5 // pred_region
      %s112 = ssub.s32 %s7, 1
      %s113 = smul.u32 8, %s17
      %p114 = scmp.lt.s32.totalorder %s16, 1
      %s115 = scalar_select %p114, %s16, 1
      %p116 = scmp.lt.s32.totalorder %s113, 15
      %s117 = scalar_select %p116, %s113, 15
      %s118 = smul.addr %s117, 2
      %s119 = smul.addr %s115, 32
      %s120 = sadd.s32 %s118, %s119
      %s121 = smul.addr %s120, 8
      %s122 = scalar_lea.vmem %s0, %s121
      %p123 = pneg %p47
      %p124 = pneg %p44
      %p125 = pneg %p73
      %p126 = pneg %p70
      %p127 = scmp.lt.s32.totalorder %s16, 1
      %s128 = scalar_select %p127, %s16, 1
      %s129 = smul.addr %s128, 2
      %s130 = scalar_lea.vmem %s1, %s129
      %s131 = smul.u32 8, %s17
      %p132 = scmp.lt.s32.totalorder %s16, 1
      %s133 = scalar_select %p132, %s16, 1
      %p134 = scmp.lt.s32.totalorder %s131, 15
      %s135 = scalar_select %p134, %s131, 15
      %s136 = smul.addr %s135, 2
      %s137 = smul.addr %s133, 32
      %s138 = sadd.s32 %s136, %s137
      %s139 = smul.addr %s138, 8
      %s140 = scalar_lea.vmem %s0, %s139
      %s141 = smul.u32 8, %s17
      %p142 = scmp.lt.s32.totalorder %s16, 1
      %s143 = scalar_select %p142, %s16, 1
      %s144 = smul.addr %s143, 2
      %s145 = scalar_lea.vmem %s1, %s144
      %p146 = scmp.eq.s32.totalorder %s17, 0
      // Predicated region
      $region25: #{resnet_block_forward.3} parent=23 // pred_check
        %p147 = pneg %p146
      $region26: #{resnet_block_forward.3} parent=23 // pred_check_branch
        %149 = sbr.rel (%p147) target = $region28
      $region27: #{resnet_block_forward.3} parent=23 // pred_region
        %vm150 = vcmask 25600
        %151 = vst.msk [vmem:[%s145] sm:$0x3] %vm150, 0.0
      $region28: #{resnet_block_forward.3} parent=23 // pred_fallthru
        _
      %v152 = vld [vmem:[%s140] sm:$0xff]
      %v153 = vld [vmem:[%s140 + $0x8] sm:$0xff]
      %v154 = vld [vmem:[%s140 + $0x10] sm:$0xff]
      %v155 = vld [vmem:[%s140 + $0x18] sm:$0xff]
      %v156 = vld [vmem:[%s140 + $0x20] sm:$0xff]
      %v157 = vld [vmem:[%s140 + $0x28] sm:$0xff]
      %v158 = vld [vmem:[%s140 + $0x30] sm:$0xff]
      %v159 = vld [vmem:[%s140 + $0x38] sm:$0xff]
      %v160 = vld [vmem:[%s140 + $0x40] sm:$0xff]
      %v161 = vld [vmem:[%s140 + $0x48] sm:$0xff]
      %v162 = vld [vmem:[%s140 + $0x50] sm:$0xff]
      %v163 = vld [vmem:[%s140 + $0x58] sm:$0xff]
      %v164 = vld [vmem:[%s140 + $0x60] sm:$0xff]
      %v165 = vld [vmem:[%s140 + $0x68] sm:$0xff]
      %v166 = vld [vmem:[%s140 + $0x70] sm:$0xff]
      %v167 = vld [vmem:[%s140 + $0x78] sm:$0xff]
      %v168 = vld [vmem:[%s145] sm:$0x3]
      %vm169 = vcmask 31744
      %v170 = vsel %vm169, %v152, 0.0
      %v171 = vsel %vm169, %v153, 0.0
      %v172 = vadd.f32 %v170, %v171
      %v173 = vsel %vm169, %v154, 0.0
      %v174 = vadd.f32 %v172, %v173
      %v175 = vsel %vm169, %v155, 0.0
      %v176 = vadd.f32 %v174, %v175
      %v177 = vsel %vm169, %v156, 0.0
      %v178 = vadd.f32 %v176, %v177
      %v179 = vsel %vm169, %v157, 0.0
      %v180 = vadd.f32 %v178, %v179
      %v181 = vsel %vm169, %v158, 0.0
      %v182 = vadd.f32 %v180, %v181
      %v183 = vsel %vm169, %v159, 0.0
      %v184 = vadd.f32 %v182, %v183
      %v185 = vsel %vm169, %v160, 0.0
      %v186 = vadd.f32 %v184, %v185
      %v187 = vsel %vm169, %v161, 0.0
      %v188 = vadd.f32 %v186, %v187
      %v189 = vsel %vm169, %v162, 0.0
      %v190 = vadd.f32 %v188, %v189
      %v191 = vsel %vm169, %v163, 0.0
      %v192 = vadd.f32 %v190, %v191
      %v193 = vsel %vm169, %v164, 0.0
      %v194 = vadd.f32 %v192, %v193
      %v195 = vsel %vm169, %v165, 0.0
      %v196 = vadd.f32 %v194, %v195
      %v197 = vsel %vm169, %v166, 0.0
      %v198 = vadd.f32 %v196, %v197
      %v199 = vsel %vm169, %v167, 0.0
      %v200 = vadd.f32 %v198, %v199
      %v201 = vrot.slane %v200, 4
      %v202 = vadd.f32 %v200, %v201
      %v203 = vrot.slane %v202, 2
      %v204 = vadd.f32 %v202, %v203
      %v205 = vrot.slane %v204, 1
      %v206 = vadd.f32 %v204, %v205
      %v207 = vmul.f32 %v152, %v152
      %v208 = vmul.f32 %v153, %v153
      %v209 = vmul.f32 %v154, %v154
      %v210 = vmul.f32 %v155, %v155
      %v211 = vmul.f32 %v156, %v156
      %v212 = vmul.f32 %v157, %v157
      %v213 = vmul.f32 %v158, %v158
      %v214 = vmul.f32 %v159, %v159
      %v215 = vmul.f32 %v160, %v160
      %v216 = vmul.f32 %v161, %v161
      %v217 = vmul.f32 %v162, %v162
      %v218 = vmul.f32 %v163, %v163
      %v219 = vmul.f32 %v164, %v164
      %v220 = vmul.f32 %v165, %v165
      %v221 = vmul.f32 %v166, %v166
      %v222 = vmul.f32 %v167, %v167
      %v223 = vsel %vm169, %v207, 0.0
      %v224 = vsel %vm169, %v208, 0.0
      %v225 = vadd.f32 %v223, %v224
      %v226 = vsel %vm169, %v209, 0.0
      %v227 = vadd.f32 %v225, %v226
      %v228 = vsel %vm169, %v210, 0.0
      %v229 = vadd.f32 %v227, %v228
      %v230 = vsel %vm169, %v211, 0.0
      %v231 = vadd.f32 %v229, %v230
      %v232 = vsel %vm169, %v212, 0.0
      %v233 = vadd.f32 %v231, %v232
      %v234 = vsel %vm169, %v213, 0.0
      %v235 = vadd.f32 %v233, %v234
      %v236 = vsel %vm169, %v214, 0.0
      %v237 = vadd.f32 %v235, %v236
      %v238 = vsel %vm169, %v215, 0.0
      %v239 = vadd.f32 %v237, %v238
      %v240 = vsel %vm169, %v216, 0.0
      %v241 = vadd.f32 %v239, %v240
      %v242 = vsel %vm169, %v217, 0.0
      %v243 = vadd.f32 %v241, %v242
      %v244 = vsel %vm169, %v218, 0.0
      %v245 = vadd.f32 %v243, %v244
      %v246 = vsel %vm169, %v219, 0.0
      %v247 = vadd.f32 %v245, %v246
      %v248 = vsel %vm169, %v220, 0.0
      %v249 = vadd.f32 %v247, %v248
      %v250 = vsel %vm169, %v221, 0.0
      %v251 = vadd.f32 %v249, %v250
      %v252 = vsel %vm169, %v222, 0.0
      %v253 = vadd.f32 %v251, %v252
      %v254 = vrot.slane %v253, 4
      %v255 = vadd.f32 %v253, %v254
      %v256 = vrot.slane %v255, 2
      %v257 = vadd.f32 %v255, %v256
      %v258 = vrot.slane %v257, 1
      %v259 = vadd.f32 %v257, %v258
      %vm260 = vcmask 1040384
      %v261 = vsel %vm260, %v206, %v259
      %v262 = vadd.f32 %v168, %v261
      %vm263 = vcmask 25600
      %264 = vst.msk [vmem:[%s145] sm:$0x3] %vm263, %v262
      %p265 = scmp.lt.s32.totalorder %s16, 1
      %s266 = scalar_select %p265, %s16, 1
      %s267 = smul.addr %s266, 2
      %s268 = scalar_lea.vmem %s1, %s267
      // Predicated region
      $region29: #{resnet_block_forward.3} parent=23 // pred_check
        %p269 = pneg %p70
      $region30: #{resnet_block_forward.3} parent=23 // pred_check_branch
        %271 = sbr.rel (%p269) target = $region32
      $region31: #{resnet_block_forward.3} parent=23 // pred_region
        _
      $region32: #{resnet_block_forward.3} parent=23 // pred_fallthru
        _
    $region24: #{resnet_block_forward.3} parent=5 // pred_fallthru
      _
    %p272 = scmp.le.s32.totalorder 2, %s7
    // Predicated region
    $region33: #{resnet_block_forward.3} parent=5 // pred_check
      %p273 = pneg %p272
    $region34: #{resnet_block_forward.3} parent=5 // pred_check_branch
      %275 = sbr.rel (%p273) target = $region36
    $region35: #{resnet_block_forward.3} parent=5 // pred_region
      %s276 = ssub.s32 %s7, 2
      // Predicated region
      $region37: #{resnet_block_forward.3} parent=35 // pred_check
        %p277 = pneg %p76
      $region38: #{resnet_block_forward.3} parent=35 // pred_check_branch
        %279 = sbr.rel (%p277) target = $region40
      $region39: #{resnet_block_forward.3} parent=35 // pred_region
        %p280 = scmp.lt.s32.totalorder %s18, 1
        %s281 = scalar_select %p280, %s18, 1
        %s282 = smul.addr %s281, 2
        %s283 = scalar_lea.vmem %s1, %s282
      $region40: #{resnet_block_forward.3} parent=35 // pred_fallthru
        _
    $region36: #{resnet_block_forward.3} parent=5 // pred_fallthru
      _
  $region6: #{resnet_block_forward.3} parent=0 // loop_footer
    %s11 = sadd.s32 1, %s7
  $region7: #{resnet_block_forward.3} parent=0 // loop_footer_branch
    %6 = sbr.rel target = $region3
  $region8: #{resnet_block_forward.3} parent=0 // loop_exit
    _

// kernel: resnet_block_forward.4
$region0: #{resnet_block_forward.4}
  #allocation0 [shape = 'u32[]', space=smem, size = 0x4, offset = 0x4, fixed_abs, tag = 'smem constant byte address 0x4 - core index']
  #allocation1 [shape = 'u32[144,128]{1,0:T(1,128)}', space=vmem, size = 0x12000, scoped, tag = 'internal scratch']
  #allocation2 [shape = 'f32[10,18,4]{2,1,0:T(8,128)}', space=vmem, size = 0x1e000, scoped, tag = 'scratch operand']
  %s0 = inlined_call_operand.vmem [shape: f32[2,16,16,4], index: 0, kind: input, shape index: {}]
  %s1 = inlined_call_operand.vmem [shape: f32[2,2,16,4], index: 1, kind: input, shape index: {}]
  %s2 = inlined_call_operand.vmem [shape: f32[2,2,16,4], index: 2, kind: input, shape index: {}]
  %s3 = inlined_call_operand.vmem [shape: f32[2,1,4], index: 3, kind: input, shape index: {}]
  %s4 = inlined_call_operand.vmem [shape: f32[2,1,4], index: 4, kind: input, shape index: {}]
  %s5 = inlined_call_operand.vmem [shape: bf16[3,12,8], index: 5, kind: input, shape index: {}]
  %s6 = inlined_call_operand.vmem [shape: f32[1,8], index: 6, kind: input, shape index: {}]
  %s7 = inlined_call_operand.vmem [shape: bf16[2,16,16,8], index: 7, kind: output, shape index: {0}]
  %s8 = inlined_call_operand.vmem [shape: f32[2,2,8], index: 8, kind: output, shape index: {1}]
  %9 = xla_tuple %s7, %s8
  %s10 = sld [smem:[#allocation0]]
  $region77: #{resnet_block_forward.4} parent=0
    _
  %s12 = ssub.s32 1, %s10
  %s13 = scalar_select 0, %s12, %s10
  loop: start=0, step=1, limit=6
  $region2: #{resnet_block_forward.4} parent=0 // loop_pre_header
    _
  $region3: #{resnet_block_forward.4} parent=0 // loop_header
    %s15 = sphi 0, %s19
    %p16 = scmp.ge.s32.totalorder %s15, 6
    %s22 = sphi 0, %s34
    %s23 = sphi 0, %s30
    %s24 = sphi 0, %s22
    %s25 = sphi 0, %s23
    %s26 = sphi 0, %s24
    %s27 = sphi 0, %s25
    %s39 = sphi 0, %s41
    %s42 = sphi 0, %s39
    %s43 = sphi 0, %s42
    %s59 = sphi 0, %s43
    %s67 = sphi 0, %s69
    %s70 = sphi 0, %s67
    %s71 = sphi 0, %s70
    %s87 = sphi 0, %s71
    %s95 = sphi 0, %s97
    %s98 = sphi 0, %s95
    %s99 = sphi 0, %s98
    %s115 = sphi 0, %s99
    %s121 = sphi 0, %s123
    %s124 = sphi 0, %s121
    %s125 = sphi 0, %s124
    %s141 = sphi 0, %s125
    %s147 = sphi 0, %s149
    %s150 = sphi 0, %s147
    %s151 = sphi 0, %s150
    %s167 = sphi 0, %s151
    %s171 = sphi 0, %s171
    %s173 = sphi 0, %s171
    %s174 = sphi 0, %s173
    %s188 = sphi 0, %s174
    %s192 = sphi 0, %s192
    %s194 = sphi 0, %s192
    %s195 = sphi 0, %s194
    %s209 = sphi 0, %s195
    %s217 = sphi 0, %s219
    %s220 = sphi 0, %s217
    %s221 = sphi 0, %s220
    %s237 = sphi 0, %s221
    %s243 = sphi 0, %s245
    %s246 = sphi 0, %s243
    %s247 = sphi 0, %s246
    %s263 = sphi 0, %s247
  $region4: #{resnet_block_forward.4} parent=0 // loop_header_branch
    %18 = sbr.rel (%p16) target = $region8
  $region5: #{resnet_block_forward.4} parent=0 // loop_body
    %s20 = ssub.s32 %s15, 1
    %s21 = ssub.s32 %s15, 2
    %s28 = sadd.s32 1, %s23
    %p29 = scmp.ge.s32.totalorder %s28, 2
    %s30 = scalar_select %p29, 0, %s28
    %s31 = sadd.s32 1, %s22
    %s32 = scalar_select %p29, %s31, %s22
    %p33 = scmp.ge.s32.totalorder %s32, 2
    %s34 = scalar_select %p33, 0, %s32
    %s35 = ssub.s32 %s22, %s34
    %s36 = ssub.s32 %s23, %s30
    %s37 = sor.u32 %s35, %s36
    %p38 = scmp.eq.s32.totalorder %s37, 0
    %s40 = sadd.s32 %s39, 1
    %s41 = scalar_select %p38, %s39, %s40
    %p44 = pneg %p38
    %p45 = scmp.eq.s32.totalorder %s15, 3
    %p46 = por %p44, %p45
    %p47 = scmp.ne.s32.totalorder %s39, %s42
    %p48 = scmp.eq.s32.totalorder %s15, 0
    %p49 = por %p47, %p48
    %p50 = scmp.ne.s32.totalorder %s39, %s42
    %p51 = scmp.eq.s32.totalorder %s20, 3
    %p52 = por %p50, %p51
    %p53 = scmp.ne.s32.totalorder %s42, %s43
    %p54 = scmp.eq.s32.totalorder %s20, 0
    %p55 = por %p53, %p54
    %p56 = scmp.ne.s32.totalorder %s42, %s43
    %p57 = scmp.eq.s32.totalorder %s21, 3
    %p58 = por %p56, %p57
    %p60 = scmp.ne.s32.totalorder %s43, %s59
    %p61 = scmp.eq.s32.totalorder %s21, 0
    %p62 = por %p60, %p61
    %s63 = ssub.s32 %s22, %s34
    %s64 = ssub.s32 %s23, %s30
    %s65 = sor.u32 %s63, %s64
    %p66 = scmp.eq.s32.totalorder %s65, 0
    %s68 = sadd.s32 %s67, 1
    %s69 = scalar_select %p66, %s67, %s68
    %p72 = pneg %p66
    %p73 = scmp.eq.s32.totalorder %s15, 3
    %p74 = por %p72, %p73
    %p75 = scmp.ne.s32.totalorder %s67, %s70
    %p76 = scmp.eq.s32.totalorder %s15, 0
    %p77 = por %p75, %p76
    %p78 = scmp.ne.s32.totalorder %s67, %s70
    %p79 = scmp.eq.s32.totalorder %s20, 3
    %p80 = por %p78, %p79
    %p81 = scmp.ne.s32.totalorder %s70, %s71
    %p82 = scmp.eq.s32.totalorder %s20, 0
    %p83 = por %p81, %p82
    %p84 = scmp.ne.s32.totalorder %s70, %s71
    %p85 = scmp.eq.s32.totalorder %s21, 3
    %p86 = por %p84, %p85
    %p88 = scmp.ne.s32.totalorder %s71, %s87
    %p89 = scmp.eq.s32.totalorder %s21, 0
    %p90 = por %p88, %p89
    %s91 = ssub.s32 %s22, %s34
    %s92 = ssub.s32 %s23, %s30
    %s93 = sor.u32 %s91, %s92
    %p94 = scmp.eq.s32.totalorder %s93, 0
    %s96 = sadd.s32 %s95, 1
    %s97 = scalar_select %p94, %s95, %s96
    %p100 = pneg %p94
    %p101 = scmp.eq.s32.totalorder %s15, 3
    %p102 = por %p100, %p101
    %p103 = scmp.ne.s32.totalorder %s95, %s98
    %p104 = scmp.eq.s32.totalorder %s15, 0
    %p105 = por %p103, %p104
    %p106 = scmp.ne.s32.totalorder %s95, %s98
    %p107 = scmp.eq.s32.totalorder %s20, 3
    %p108 = por %p106, %p107
    %p109 = scmp.ne.s32.totalorder %s98, %s99
    %p110 = scmp.eq.s32.totalorder %s20, 0
    %p111 = por %p109, %p110
    %p112 = scmp.ne.s32.totalorder %s98, %s99
    %p113 = scmp.eq.s32.totalorder %s21, 3
    %p114 = por %p112, %p113
    %p116 = scmp.ne.s32.totalorder %s99, %s115
    %p117 = scmp.eq.s32.totalorder %s21, 0
    %p118 = por %p116, %p117
    %s119 = ssub.s32 %s22, %s34
    %p120 = scmp.eq.s32.totalorder %s119, 0
    %s122 = sadd.s32 %s121, 1
    %s123 = scalar_select %p120, %s121, %s122
    %p126 = pneg %p120
    %p127 = scmp.eq.s32.totalorder %s15, 3
    %p128 = por %p126, %p127
    %p129 = scmp.ne.s32.totalorder %s121, %s124
    %p130 = scmp.eq.s32.totalorder %s15, 0
    %p131 = por %p129, %p130
    %p132 = scmp.ne.s32.totalorder %s121, %s124
    %p133 = scmp.eq.s32.totalorder %s20, 3
    %p134 = por %p132, %p133
    %p135 = scmp.ne.s32.totalorder %s124, %s125
    %p136 = scmp.eq.s32.totalorder %s20, 0
    %p137 = por %p135, %p136
    %p138 = scmp.ne.s32.totalorder %s124, %s125
    %p139 = scmp.eq.s32.totalorder %s21, 3
    %p140 = por %p138, %p139
    %p142 = scmp.ne.s32.totalorder %s125, %s141
    %p143 = scmp.eq.s32.totalorder %s21, 0
    %p144 = por %p142, %p143
    %s145 = ssub.s32 %s22, %s34
    %p146 = scmp.eq.s32.totalorder %s145, 0
    %s148 = sadd.s32 %s147, 1
    %s149 = scalar_select %p146, %s147, %s148
    %p152 = pneg %p146
    %p153 = scmp.eq.s32.totalorder %s15, 3
    %p154 = por %p152, %p153
    %p155 = scmp.ne.s32.totalorder %s147, %s150
    %p156 = scmp.eq.s32.totalorder %s15, 0
    %p157 = por %p155, %p156
    %p158 = scmp.ne.s32.totalorder %s147, %s150
    %p159 = scmp.eq.s32.totalorder %s20, 3
    %p160 = por %p158, %p159
    %p161 = scmp.ne.s32.totalorder %s150, %s151
    %p162 = scmp.eq.s32.totalorder %s20, 0
    %p163 = por %p161, %p162
    %p164 = scmp.ne.s32.totalorder %s150, %s151
    %p165 = scmp.eq.s32.totalorder %s21, 3
    %p166 = por %p164, %p165
    %p168 = scmp.ne.s32.totalorder %s151, %s167
    %p169 = scmp.eq.s32.totalorder %s21, 0
    %p170 = por %p168, %p169
    %s172 = sadd.s32 %s171, 1
    %p175 = scmp.eq.s32.totalorder %s15, 3
    %p176 = scmp.ne.s32.totalorder %s171, %s173
    %p177 = scmp.eq.s32.totalorder %s15, 0
    %p178 = por %p176, %p177
    %p179 = scmp.ne.s32.totalorder %s171, %s173
    %p180 = scmp.eq.s32.totalorder %s20, 3
    %p181 = por %p179, %p180
    %p182 = scmp.ne.s32.totalorder %s173, %s174
    %p183 = scmp.eq.s32.totalorder %s20, 0
    %p184 = por %p182, %p183
    %p185 = scmp.ne.s32.totalorder %s173, %s174
    %p186 = scmp.eq.s32.totalorder %s21, 3
    %p187 = por %p185, %p186
    %p189 = scmp.ne.s32.totalorder %s174, %s188
    %p190 = scmp.eq.s32.totalorder %s21, 0
    %p191 = por %p189, %p190
    %s193 = sadd.s32 %s192, 1
    %p196 = scmp.eq.s32.totalorder %s15, 3
    %p197 = scmp.ne.s32.totalorder %s192, %s194
    %p198 = scmp.eq.s32.totalorder %s15, 0
    %p199 = por %p197, %p198
    %p200 = scmp.ne.s32.totalorder %s192, %s194
    %p201 = scmp.eq.s32.totalorder %s20, 3
    %p202 = por %p200, %p201
    %p203 = scmp.ne.s32.totalorder %s194, %s195
    %p204 = scmp.eq.s32.totalorder %s20, 0
    %p205 = por %p203, %p204
    %p206 = scmp.ne.s32.totalorder %s194, %s195
    %p207 = scmp.eq.s32.totalorder %s21, 3
    %p208 = por %p206, %p207
    %p210 = scmp.ne.s32.totalorder %s195, %s209
    %p211 = scmp.eq.s32.totalorder %s21, 0
    %p212 = por %p210, %p211
    %s213 = ssub.s32 %s22, %s34
    %s214 = ssub.s32 %s23, %s30
    %s215 = sor.u32 %s213, %s214
    %p216 = scmp.eq.s32.totalorder %s215, 0
    %s218 = sadd.s32 %s217, 1
    %s219 = scalar_select %p216, %s217, %s218
    %p222 = pneg %p216
    %p223 = scmp.eq.s32.totalorder %s15, 3
    %p224 = por %p222, %p223
    %p225 = scmp.ne.s32.totalorder %s217, %s220
    %p226 = scmp.eq.s32.totalorder %s15, 0
    %p227 = por %p225, %p226
    %p228 = scmp.ne.s32.totalorder %s217, %s220
    %p229 = scmp.eq.s32.totalorder %s20, 3
    %p230 = por %p228, %p229
    %p231 = scmp.ne.s32.totalorder %s220, %s221
    %p232 = scmp.eq.s32.totalorder %s20, 0
    %p233 = por %p231, %p232
    %p234 = scmp.ne.s32.totalorder %s220, %s221
    %p235 = scmp.eq.s32.totalorder %s21, 3
    %p236 = por %p234, %p235
    %p238 = scmp.ne.s32.totalorder %s221, %s237
    %p239 = scmp.eq.s32.totalorder %s21, 0
    %p240 = por %p238, %p239
    %s241 = ssub.s32 %s22, %s34
    %p242 = scmp.eq.s32.totalorder %s241, 0
    %s244 = sadd.s32 %s243, 1
    %s245 = scalar_select %p242, %s243, %s244
    %p248 = pneg %p242
    %p249 = scmp.eq.s32.totalorder %s15, 3
    %p250 = por %p248, %p249
    %p251 = scmp.ne.s32.totalorder %s243, %s246
    %p252 = scmp.eq.s32.totalorder %s15, 0
    %p253 = por %p251, %p252
    %p254 = scmp.ne.s32.totalorder %s243, %s246
    %p255 = scmp.eq.s32.totalorder %s20, 3
    %p256 = por %p254, %p255
    %p257 = scmp.ne.s32.totalorder %s246, %s247
    %p258 = scmp.eq.s32.totalorder %s20, 0
    %p259 = por %p257, %p258
    %p260 = scmp.ne.s32.totalorder %s246, %s247
    %p261 = scmp.eq.s32.totalorder %s21, 3
    %p262 = por %p260, %p261
    %p264 = scmp.ne.s32.totalorder %s247, %s263
    %p265 = scmp.eq.s32.totalorder %s21, 0
    %p266 = por %p264, %p265
    %p267 = scmp.le.s32.totalorder 1, %s15
    %p268 = scmp.lt.s32.totalorder %s15, 5
    %p269 = pnand %p267, %p268
    %p270 = pneg %p269
    // Predicated region
    $region9: #{resnet_block_forward.4} parent=5 // pred_check
      _
    $region10: #{resnet_block_forward.4} parent=5 // pred_check_branch
      %272 = sbr.rel (%p269) target = $region12
    $region11: #{resnet_block_forward.4} parent=5 // pred_region
      %s273 = ssub.s32 %s15, 1
      // Predicated region
      $region13: #{resnet_block_forward.4} parent=11 // pred_check
        %p274 = pneg %p184
      $region14: #{resnet_block_forward.4} parent=11 // pred_check_branch
        %276 = sbr.rel (%p274) target = $region16
      $region15: #{resnet_block_forward.4} parent=11 // pred_region
        _
      $region16: #{resnet_block_forward.4} parent=11 // pred_fallthru
        _
      // Predicated region
      $region17: #{resnet_block_forward.4} parent=11 // pred_check
        %p277 = pneg %p205
      $region18: #{resnet_block_forward.4} parent=11 // pred_check_branch
        %279 = sbr.rel (%p277) target = $region20
      $region19: #{resnet_block_forward.4} parent=11 // pred_region
        _
      $region20: #{resnet_block_forward.4} parent=11 // pred_fallthru
        _
    $region12: #{resnet_block_forward.4} parent=5 // pred_fallthru
      _
    %p280 = scmp.lt.s32.totalorder %s15, 4
    // Predicated region
    $region21: #{resnet_block_forward.4} parent=5 // pred_check
      %p281 = pneg %p280
    $region22: #{resnet_block_forward.4} parent=5 // pred_check_branch
      %283 = sbr.rel (%p281) target = $region24
    $region23: #{resnet_block_forward.4} parent=5 // pred_region
      // Predicated region
      $region25: #{resnet_block_forward.4} parent=23 // pred_check
        %p284 = pneg %p49
      $region26: #{resnet_block_forward.4} parent=23 // pred_check_branch
        %286 = sbr.rel (%p284) target = $region28
      $region27: #{resnet_block_forward.4} parent=23 // pred_region
        %s287 = smul.u32 8, %s23
        %p288 = scmp.lt.s32.totalorder %s22, 1
        %s289 = scalar_select %p288, %s22, 1
        %p290 = scmp.lt.s32.totalorder %s287, 15
        %s291 = scalar_select %p290, %s287, 15
        %s292 = smul.addr %s291, 2
        %s293 = smul.addr %s289, 32
        %s294 = sadd.s32 %s292, %s293
        %s295 = smul.addr %s294, 8
        %s296 = scalar_lea.vmem %s0, %s295
        %s297 = smul.u32 8, %s23
      $region28: #{resnet_block_forward.4} parent=23 // pred_fallthru
        _
      // Predicated region
      $region29: #{resnet_block_forward.4} parent=23 // pred_check
        %p298 = pneg %p77
      $region30: #{resnet_block_forward.4} parent=23 // pred_check_branch
        %300 = sbr.rel (%p298) target = $region32
      $region31: #{resnet_block_forward.4} parent=23 // pred_region
        %p301 = scmp.lt.s32.totalorder %s22, 1
        %s302 = scalar_select %p301, %s22, 1
        %p303 = scmp.lt.s32.totalorder %s23, 1
        %s304 = scalar_select %p303, %s23, 1
        %s305 = smul.addr %s304, 2
        %s306 = smul.addr %s302, 4
        %s307 = sadd.s32 %s305, %s306
        %s308 = smul.addr %s307, 8
        %s309 = scalar_lea.vmem %s1, %s308
      $region32: #{resnet_block_forward.4} parent=23 // pred_fallthru
        _
      // Predicated region
      $region33: #{resnet_block_forward.4} parent=23 // pred_check
        %p310 = pneg %p105
      $region34: #{resnet_block_forward.4} parent=23 // pred_check_branch
        %312 = sbr.rel (%p310) target = $region36
      $region35: #{resnet_block_forward.4} parent=23 // pred_region
        %p313 = scmp.lt.s32.totalorder %s22, 1
        %s314 = scalar_select %p313, %s22, 1
        %p315 = scmp.lt.s32.totalorder %s23, 1
        %s316 = scalar_select %p315, %s23, 1
        %s317 = smul.addr %s316, 2
        %s318 = smul.addr %s314, 4
        %s319 = sadd.s32 %s317, %s318
        %s320 = smul.addr %s319, 8
        %s321 = scalar_lea.vmem %s2, %s320
      $region36: #{resnet_block_forward.4} parent=23 // pred_fallthru
        _
      // Predicated region
      $region37: #{resnet_block_forward.4} parent=23 // pred_check
        %p322 = pneg %p131
      $region38: #{resnet_block_forward.4} parent=23 // pred_check_branch
        %324 = sbr.rel (%p322) target = $region40
      $region39: #{resnet_block_forward.4} parent=23 // pred_region
        %p325 = scmp.lt.s32.totalorder %s22, 1
        %s326 = scalar_select %p325, %s22, 1
        %s327 = scalar_lea.vmem %s3, %s326
      $region40: #{resnet_block_forward.4} parent=23 // pred_fallthru
        _
      // Predicated region
      $region41: #{resnet_block_forward.4} parent=23 // pred_check
        %p328 = pneg %p157
      $region42: #{resnet_block_forward.4} parent=23 // pred_check_branch
        %330 = sbr.rel (%p328) target = $region44
      $region43: #{resnet_block_forward.4} parent=23 // pred_region
        %p331 = scmp.lt.s32.totalorder %s22, 1
        %s332 = scalar_select %p331, %s22, 1
        %s333 = scalar_lea.vmem %s4, %s332
      $region44: #{resnet_block_forward.4} parent=23 // pred_fallthru
        _
    $region24: #{resnet_block_forward.4} parent=5 // pred_fallthru
      _
    %p334 = scmp.le.s32.totalorder 1, %s15
    %p335 = scmp.lt.s32.totalorder %s15, 5
    %p336 = pnand %p334, %p335
    %p337 = pneg %p336
    // Predicated region
    $region45: #{resnet_block_forward.4} parent=5 // pred_check
      _
    $region46: #{resnet_block_forward.4} parent=5 // pred_check_branch
      %339 = sbr.rel (%p336) target = $region48
    $region47: #{resnet_block_forward.4} parent=5 // pred_region
      %s340 = ssub.s32 %s15, 1
      %s341 = smul.u32 8, %s25
      %p342 = scmp.lt.s32.totalorder %s24, 1
      %s343 = scalar_select %p342, %s24, 1
      %p344 = scmp.lt.s32.totalorder %s341, 15
      %s345 = scalar_select %p344, %s341, 15
      %s346 = smul.addr %s345, 2
      %s347 = smul.addr %s343, 32
      %s348 = sadd.s32 %s346, %s347
      %s349 = smul.addr %s348, 8
      %s350 = scalar_lea.vmem %s0, %s349
      %p351 = pneg %p55
      %p352 = pneg %p52
      %p353 = scmp.lt.s32.totalorder %s24, 1
      %s354 = scalar_select %p353, %s24, 1
      %p355 = scmp.lt.s32.totalorder %s25, 1
      %s356 = scalar_select %p355, %s25, 1
      %s357 = smul.addr %s356, 2
      %s358 = smul.addr %s354, 4
      %s359 = sadd.s32 %s357, %s358
      %s360 = smul.addr %s359, 8
      %s361 = scalar_lea.vmem %s1, %s360
      %p362 = pneg %p83
      %p363 = pneg %p80
      %p364 = scmp.lt.s32.totalorder %s24, 1
      %s365 = scalar_select %p364, %s24, 1
      %p366 = scmp.lt.s32.totalorder %s25, 1
      %s367 = scalar_select %p366, %s25, 1
      %s368 = smul.addr %s367, 2
      %s369 = smul.addr %s365, 4
      %s370 = sadd.s32 %s368, %s369
      %s371 = smul.addr %s370, 8
      %s372 = scalar_lea.vmem %s2, %s371
      %p373 = pneg %p111
      %p374 = pneg %p108
      %p375 = scmp.lt.s32.totalorder %s24, 1
      %s376 = scalar_select %p375, %s24, 1
      %s377 = scalar_lea.vmem %s3, %s376
      %p378 = pneg %p137
      %p379 = pneg %p134
      %p380 = scmp.lt.s32.totalorder %s24, 1
      %s381 = scalar_select %p380, %s24, 1
      %s382 = scalar_lea.vmem %s4, %s381
      %p383 = pneg %p163
      %p384 = pneg %p160
      %p385 = pneg %p184
      %p386 = pneg %p181
      %p387 = pneg %p205
      %p388 = pneg %p202
      %p389 = pneg %p233
      %p390 = pneg %p230
      %s391 = smul.u32 8, %s25
      %p392 = scmp.lt.s32.totalorder %s24, 1
      %s393 = scalar_select %p392, %s24, 1
      %p394 = scmp.lt.s32.totalorder %s391, 15
      %s395 = scalar_select %p394, %s391, 15
      %s396 = smul.addr %s395, 2
      %s397 = smul.addr %s393, 32
      %s398 = sadd.s32 %s396, %s397
      %s399 = smul.addr %s398, 4
      %s400 = scalar_lea.vmem %s7, %s399
      %p401 = pneg %p259
      %p402 = pneg %p256
      %p403 = scmp.lt.s32.totalorder %s24, 1
      %s404 = scalar_select %p403, %s24, 1
      %s405 = smul.addr %s404, 2
      %s406 = scalar_lea.vmem %s8, %s405
      %s407 = smul.u32 8, %s25
      %p408 = scmp.lt.s32.totalorder %s24, 1
      %s409 = scalar_select %p408, %s24, 1
      %p410 = scmp.lt.s32.totalorder %s407, 15
      %s411 = scalar_select %p410, %s407, 15
      %s412 = smul.addr %s411, 2
      %s413 = smul.addr %s409, 32
      %s414 = sadd.s32 %s412, %s413
      %s415 = smul.addr %s414, 8
      %s416 = scalar_lea.vmem %s0, %s415
      %s417 = smul.u32 8, %s25
      %p418 = scmp.lt.s32.totalorder %s24, 1
      %s419 = scalar_select %p418, %s24, 1
      %p420 = scmp.lt.s32.totalorder %s25, 1
      %s421 = scalar_select %p420, %s25, 1
      %s422 = smul.addr %s421, 2
      %s423 = smul.addr %s419, 4
      %s424 = sadd.s32 %s422, %s423
      %s425 = smul.addr %s424, 8
      %s426 = scalar_lea.vmem %s1, %s425
      %p427 = scmp.lt.s32.totalorder %s24, 1
      %s428 = scalar_select %p427, %s24, 1
      %p429 = scmp.lt.s32.totalorder %s25, 1
      %s430 = scalar_select %p429, %s25, 1
      %s431 = smul.addr %s430, 2
      %s432 = smul.addr %s428, 4
      %s433 = sadd.s32 %s431, %s432
      %s434 = smul.addr %s433, 8
      %s435 = scalar_lea.vmem %s2, %s434
      %p436 = scmp.lt.s32.totalorder %s24, 1
      %s437 = scalar_select %p436, %s24, 1
      %s438 = scalar_lea.vmem %s3, %s437
      %p439 = scmp.lt.s32.totalorder %s24, 1
      %s440 = scalar_select %p439, %s24, 1
      %s441 = scalar_lea.vmem %s4, %s440
      %s442 = smul.u32 8, %s25
      %p443 = scmp.lt.s32.totalorder %s24, 1
      %s444 = scalar_select %p443, %s24, 1
      %p445 = scmp.lt.s32.totalorder %s442, 15
      %s446 = scalar_select %p445, %s442, 15
      %s447 = smul.addr %s446, 2
      %s448 = smul.addr %s444, 32
      %s449 = sadd.s32 %s447, %s448
      %s450 = smul.addr %s449, 4
      %s451 = scalar_lea.vmem %s7, %s450
      %s452 = smul.u32 8, %s25
      %p453 = scmp.lt.s32.totalorder %s24, 1
      %s454 = scalar_select %p453, %s24, 1
      %s455 = smul.addr %s454, 2
      %s456 = scalar_lea.vmem %s8, %s455
      %v458 = vld [vmem:[%s438] sm:$0x1]
      %v459 = vld [vmem:[%s441] sm:$0x1]
      %p460 = scmp.eq.s32.totalorder %s25, 0
      // Predicated region
      $region49: #{resnet_block_forward.4} parent=47 // pred_check
        %p461 = pneg %p460
      $region50: #{resnet_block_forward.4} parent=47 // pred_check_branch
        %463 = sbr.rel (%p461) target = $region52
      $region51: #{resnet_block_forward.4} parent=47 // pred_region
        %vm464 = vcmask 24576
        %465 = vst.msk [vmem:[#allocation2] sm:$0x1] %vm464, 0.0
        %466 = vst.msk [vmem:[#allocation2 + $0x18] sm:$0x1] %vm464, 0.0
        %467 = vst.msk [vmem:[#allocation2 + $0x30] sm:$0x1] %vm464, 0.0
        %468 = vst.msk [vmem:[#allocation2 + $0x48] sm:$0x1] %vm464, 0.0
        %469 = vst.msk [vmem:[#allocation2 + $0x60] sm:$0x1] %vm464, 0.0
        %470 = vst.msk [vmem:[#allocation2 + $0x78] sm:$0x1] %vm464, 0.0
        %471 = vst.msk [vmem:[#allocation2 + $0x90] sm:$0x1] %vm464, 0.0
        %472 = vst.msk [vmem:[#allocation2 + $0xa8] sm:$0x1] %vm464, 0.0
        %473 = vst.msk [vmem:[#allocation2 + $0xc0] sm:$0x1] %vm464, 0.0
        %474 = vst.msk [vmem:[#allocation2 + $0xd8] sm:$0x1] %vm464, 0.0
        %475 = vst.msk [vmem:[#allocation2 + $0x11] sm:$0x1] %vm464, 0.0
        %476 = vst.msk [vmem:[#allocation2 + $0x29] sm:$0x1] %vm464, 0.0
        %477 = vst.msk [vmem:[#allocation2 + $0x41] sm:$0x1] %vm464, 0.0
        %478 = vst.msk [vmem:[#allocation2 + $0x59] sm:$0x1] %vm464, 0.0
        %479 = vst.msk [vmem:[#allocation2 + $0x71] sm:$0x1] %vm464, 0.0
        %480 = vst.msk [vmem:[#allocation2 + $0x89] sm:$0x1] %vm464, 0.0
        %481 = vst.msk [vmem:[#allocation2 + $0xa1] sm:$0x1] %vm464, 0.0
        %482 = vst.msk [vmem:[#allocation2 + $0xb9] sm:$0x1] %vm464, 0.0
        %483 = vst.msk [vmem:[#allocation2 + $0xd1] sm:$0x1] %vm464, 0.0
        %484 = vst.msk [vmem:[#allocation2 + $0xe9] sm:$0x1] %vm464, 0.0
      $region52: #{resnet_block_forward.4} parent=47 // pred_fallthru
        _
      %v485 = vld [vmem:[%s416] sm:$0xff]
      %v486 = vld [vmem:[%s416 + $0x8] sm:$0xff]
      %v487 = vld [vmem:[%s416 + $0x10] sm:$0xff]
      %v488 = vld [vmem:[%s416 + $0x18] sm:$0xff]
      %v489 = vld [vmem:[%s416 + $0x20] sm:$0xff]
      %v490 = vld [vmem:[%s416 + $0x28] sm:$0xff]
      %v491 = vld [vmem:[%s416 + $0x30] sm:$0xff]
      %v492 = vld [vmem:[%s416 + $0x38] sm:$0xff]
      %v493 = vld [vmem:[%s416 + $0x40] sm:$0xff]
      %v494 = vld [vmem:[%s416 + $0x48] sm:$0xff]
      %v495 = vld [vmem:[%s416 + $0x50] sm:$0xff]
      %v496 = vld [vmem:[%s416 + $0x58] sm:$0xff]
      %v497 = vld [vmem:[%s416 + $0x60] sm:$0xff]
      %v498 = vld [vmem:[%s416 + $0x68] sm:$0xff]
      %v499 = vld [vmem:[%s416 + $0x70] sm:$0xff]
      %v500 = vld [vmem:[%s416 + $0x78] sm:$0xff]
      %v502 = vlaneseq
      %v503 = vshrl.u32 %v502, 7
      %v504 = vsub.s32 0, %v503
      %v505 = vrot.slane %v458, %v504
      %v507 = vmul.f32 %v485, %v505
      %v508 = vmul.f32 %v486, %v505
      %v509 = vmul.f32 %v487, %v505
      %v510 = vmul.f32 %v488, %v505
      %v511 = vmul.f32 %v489, %v505
      %v512 = vmul.f32 %v490, %v505
      %v513 = vmul.f32 %v491, %v505
      %v514 = vmul.f32 %v492, %v505
      %v515 = vmul.f32 %v493, %v505
      %v516 = vmul.f32 %v494, %v505
      %v517 = vmul.f32 %v495, %v505
      %v518 = vmul.f32 %v496, %v505
      %v519 = vmul.f32 %v497, %v505
      %v520 = vmul.f32 %v498, %v505
      %v521 = vmul.f32 %v499, %v505
      %v522 = vmul.f32 %v500, %v505
      %v524 = vlaneseq
      %v525 = vshrl.u32 %v524, 7
      %v526 = vsub.s32 0, %v525
      %v527 = vrot.slane %v459, %v526
      %v529 = vadd.f32 %v507, %v527
      %v530 = vadd.f32 %v508, %v527
      %v531 = vadd.f32 %v509, %v527
      %v532 = vadd.f32 %v510, %v527
      %v533 = vadd.f32 %v511, %v527
      %v534 = vadd.f32 %v512, %v527
      %v535 = vadd.f32 %v513, %v527
      %v536 = vadd.f32 %v514, %v527
      %v537 = vadd.f32 %v515, %v527
      %v538 = vadd.f32 %v516, %v527
      %v539 = vadd.f32 %v517, %v527
      %v540 = vadd.f32 %v518, %v527
      %v541 = vadd.f32 %v519, %v527
      %v542 = vadd.f32 %v520, %v527
      %v543 = vadd.f32 %v521, %v527
      %v544 = vadd.f32 %v522, %v527
      %v545 = vxor.u32 %v529, 2147483648
      %v546 = vxor.u32 %v530, 2147483648
      %v547 = vxor.u32 %v531, 2147483648
      %v548 = vxor.u32 %v532, 2147483648
      %v549 = vxor.u32 %v533, 2147483648
      %v550 = vxor.u32 %v534, 2147483648
      %v551 = vxor.u32 %v535, 2147483648
      %v552 = vxor.u32 %v536, 2147483648
      %v553 = vxor.u32 %v537, 2147483648
      %v554 = vxor.u32 %v538, 2147483648
      %v555 = vxor.u32 %v539, 2147483648
      %v556 = vxor.u32 %v540, 2147483648
      %v557 = vxor.u32 %v541, 2147483648
      %v558 = vxor.u32 %v542, 2147483648
      %v559 = vxor.u32 %v543, 2147483648
      %v560 = vxor.u32 %v544, 2147483648
      %v561 = vmul.f32 %v545, 1.442695
      %v562 = vpow.pop %v561
      %v563 = vmul.f32 %v546, 1.442695
      %v564 = vpow.pop %v563
      %v565 = vmul.f32 %v547, 1.442695
      %v566 = vpow.pop %v565
      %v567 = vmul.f32 %v548, 1.442695
      %v568 = vpow.pop %v567
      %v569 = vmul.f32 %v549, 1.442695
      %v570 = vpow.pop %v569
      %v571 = vmul.f32 %v550, 1.442695
      %v572 = vpow.pop %v571
      %v573 = vmul.f32 %v551, 1.442695
      %v574 = vpow.pop %v573
      %v575 = vmul.f32 %v552, 1.442695
      %v576 = vpow.pop %v575
      %v577 = vmul.f32 %v553, 1.442695
      %v578 = vpow.pop %v577
      %v579 = vmul.f32 %v554, 1.442695
      %v580 = vpow.pop %v579
      %v581 = vmul.f32 %v555, 1.442695
      %v582 = vpow.pop %v581
      %v583 = vmul.f32 %v556, 1.442695
      %v584 = vpow.pop %v583
      %v585 = vmul.f32 %v557, 1.442695
      %v586 = vpow.pop %v585
      %v587 = vmul.f32 %v558, 1.442695
      %v588 = vpow.pop %v587
      %v589 = vmul.f32 %v559, 1.442695
      %v590 = vpow.pop %v589
      %v591 = vmul.f32 %v560, 1.442695
      %v592 = vpow.pop %v591
      %v593 = vadd.f32 %v562, 1.0
      %v594 = vadd.f32 %v564, 1.0
      %v595 = vadd.f32 %v566, 1.0
      %v596 = vadd.f32 %v568, 1.0
      %v597 = vadd.f32 %v570, 1.0
      %v598 = vadd.f32 %v572, 1.0
      %v599 = vadd.f32 %v574, 1.0
      %v600 = vadd.f32 %v576, 1.0
      %v601 = vadd.f32 %v578, 1.0
      %v602 = vadd.f32 %v580, 1.0
      %v603 = vadd.f32 %v582, 1.0
      %v604 = vadd.f32 %v584, 1.0
      %v605 = vadd.f32 %v586, 1.0
      %v606 = vadd.f32 %v588, 1.0
      %v607 = vadd.f32 %v590, 1.0
      %v608 = vadd.f32 %v592, 1.0
      %v609 = vrcp.pop %v593
      %v610 = vmul.f32 1.0, %v609
      %v611 = vrcp.pop %v594
      %v612 = vmul.f32 1.0, %v611
      %v613 = vrcp.pop %v595
      %v614 = vmul.f32 1.0, %v613
      %v615 = vrcp.pop %v596
      %v616 = vmul.f32 1.0, %v615
      %v617 = vrcp.pop %v597
      %v618 = vmul.f32 1.0, %v617
      %v619 = vrcp.pop %v598
      %v620 = vmul.f32 1.0, %v619
      %v621 = vrcp.pop %v599
      %v622 = vmul.f32 1.0, %v621
      %v623 = vrcp.pop %v600
      %v624 = vmul.f32 1.0, %v623
      %v625 = vrcp.pop %v601
      %v626 = vmul.f32 1.0, %v625
      %v627 = vrcp.pop %v602
      %v628 = vmul.f32 1.0, %v627
      %v629 = vrcp.pop %v603
      %v630 = vmul.f32 1.0, %v629
      %v631 = vrcp.pop %v604
      %v632 = vmul.f32 1.0, %v631
      %v633 = vrcp.pop %v605
      %v634 = vmul.f32 1.0, %v633
      %v635 = vrcp.pop %v606
      %v636 = vmul.f32 1.0, %v635
      %v637 = vrcp.pop %v607
      %v638 = vmul.f32 1.0, %v637
      %v639 = vrcp.pop %v608
      %v640 = vmul.f32 1.0, %v639
      %v641 = vmul.f32 %v529, %v610
      %v642 = vmul.f32 %v530, %v612
      %v643 = vmul.f32 %v531, %v614
      %v644 = vmul.f32 %v532, %v616
      %v645 = vmul.f32 %v533, %v618
      %v646 = vmul.f32 %v534, %v620
      %v647 = vmul.f32 %v535, %v622
      %v648 = vmul.f32 %v536, %v624
      %v649 = vmul.f32 %v537, %v626
      %v650 = vmul.f32 %v538, %v628
      %v651 = vmul.f32 %v539, %v630
      %v652 = vmul.f32 %v540, %v632
      %v653 = vmul.f32 %v541, %v634
      %v654 = vmul.f32 %v542, %v636
      %v655 = vmul.f32 %v543, %v638
      %v656 = vmul.f32 %v544, %v640
      %v657 = vld [vmem:[%s426] sm:$0xff]
      %v658 = vld [vmem:[%s426 + $0x8] sm:$0xff]
      %v659 = vmul.f32 %v657, %v505
      %v660 = vmul.f32 %v658, %v505
      %v661 = vadd.f32 %v659, %v527
      %v662 = vadd.f32 %v660, %v527
      %v663 = vxor.u32 %v661, 2147483648
      %v664 = vxor.u32 %v662, 2147483648
      %v665 = vmul.f32 %v663, 1.442695
      %v666 = vpow.pop %v665
      %v667 = vmul.f32 %v664, 1.442695
      %v668 = vpow.pop %v667
      %v669 = vadd.f32 %v666, 1.0
      %v670 = vadd.f32 %v668, 1.0
      %v671 = vrcp.pop %v669
      %v672 = vmul.f32 1.0, %v671
      %v673 = vrcp.pop %v670
      %v674 = vmul.f32 1.0, %v673
      %v675 = vmul.f32 %v661, %v672
      %v676 = vmul.f32 %v662, %v674
      %v677 = vld [vmem:[%s435] sm:$0xff]
      %v678 = vld [vmem:[%s435 + $0x8] sm:$0xff]
      %v679 = vmul.f32 %v677, %v505
      %v680 = vmul.f32 %v678, %v505
      %v681 = vadd.f32 %v679, %v527
      %v682 = vadd.f32 %v680, %v527
      %v683 = vxor.u32 %v681, 2147483648
      %v684 = vxor.u32 %v682, 2147483648
      %v685 = vmul.f32 %v683, 1.442695
      %v686 = vpow.pop %v685
      %v687 = vmul.f32 %v684, 1.442695
      %v688 = vpow.pop %v687
      %v689 = vadd.f32 %v686, 1.0
      %v690 = vadd.f32 %v688, 1.0
      %v691 = vrcp.pop %v689
      %v692 = vmul.f32 1.0, %v691
      %v693 = vrcp.pop %v690
      %v694 = vmul.f32 1.0, %v693
      %v695 = vmul.f32 %v681, %v692
      %v696 = vmul.f32 %v682, %v694
      %p697 = scmp.gt.s32.totalorder %s25, 0
      %s698 = scalar_select %p697, 1, 0
      %s699 = scvt.s32.f32 %s698
      %v700 = vstv %s699
      %v701 = vmul.f32 %v675, %v700
      %v702 = vmul.f32 %v676, %v700
      %p703 = scmp.lt.s32.totalorder %s25, 1
      %s704 = scalar_select %p703, 1, 0
      %s705 = scvt.s32.f32 %s704
      %v706 = vstv %s705
      %v707 = vmul.f32 %v695, %v706
      %v708 = vmul.f32 %v696, %v706
      %s709 = scalar_lea.vmem [#allocation2], 24
      %vm710 = vcmask 31744
      %711 = vst.msk [vmem:[%s709 + $0x1] sm:$0xff] %vm710, %v641
      %712 = vst.msk [vmem:[%s709 + $0x9] sm:$0xff] %vm710, %v642
      %713 = vst.msk [vmem:[%s709 + $0x19] sm:$0xff] %vm710, %v643
      %714 = vst.msk [vmem:[%s709 + $0x21] sm:$0xff] %vm710, %v644
      %715 = vst.msk [vmem:[%s709 + $0x31] sm:$0xff] %vm710, %v645
      %716 = vst.msk [vmem:[%s709 + $0x39] sm:$0xff] %vm710, %v646
      %717 = vst.msk [vmem:[%s709 + $0x49] sm:$0xff] %vm710, %v647
      %718 = vst.msk [vmem:[%s709 + $0x51] sm:$0xff] %vm710, %v648
      %719 = vst.msk [vmem:[%s709 + $0x61] sm:$0xff] %vm710, %v649
      %720 = vst.msk [vmem:[%s709 + $0x69] sm:$0xff] %vm710, %v650
      %721 = vst.msk [vmem:[%s709 + $0x79] sm:$0xff] %vm710, %v651
      %722 = vst.msk [vmem:[%s709 + $0x81] sm:$0xff] %vm710, %v652
      %723 = vst.msk [vmem:[%s709 + $0x91] sm:$0xff] %vm710, %v653
      %724 = vst.msk [vmem:[%s709 + $0x99] sm:$0xff] %vm710, %v654
      %725 = vst.msk [vmem:[%s709 + $0xa9] sm:$0xff] %vm710, %v655
      %726 = vst.msk [vmem:[%s709 + $0xb1] sm:$0xff] %vm710, %v656
      %727 = vst.msk [vmem:[#allocation2 + $0x1] sm:$0xff] %vm710, %v701
      %728 = vst.msk [vmem:[#allocation2 + $0x9] sm:$0xff] %vm710, %v702
      %s729 = scalar_lea.vmem [#allocation2], 216
      %730 = vst.msk [vmem:[%s729 + $0x1] sm:$0xff] %vm710, %v707
      %731 = vst.msk [vmem:[%s729 + $0x9] sm:$0xff] %vm710, %v708
      %v732 = vld [vmem:[#allocation2] sm:$0xff]
      %v733 = vld [vmem:[#allocation2 + $0x8] sm:$0xff]
      %v734 = vld [vmem:[#allocation2 + $0x10] sm:$0x3]
      %v735 = vld [vmem:[#allocation2 + $0x18] sm:$0xff]
      %v736 = vld [vmem:[#allocation2 + $0x20] sm:$0xff]
      %v737 = vld [vmem:[#allocation2 + $0x28] sm:$0x3]
      %v738 = vld [vmem:[#allocation2 + $0x30] sm:$0xff]
      %v739 = vld [vmem:[#allocation2 + $0x38] sm:$0xff]
      %v740 = vld [vmem:[#allocation2 + $0x40] sm:$0x3]
      %v741 = vld [vmem:[#allocation2 + $0x48] sm:$0xff]
      %v742 = vld [vmem:[#allocation2 + $0x50] sm:$0xff]
      %v743 = vld [vmem:[#allocation2 + $0x58] sm:$0x3]
      %v744 = vld [vmem:[#allocation2 + $0x60] sm:$0xff]
      %v745 = vld [vmem:[#allocation2 + $0x68] sm:$0xff]
      %v746 = vld [vmem:[#allocation2 + $0x70] sm:$0x3]
      %v747 = vld [vmem:[#allocation2 + $0x78] sm:$0xff]
      %v748 = vld [vmem:[#allocation2 + $0x80] sm:$0xff]
      %v749 = vld [vmem:[#allocation2 + $0x88] sm:$0x3]
      %v750 = vld [vmem:[#allocation2 + $0x90] sm:$0xff]
      %v751 = vld [vmem:[#allocation2 + $0x98] sm:$0xff]
      %v752 = vld [vmem:[#allocation2 + $0xa0] sm:$0x3]
      %v753 = vld [vmem:[#allocation2 + $0xa8] sm:$0xff]
      %v754 = vld [vmem:[#allocation2 + $0xb0] sm:$0xff]
      %v755 = vld [vmem:[#allocation2 + $0xb8] sm:$0x3]
      %vm780 = vcmask 1046528
      %v781 = vrot.slane %v732, 1
      %v782 = vrot.slane %v733, 1
      %v783 = vsel %vm780, %v781, %v782
      %v784 = vrot.slane %v734, 1
      %v785 = vsel %vm780, %v782, %v784
      %v786 = vrot.slane %v735, 1
      %v787 = vrot.slane %v736, 1
      %v788 = vsel %vm780, %v786, %v787
      %v789 = vrot.slane %v737, 1
      %v790 = vsel %vm780, %v787, %v789
      %v791 = vrot.slane %v738, 1
      %v792 = vrot.slane %v739, 1
      %v793 = vsel %vm780, %v791, %v792
      %v794 = vrot.slane %v740, 1
      %v795 = vsel %vm780, %v792, %v794
      %v796 = vrot.slane %v741, 1
      %v797 = vrot.slane %v742, 1
      %v798 = vsel %vm780, %v796, %v797
      %v799 = vrot.slane %v743, 1
      %v800 = vsel %vm780, %v797, %v799
      %v801 = vrot.slane %v744, 1
      %v802 = vrot.slane %v745, 1
      %v803 = vsel %vm780, %v801, %v802
      %v804 = vrot.slane %v746, 1
      %v805 = vsel %vm780, %v802, %v804
      %v806 = vrot.slane %v747, 1
      %v807 = vrot.slane %v748, 1
      %v808 = vsel %vm780, %v806, %v807
      %v809 = vrot.slane %v749, 1
      %v810 = vsel %vm780, %v807, %v809
      %v811 = vrot.slane %v750, 1
      %v812 = vrot.slane %v751, 1
      %v813 = vsel %vm780, %v811, %v812
      %v814 = vrot.slane %v752, 1
      %v815 = vsel %vm780, %v812, %v814
      %v816 = vrot.slane %v753, 1
      %v817 = vrot.slane %v754, 1
      %v818 = vsel %vm780, %v816, %v817
      %v819 = vrot.slane %v755, 1
      %v820 = vsel %vm780, %v817, %v819
      %821 = vrot.lane.b32.xlu0 %v783, 4
      %v822 = vpop.permute.xlu0 %821
      %823 = vrot.lane.b32.xlu0 %v785, 4
      %v824 = vpop.permute.xlu0 %823
      %825 = vrot.lane.b32.xlu0 %v788, 4
      %v826 = vpop.permute.xlu0 %825
      %827 = vrot.lane.b32.xlu0 %v790, 4
      %v828 = vpop.permute.xlu0 %827
      %829 = vrot.lane.b32.xlu0 %v793, 4
      %v830 = vpop.permute.xlu0 %829
      %831 = vrot.lane.b32.xlu0 %v795, 4
      %v832 = vpop.permute.xlu0 %831
      %833 = vrot.lane.b32.xlu0 %v798, 4
      %v834 = vpop.permute.xlu0 %833
      %835 = vrot.lane.b32.xlu0 %v800, 4
      %v836 = vpop.permute.xlu0 %835
      %837 = vrot.lane.b32.xlu0 %v803, 4
      %v838 = vpop.permute.xlu0 %837
      %839 = vrot.lane.b32.xlu0 %v805, 4
      %v840 = vpop.permute.xlu0 %839
      %841 = vrot.lane.b32.xlu0 %v808, 4
      %v842 = vpop.permute.xlu0 %841
      %843 = vrot.lane.b32.xlu0 %v810, 4
      %v844 = vpop.permute.xlu0 %843
      %845 = vrot.lane.b32.xlu0 %v813, 4
      %v846 = vpop.permute.xlu0 %845
      %847 = vrot.lane.b32.xlu0 %v815, 4
      %v848 = vpop.permute.xlu0 %847
      %849 = vrot.lane.b32.xlu0 %v818, 4
      %v850 = vpop.permute.xlu0 %849
      %851 = vrot.lane.b32.xlu0 %v820, 4
      %v852 = vpop.permute.xlu0 %851
      %vm869 = vcmask 1045504
      %v870 = vrot.slane %v732, 2
      %v871 = vrot.slane %v733, 2
      %v872 = vsel %vm869, %v870, %v871
      %v873 = vrot.slane %v734, 2
      %v874 = vsel %vm869, %v871, %v873
      %v875 = vrot.slane %v735, 2
      %v876 = vrot.slane %v736, 2
      %v877 = vsel %vm869, %v875, %v876
      %v878 = vrot.slane %v737, 2
      %v879 = vsel %vm869, %v876, %v878
      %v880 = vrot.slane %v738, 2
      %v881 = vrot.slane %v739, 2
      %v882 = vsel %vm869, %v880, %v881
      %v883 = vrot.slane %v740, 2
      %v884 = vsel %vm869, %v881, %v883
      %v885 = vrot.slane %v741, 2
      %v886 = vrot.slane %v742, 2
      %v887 = vsel %vm869, %v885, %v886
      %v888 = vrot.slane %v743, 2
      %v889 = vsel %vm869, %v886, %v888
      %v890 = vrot.slane %v744, 2
      %v891 = vrot.slane %v745, 2
      %v892 = vsel %vm869, %v890, %v891
      %v893 = vrot.slane %v746, 2
      %v894 = vsel %vm869, %v891, %v893
      %v895 = vrot.slane %v747, 2
      %v896 = vrot.slane %v748, 2
      %v897 = vsel %vm869, %v895, %v896
      %v898 = vrot.slane %v749, 2
      %v899 = vsel %vm869, %v896, %v898
      %v900 = vrot.slane %v750, 2
      %v901 = vrot.slane %v751, 2
      %v902 = vsel %vm869, %v900, %v901
      %v903 = vrot.slane %v752, 2
      %v904 = vsel %vm869, %v901, %v903
      %v905 = vrot.slane %v753, 2
      %v906 = vrot.slane %v754, 2
      %v907 = vsel %vm869, %v905, %v906
      %v908 = vrot.slane %v755, 2
      %v909 = vsel %vm869, %v906, %v908
      %910 = vrot.lane.b32.xlu0 %v872, 8
      %v911 = vpop.permute.xlu0 %910
      %912 = vrot.lane.b32.xlu0 %v874, 8
      %v913 = vpop.permute.xlu0 %912
      %914 = vrot.lane.b32.xlu0 %v877, 8
      %v915 = vpop.permute.xlu0 %914
      %916 = vrot.lane.b32.xlu0 %v879, 8
      %v917 = vpop.permute.xlu0 %916
      %918 = vrot.lane.b32.xlu0 %v882, 8
      %v919 = vpop.permute.xlu0 %918
      %920 = vrot.lane.b32.xlu0 %v884, 8
      %v921 = vpop.permute.xlu0 %920
      %922 = vrot.lane.b32.xlu0 %v887, 8
      %v923 = vpop.permute.xlu0 %922
      %924 = vrot.lane.b32.xlu0 %v889, 8
      %v925 = vpop.permute.xlu0 %924
      %926 = vrot.lane.b32.xlu0 %v892, 8
      %v927 = vpop.permute.xlu0 %926
      %928 = vrot.lane.b32.xlu0 %v894, 8
      %v929 = vpop.permute.xlu0 %928
      %930 = vrot.lane.b32.xlu0 %v897, 8
      %v931 = vpop.permute.xlu0 %930
      %932 = vrot.lane.b32.xlu0 %v899, 8
      %v933 = vpop.permute.xlu0 %932
      %934 = vrot.lane.b32.xlu0 %v902, 8
      %v935 = vpop.permute.xlu0 %934
      %936 = vrot.lane.b32.xlu0 %v904, 8
      %v937 = vpop.permute.xlu0 %936
      %938 = vrot.lane.b32.xlu0 %v907, 8
      %v939 = vpop.permute.xlu0 %938
      %940 = vrot.lane.b32.xlu0 %v909, 8
      %v941 = vpop.permute.xlu0 %940
      %v958 = vsel %vm710, %v732, %v822
      %v959 = vsel %vm710, %v733, %v824
      %v960 = vsel %vm710, %v735, %v826
      %v961 = vsel %vm710, %v736, %v828
      %v962 = vsel %vm710, %v738, %v830
      %v963 = vsel %vm710, %v739, %v832
      %v964 = vsel %vm710, %v741, %v834
      %v965 = vsel %vm710, %v742, %v836
      %v966 = vsel %vm710, %v744, %v838
      %v967 = vsel %vm710, %v745, %v840
      %v968 = vsel %vm710, %v747, %v842
      %v969 = vsel %vm710, %v748, %v844
      %v970 = vsel %vm710, %v750, %v846
      %v971 = vsel %vm710, %v751, %v848
      %v972 = vsel %vm710, %v753, %v850
      %v973 = vsel %vm710, %v754, %v852
      %vm974 = vcmask 64512
      %v975 = vsel %vm974, %v958, %v911
      %v976 = vsel %vm974, %v959, %v913
      %v977 = vsel %vm974, %v960, %v915
      %v978 = vsel %vm974, %v961, %v917
      %v979 = vsel %vm974, %v962, %v919
      %v980 = vsel %vm974, %v963, %v921
      %v981 = vsel %vm974, %v964, %v923
      %v982 = vsel %vm974, %v965, %v925
      %v983 = vsel %vm974, %v966, %v927
      %v984 = vsel %vm974, %v967, %v929
      %v985 = vsel %vm974, %v968, %v931
      %v986 = vsel %vm974, %v969, %v933
      %v987 = vsel %vm974, %v970, %v935
      %v988 = vsel %vm974, %v971, %v937
      %v989 = vsel %vm974, %v972, %v939
      %v990 = vsel %vm974, %v973, %v941
      %v991 = vpack.c.bf16 %v976, %v975
      %v992 = vpack.c.bf16 %v978, %v977
      %v993 = vpack.c.bf16 %v980, %v979
      %v994 = vpack.c.bf16 %v982, %v981
      %v995 = vpack.c.bf16 %v984, %v983
      %v996 = vpack.c.bf16 %v986, %v985
      %v997 = vpack.c.bf16 %v988, %v987
      %v998 = vpack.c.bf16 %v990, %v989
      %v999 = vld [vmem:[%s5] sm:$0xf]
      %v1000 = vld [vmem:[%s5 + $0x4] sm:$0x3]
      %v1001 = vld [vmem:[%s709] sm:$0xff]
      %v1002 = vld [vmem:[%s709 + $0x8] sm:$0xff]
      %v1003 = vld [vmem:[%s709 + $0x10] sm:$0x3]
      %v1004 = vld [vmem:[%s709 + $0x18] sm:$0xff]
      %v1005 = vld [vmem:[%s709 + $0x20] sm:$0xff]
      %v1006 = vld [vmem:[%s709 + $0x28] sm:$0x3]
      %v1007 = vld [vmem:[%s709 + $0x30] sm:$0xff]
      %v1008 = vld [vmem:[%s709 + $0x38] sm:$0xff]
      %v1009 = vld [vmem:[%s709 + $0x40] sm:$0x3]
      %v1010 = vld [vmem:[%s709 + $0x48] sm:$0xff]
      %v1011 = vld [vmem:[%s709 + $0x50] sm:$0xff]
      %v1012 = vld [vmem:[%s709 + $0x58] sm:$0x3]
      %v1013 = vld [vmem:[%s709 + $0x60] sm:$0xff]
      %v1014 = vld [vmem:[%s709 + $0x68] sm:$0xff]
      %v1015 = vld [vmem:[%s709 + $0x70] sm:$0x3]
      %v1016 = vld [vmem:[%s709 + $0x78] sm:$0xff]
      %v1017 = vld [vmem:[%s709 + $0x80] sm:$0xff]
      %v1018 = vld [vmem:[%s709 + $0x88] sm:$0x3]
      %v1019 = vld [vmem:[%s709 + $0x90] sm:$0xff]
      %v1020 = vld [vmem:[%s709 + $0x98] sm:$0xff]
      %v1021 = vld [vmem:[%s709 + $0xa0] sm:$0x3]
      %v1022 = vld [vmem:[%s709 + $0xa8] sm:$0xff]
      %v1023 = vld [vmem:[%s709 + $0xb0] sm:$0xff]
      %v1024 = vld [vmem:[%s709 + $0xb8] sm:$0x3]
      %v1049 = vrot.slane %v1001, 1
      %v1050 = vrot.slane %v1002, 1
      %v1051 = vsel %vm780, %v1049, %v1050
      %v1052 = vrot.slane %v1003, 1
      %v1053 = vsel %vm780, %v1050, %v1052
      %v1054 = vrot.slane %v1004, 1
      %v1055 = vrot.slane %v1005, 1
      %v1056 = vsel %vm780, %v1054, %v1055
      %v1057 = vrot.slane %v1006, 1
      %v1058 = vsel %vm780, %v1055, %v1057
      %v1059 = vrot.slane %v1007, 1
      %v1060 = vrot.slane %v1008, 1
      %v1061 = vsel %vm780, %v1059, %v1060
      %v1062 = vrot.slane %v1009, 1
      %v1063 = vsel %vm780, %v1060, %v1062
      %v1064 = vrot.slane %v1010, 1
      %v1065 = vrot.slane %v1011, 1
      %v1066 = vsel %vm780, %v1064, %v1065
      %v1067 = vrot.slane %v1012, 1
      %v1068 = vsel %vm780, %v1065, %v1067
      %v1069 = vrot.slane %v1013, 1
      %v1070 = vrot.slane %v1014, 1
      %v1071 = vsel %vm780, %v1069, %v1070
      %v1072 = vrot.slane %v1015, 1
      %v1073 = vsel %vm780, %v1070, %v1072
      %v1074 = vrot.slane %v1016, 1
      %v1075 = vrot.slane %v1017, 1
      %v1076 = vsel %vm780, %v1074, %v1075
      %v1077 = vrot.slane %v1018, 1
      %v1078 = vsel %vm780, %v1075, %v1077
      %v1079 = vrot.slane %v1019, 1
      %v1080 = vrot.slane %v1020, 1
      %v1081 = vsel %vm780, %v1079, %v1080
      %v1082 = vrot.slane %v1021, 1
      %v1083 = vsel %vm780, %v1080, %v1082
      %v1084 = vrot.slane %v1022, 1
      %v1085 = vrot.slane %v1023, 1
      %v1086 = vsel %vm780, %v1084, %v1085
      %v1087 = vrot.slane %v1024, 1
      %v1088 = vsel %vm780, %v1085, %v1087
      %1089 = vrot.lane.b32.xlu0 %v1051, 4
      %v1090 = vpop.permute.xlu0 %1089
      %1091 = vrot.lane.b32.xlu0 %v1053, 4
      %v1092 = vpop.permute.xlu0 %1091
      %1093 = vrot.lane.b32.xlu0 %v1056, 4
      %v1094 = vpop.permute.xlu0 %1093
      %1095 = vrot.lane.b32.xlu0 %v1058, 4
      %v1096 = vpop.permute.xlu0 %1095
      %1097 = vrot.lane.b32.xlu0 %v1061, 4
      %v1098 = vpop.permute.xlu0 %1097
      %1099 = vrot.lane.b32.xlu0 %v1063, 4
      %v1100 = vpop.permute.xlu0 %1099
      %1101 = vrot.lane.b32.xlu0 %v1066, 4
      %v1102 = vpop.permute.xlu0 %1101
      %1103 = vrot.lane.b32.xlu0 %v1068, 4
      %v1104 = vpop.permute.xlu0 %1103
      %1105 = vrot.lane.b32.xlu0 %v1071, 4
      %v1106 = vpop.permute.xlu0 %1105
      %1107 = vrot.lane.b32.xlu0 %v1073, 4
      %v1108 = vpop.permute.xlu0 %1107
      %1109 = vrot.lane.b32.xlu0 %v1076, 4
      %v1110 = vpop.permute.xlu0 %1109
      %1111 = vrot.lane.b32.xlu0 %v1078, 4
      %v1112 = vpop.permute.xlu0 %1111
      %1113 = vrot.lane.b32.xlu0 %v1081, 4
      %v1114 = vpop.permute.xlu0 %1113
      %1115 = vrot.lane.b32.xlu0 %v1083, 4
      %v1116 = vpop.permute.xlu0 %1115
      %1117 = vrot.lane.b32.xlu0 %v1086, 4
      %v1118 = vpop.permute.xlu0 %1117
      %1119 = vrot.lane.b32.xlu0 %v1088, 4
      %v1120 = vpop.permute.xlu0 %1119
      %v1137 = vrot.slane %v1001, 2
      %v1138 = vrot.slane %v1002, 2
      %v1139 = vsel %vm869, %v1137, %v1138
      %v1140 = vrot.slane %v1003, 2
      %v1141 = vsel %vm869, %v1138, %v1140
      %v1142 = vrot.slane %v1004, 2
      %v1143 = vrot.slane %v1005, 2
      %v1144 = vsel %vm869, %v1142, %v1143
      %v1145 = vrot.slane %v1006, 2
      %v1146 = vsel %vm869, %v1143, %v1145
      %v1147 = vrot.slane %v1007, 2
      %v1148 = vrot.slane %v1008, 2
      %v1149 = vsel %vm869, %v1147, %v1148
      %v1150 = vrot.slane %v1009, 2
      %v1151 = vsel %vm869, %v1148, %v1150
      %v1152 = vrot.slane %v1010, 2
      %v1153 = vrot.slane %v1011, 2
      %v1154 = vsel %vm869, %v1152, %v1153
      %v1155 = vrot.slane %v1012, 2
      %v1156 = vsel %vm869, %v1153, %v1155
      %v1157 = vrot.slane %v1013, 2
      %v1158 = vrot.slane %v1014, 2
      %v1159 = vsel %vm869, %v1157, %v1158
      %v1160 = vrot.slane %v1015, 2
      %v1161 = vsel %vm869, %v1158, %v1160
      %v1162 = vrot.slane %v1016, 2
      %v1163 = vrot.slane %v1017, 2
      %v1164 = vsel %vm869, %v1162, %v1163
      %v1165 = vrot.slane %v1018, 2
      %v1166 = vsel %vm869, %v1163, %v1165
      %v1167 = vrot.slane %v1019, 2
      %v1168 = vrot.slane %v1020, 2
      %v1169 = vsel %vm869, %v1167, %v1168
      %v1170 = vrot.slane %v1021, 2
      %v1171 = vsel %vm869, %v1168, %v1170
      %v1172 = vrot.slane %v1022, 2
      %v1173 = vrot.slane %v1023, 2
      %v1174 = vsel %vm869, %v1172, %v1173
      %v1175 = vrot.slane %v1024, 2
      %v1176 = vsel %vm869, %v1173, %v1175
      %1177 = vrot.lane.b32.xlu0 %v1139, 8
      %v1178 = vpop.permute.xlu0 %1177
      %1179 = vrot.lane.b32.xlu0 %v1141, 8
      %v1180 = vpop.permute.xlu0 %1179
      %1181 = vrot.lane.b32.xlu0 %v1144, 8
      %v1182 = vpop.permute.xlu0 %1181
      %1183 = vrot.lane.b32.xlu0 %v1146, 8
      %v1184 = vpop.permute.xlu0 %1183
      %1185 = vrot.lane.b32.xlu0 %v1149, 8
      %v1186 = vpop.permute.xlu0 %1185
      %1187 = vrot.lane.b32.xlu0 %v1151, 8
      %v1188 = vpop.permute.xlu0 %1187
      %1189 = vrot.lane.b32.xlu0 %v1154, 8
      %v1190 = vpop.permute.xlu0 %1189
      %1191 = vrot.lane.b32.xlu0 %v1156, 8
      %v1192 = vpop.permute.xlu0 %1191
      %1193 = vrot.lane.b32.xlu0 %v1159, 8
      %v1194 = vpop.permute.xlu0 %1193
      %1195 = vrot.lane.b32.xlu0 %v1161, 8
      %v1196 = vpop.permute.xlu0 %1195
      %1197 = vrot.lane.b32.xlu0 %v1164, 8
      %v1198 = vpop.permute.xlu0 %1197
      %1199 = vrot.lane.b32.xlu0 %v1166, 8
      %v1200 = vpop.permute.xlu0 %1199
      %1201 = vrot.lane.b32.xlu0 %v1169, 8
      %v1202 = vpop.permute.xlu0 %1201
      %1203 = vrot.lane.b32.xlu0 %v1171, 8
      %v1204 = vpop.permute.xlu0 %1203
      %1205 = vrot.lane.b32.xlu0 %v1174, 8
      %v1206 = vpop.permute.xlu0 %1205
      %1207 = vrot.lane.b32.xlu0 %v1176, 8
      %v1208 = vpop.permute.xlu0 %1207
      %v1225 = vsel %vm710, %v1001, %v1090
      %v1226 = vsel %vm710, %v1002, %v1092
      %v1227 = vsel %vm710, %v1004, %v1094
      %v1228 = vsel %vm710, %v1005, %v1096
      %v1229 = vsel %vm710, %v1007, %v1098
      %v1230 = vsel %vm710, %v1008, %v1100
      %v1231 = vsel %vm710, %v1010, %v1102
      %v1232 = vsel %vm710, %v1011, %v1104
      %v1233 = vsel %vm710, %v1013, %v1106
      %v1234 = vsel %vm710, %v1014, %v1108
      %v1235 = vsel %vm710, %v1016, %v1110
      %v1236 = vsel %vm710, %v1017, %v1112
      %v1237 = vsel %vm710, %v1019, %v1114
      %v1238 = vsel %vm710, %v1020, %v1116
      %v1239 = vsel %vm710, %v1022, %v1118
      %v1240 = vsel %vm710, %v1023, %v1120
      %v1241 = vsel %vm974, %v1225, %v1178
      %v1242 = vsel %vm974, %v1226, %v1180
      %v1243 = vsel %vm974, %v1227, %v1182
      %v1244 = vsel %vm974, %v1228, %v1184
      %v1245 = vsel %vm974, %v1229, %v1186
      %v1246 = vsel %vm974, %v1230, %v1188
      %v1247 = vsel %vm974, %v1231, %v1190
      %v1248 = vsel %vm974, %v1232, %v1192
      %v1249 = vsel %vm974, %v1233, %v1194
      %v1250 = vsel %vm974, %v1234, %v1196
      %v1251 = vsel %vm974, %v1235, %v1198
      %v1252 = vsel %vm974, %v1236, %v1200
      %v1253 = vsel %vm974, %v1237, %v1202
      %v1254 = vsel %vm974, %v1238, %v1204
      %v1255 = vsel %vm974, %v1239, %v1206
      %v1256 = vsel %vm974, %v1240, %v1208
      %v1257 = vpack.c.bf16 %v1242, %v1241
      %v1258 = vpack.c.bf16 %v1244, %v1243
      %v1259 = vpack.c.bf16 %v1246, %v1245
      %v1260 = vpack.c.bf16 %v1248, %v1247
      %v1261 = vpack.c.bf16 %v1250, %v1249
      %v1262 = vpack.c.bf16 %v1252, %v1251
      %v1263 = vpack.c.bf16 %v1254, %v1253
      %v1264 = vpack.c.bf16 %v1256, %v1255
      %s1265 = scalar_lea.vmem %s5, 8
      %v1266 = vld [vmem:[%s1265] sm:$0xf]
      %v1267 = vld [vmem:[%s1265 + $0x4] sm:$0x3]
      %v1270 = vunpack.c.l.b16 %v1266
      %v1271 = vunpack.c.l.b16 %v1267
      %v1272 = vpack.c.b16 %v1271, %v1270
      %vm1273 = vcmask 97280
      %v1275 = vsel %vm1273, %v1257, 0
      %v1278 = vsel %vm1273, %v1258, 0
      %v1281 = vsel %vm1273, %v1259, 0
      %v1284 = vsel %vm1273, %v1260, 0
      %v1287 = vsel %vm1273, %v1261, 0
      %v1290 = vsel %vm1273, %v1262, 0
      %v1293 = vsel %vm1273, %v1263, 0
      %v1296 = vsel %vm1273, %v1264, 0
      %v1299 = vsel %vm869, %v1272, 0
      %1301 = vmatprep.subr.bf16.mxu0 0
      %1302 = vmatpush1.bf16.msra.mxu0 %v1299
      %1303 = vmatprep.subr.bf16.mxu0 0
      %1304 = vmatpush1.bf16.msra.mxu0 0
      %1305 = vmatprep.subr.bf16.mxu0 0
      %1306 = vmatpush1.bf16.msra.mxu0 0
      %1307 = vmatprep.subr.bf16.mxu0 0
      %1308 = vmatpush1.bf16.msra.mxu0 0
      %1309 = vmatprep.subr.bf16.mxu0 0
      %1310 = vmatpush1.bf16.msra.mxu0 0
      %1311 = vmatprep.subr.bf16.mxu0 0
      %1312 = vmatpush1.bf16.msra.mxu0 0
      %1313 = vmatprep.subr.bf16.mxu0 0
      %1314 = vmatpush1.bf16.msra.mxu0 0
      %1315 = vmatprep.subr.bf16.mxu0 0
      %1316 = vmatpush1.bf16.msra.mxu0 0
      %1317 = vmatprep.subr.bf16.mxu0 0
      %1318 = vmatpush1.bf16.msra.mxu0 0
      %1319 = vmatprep.subr.bf16.mxu0 0
      %1320 = vmatpush1.bf16.msra.mxu0 0
      %1321 = vmatprep.subr.bf16.mxu0 0
      %1322 = vmatpush1.bf16.msra.mxu0 0
      %1323 = vmatprep.subr.bf16.mxu0 0
      %1324 = vmatpush1.bf16.msra.mxu0 0
      %1325 = vmatprep.subr.bf16.mxu0 0
      %1326 = vmatpush1.bf16.msra.mxu0 0
      %1327 = vmatprep.subr.bf16.mxu0 0
      %1328 = vmatpush1.bf16.msra.mxu0 0
      %1329 = vmatprep.subr.bf16.mxu0 0
      %1330 = vmatpush1.bf16.msra.mxu0 0
      %1331 = vmatprep.subr.bf16.mxu0 0
      %1332 = vmatpush1.bf16.msra.mxu0 0
      %1333 = vmatprep.mubr.bf16.mxu0 0
      %1334 = vmatmul.mubr.bf16.gmra.mrb[0].mxu0 %v1275
      %v1335 = vpop.f32.mrb[0].mxu0
      %v1336 = vadd.f32 0.0, %v1335
      %v1337 = vpop.f32.mrb[0].mxu0
      %v1338 = vpop.f32.mrb[0].mxu0
      %v1339 = vadd.f32 0.0, %v1338
      %v1340 = vpop.f32.mrb[0].mxu0
      %1341 = vmatprep.mubr.bf16.mxu0 0
      %1342 = vmatmul.mubr.bf16.gmra.mrb[0].mxu0 %v1278
      %v1343 = vpop.f32.mrb[0].mxu0
      %v1344 = vadd.f32 0.0, %v1343
      %v1345 = vpop.f32.mrb[0].mxu0
      %v1346 = vpop.f32.mrb[0].mxu0
      %v1347 = vadd.f32 0.0, %v1346
      %v1348 = vpop.f32.mrb[0].mxu0
      %1349 = vmatprep.mubr.bf16.mxu0 0
      %1350 = vmatmul.mubr.bf16.gmra.mrb[0].mxu0 %v1281
      %v1351 = vpop.f32.mrb[0].mxu0
      %v1352 = vadd.f32 0.0, %v1351
      %v1353 = vpop.f32.mrb[0].mxu0
      %v1354 = vpop.f32.mrb[0].mxu0
      %v1355 = vadd.f32 0.0, %v1354
      %v1356 = vpop.f32.mrb[0].mxu0
      %1357 = vmatprep.mubr.bf16.mxu0 0
      %1358 = vmatmul.mubr.bf16.gmra.mrb[0].mxu0 %v1284
      %v1359 = vpop.f32.mrb[0].mxu0
      %v1360 = vadd.f32 0.0, %v1359
      %v1361 = vpop.f32.mrb[0].mxu0
      %v1362 = vpop.f32.mrb[0].mxu0
      %v1363 = vadd.f32 0.0, %v1362
      %v1364 = vpop.f32.mrb[0].mxu0
      %1365 = vmatprep.mubr.bf16.mxu0 0
      %1366 = vmatmul.mubr.bf16.gmra.mrb[0].mxu0 %v1287
      %v1367 = vpop.f32.mrb[0].mxu0
      %v1368 = vadd.f32 0.0, %v1367
      %v1369 = vpop.f32.mrb[0].mxu0
      %v1370 = vpop.f32.mrb[0].mxu0
      %v1371 = vadd.f32 0.0, %v1370
      %v1372 = vpop.f32.mrb[0].mxu0
      %1373 = vmatprep.mubr.bf16.mxu0 0
      %1374 = vmatmul.mubr.bf16.gmra.mrb[0].mxu0 %v1290
      %v1375 = vpop.f32.mrb[0].mxu0
      %v1376 = vadd.f32 0.0, %v1375
      %v1377 = vpop.f32.mrb[0].mxu0
      %v1378 = vpop.f32.mrb[0].mxu0
      %v1379 = vadd.f32 0.0, %v1378
      %v1380 = vpop.f32.mrb[0].mxu0
      %1381 = vmatprep.mubr.bf16.mxu0 0
      %1382 = vmatmul.mubr.bf16.gmra.mrb[0].mxu0 %v1293
      %v1383 = vpop.f32.mrb[0].mxu0
      %v1384 = vadd.f32 0.0, %v1383
      %v1385 = vpop.f32.mrb[0].mxu0
      %v1386 = vpop.f32.mrb[0].mxu0
      %v1387 = vadd.f32 0.0, %v1386
      %v1388 = vpop.f32.mrb[0].mxu0
      %1389 = vmatprep.mubr.bf16.mxu0 0
      %1390 = vmatmul.mubr.bf16.gmra.mrb[0].mxu0 %v1296
      %v1391 = vpop.f32.mrb[0].mxu0
      %v1392 = vadd.f32 0.0, %v1391
      %v1393 = vpop.f32.mrb[0].mxu0
      %v1394 = vpop.f32.mrb[0].mxu0
      %v1395 = vadd.f32 0.0, %v1394
      %v1396 = vpop.f32.mrb[0].mxu0
      %1397 = vdwg.mxu0
      %v1400 = vunpack.c.l.b16 %v999
      %v1401 = vunpack.c.l.b16 %v1000
      %v1402 = vpack.c.b16 %v1401, %v1400
      %v1404 = vsel %vm1273, %v991, 0
      %v1407 = vsel %vm1273, %v992, 0
      %v1410 = vsel %vm1273, %v993, 0
      %v1413 = vsel %vm1273, %v994, 0
      %v1416 = vsel %vm1273, %v995, 0
      %v1419 = vsel %vm1273, %v996, 0
      %v1422 = vsel %vm1273, %v997, 0
      %v1425 = vsel %vm1273, %v998, 0
      %v1428 = vsel %vm869, %v1402, 0
      %1430 = vmatprep.subr.bf16.mxu0 0
      %1431 = vmatpush1.bf16.msra.mxu0 %v1428
      %1432 = vmatprep.subr.bf16.mxu0 0
      %1433 = vmatpush1.bf16.msra.mxu0 0
      %1434 = vmatprep.subr.bf16.mxu0 0
      %1435 = vmatpush1.bf16.msra.mxu0 0
      %1436 = vmatprep.subr.bf16.mxu0 0
      %1437 = vmatpush1.bf16.msra.mxu0 0
      %1438 = vmatprep.subr.bf16.mxu0 0
      %1439 = vmatpush1.bf16.msra.mxu0 0
      %1440 = vmatprep.subr.bf16.mxu0 0
      %1441 = vmatpush1.bf16.msra.mxu0 0
      %1442 = vmatprep.subr.bf16.mxu0 0
      %1443 = vmatpush1.bf16.msra.mxu0 0
      %1444 = vmatprep.subr.bf16.mxu0 0
      %1445 = vmatpush1.bf16.msra.mxu0 0
      %1446 = vmatprep.subr.bf16.mxu0 0
      %1447 = vmatpush1.bf16.msra.mxu0 0
      %1448 = vmatprep.subr.bf16.mxu0 0
      %1449 = vmatpush1.bf16.msra.mxu0 0
      %1450 = vmatprep.subr.bf16.mxu0 0
      %1451 = vmatpush1.bf16.msra.mxu0 0
      %1452 = vmatprep.subr.bf16.mxu0 0
      %1453 = vmatpush1.bf16.msra.mxu0 0
      %1454 = vmatprep.subr.bf16.mxu0 0
      %1455 = vmatpush1.bf16.msra.mxu0 0
      %1456 = vmatprep.subr.bf16.mxu0 0
      %1457 = vmatpush1.bf16.msra.mxu0 0
      %1458 = vmatprep.subr.bf16.mxu0 0
      %1459 = vmatpush1.bf16.msra.mxu0 0
      %1460 = vmatprep.subr.bf16.mxu0 0
      %1461 = vmatpush1.bf16.msra.mxu0 0
      %1462 = vmatprep.mubr.bf16.mxu0 0
      %1463 = vmatmul.mubr.bf16.gmra.mrb[0].mxu0 %v1404
      %v1464 = vpop.f32.mrb[0].mxu0
      %v1465 = vadd.f32 %v1336, %v1464
      %v1466 = vpop.f32.mrb[0].mxu0
      %v1467 = vpop.f32.mrb[0].mxu0
      %v1468 = vadd.f32 %v1339, %v1467
      %v1469 = vpop.f32.mrb[0].mxu0
      %1470 = vmatprep.mubr.bf16.mxu0 0
      %1471 = vmatmul.mubr.bf16.gmra.mrb[0].mxu0 %v1407
      %v1472 = vpop.f32.mrb[0].mxu0
      %v1473 = vadd.f32 %v1344, %v1472
      %v1474 = vpop.f32.mrb[0].mxu0
      %v1475 = vpop.f32.mrb[0].mxu0
      %v1476 = vadd.f32 %v1347, %v1475
      %v1477 = vpop.f32.mrb[0].mxu0
      %1478 = vmatprep.mubr.bf16.mxu0 0
      %1479 = vmatmul.mubr.bf16.gmra.mrb[0].mxu0 %v1410
      %v1480 = vpop.f32.mrb[0].mxu0
      %v1481 = vadd.f32 %v1352, %v1480
      %v1482 = vpop.f32.mrb[0].mxu0
      %v1483 = vpop.f32.mrb[0].mxu0
      %v1484 = vadd.f32 %v1355, %v1483
      %v1485 = vpop.f32.mrb[0].mxu0
      %1486 = vmatprep.mubr.bf16.mxu0 0
      %1487 = vmatmul.mubr.bf16.gmra.mrb[0].mxu0 %v1413
      %v1488 = vpop.f32.mrb[0].mxu0
      %v1489 = vadd.f32 %v1360, %v1488
      %v1490 = vpop.f32.mrb[0].mxu0
      %v1491 = vpop.f32.mrb[0].mxu0
      %v1492 = vadd.f32 %v1363, %v1491
      %v1493 = vpop.f32.mrb[0].mxu0
      %1494 = vmatprep.mubr.bf16.mxu0 0
      %1495 = vmatmul.mubr.bf16.gmra.mrb[0].mxu0 %v1416
      %v1496 = vpop.f32.mrb[0].mxu0
      %v1497 = vadd.f32 %v1368, %v1496
      %v1498 = vpop.f32.mrb[0].mxu0
      %v1499 = vpop.f32.mrb[0].mxu0
      %v1500 = vadd.f32 %v1371, %v1499
      %v1501 = vpop.f32.mrb[0].mxu0
      %1502 = vmatprep.mubr.bf16.mxu0 0
      %1503 = vmatmul.mubr.bf16.gmra.mrb[0].mxu0 %v1419
      %v1504 = vpop.f32.mrb[0].mxu0
      %v1505 = vadd.f32 %v1376, %v1504
      %v1506 = vpop.f32.mrb[0].mxu0
      %v1507 = vpop.f32.mrb[0].mxu0
      %v1508 = vadd.f32 %v1379, %v1507
      %v1509 = vpop.f32.mrb[0].mxu0
      %1510 = vmatprep.mubr.bf16.mxu0 0
      %1511 = vmatmul.mubr.bf16.gmra.mrb[0].mxu0 %v1422
      %v1512 = vpop.f32.mrb[0].mxu0
      %v1513 = vadd.f32 %v1384, %v1512
      %v1514 = vpop.f32.mrb[0].mxu0
      %v1515 = vpop.f32.mrb[0].mxu0
      %v1516 = vadd.f32 %v1387, %v1515
      %v1517 = vpop.f32.mrb[0].mxu0
      %1518 = vmatprep.mubr.bf16.mxu0 0
      %1519 = vmatmul.mubr.bf16.gmra.mrb[0].mxu0 %v1425
      %v1520 = vpop.f32.mrb[0].mxu0
      %v1521 = vadd.f32 %v1392, %v1520
      %v1522 = vpop.f32.mrb[0].mxu0
      %v1523 = vpop.f32.mrb[0].mxu0
      %v1524 = vadd.f32 %v1395, %v1523
      %v1525 = vpop.f32.mrb[0].mxu0
      %1526 = vdwg.mxu0
      %s1527 = scalar_lea.vmem [#allocation2], 48
      %v1528 = vld [vmem:[%s1527] sm:$0xff]
      %v1529 = vld [vmem:[%s1527 + $0x8] sm:$0xff]
      %v1530 = vld [vmem:[%s1527 + $0x10] sm:$0x3]
      %v1531 = vld [vmem:[%s1527 + $0x18] sm:$0xff]
      %v1532 = vld [vmem:[%s1527 + $0x20] sm:$0xff]
      %v1533 = vld [vmem:[%s1527 + $0x28] sm:$0x3]
      %v1534 = vld [vmem:[%s1527 + $0x30] sm:$0xff]
      %v1535 = vld [vmem:[%s1527 + $0x38] sm:$0xff]
      %v1536 = vld [vmem:[%s1527 + $0x40] sm:$0x3]
      %v1537 = vld [vmem:[%s1527 + $0x48] sm:$0xff]
      %v1538 = vld [vmem:[%s1527 + $0x50] sm:$0xff]
      %v1539 = vld [vmem:[%s1527 + $0x58] sm:$0x3]
      %v1540 = vld [vmem:[%s1527 + $0x60] sm:$0xff]
      %v1541 = vld [vmem:[%s1527 + $0x68] sm:$0xff]
      %v1542 = vld [vmem:[%s1527 + $0x70] sm:$0x3]
      %v1543 = vld [vmem:[%s1527 + $0x78] sm:$0xff]
      %v1544 = vld [vmem:[%s1527 + $0x80] sm:$0xff]
      %v1545 = vld [vmem:[%s1527 + $0x88] sm:$0x3]
      %v1546 = vld [vmem:[%s1527 + $0x90] sm:$0xff]
      %v1547 = vld [vmem:[%s1527 + $0x98] sm:$0xff]
      %v1548 = vld [vmem:[%s1527 + $0xa0] sm:$0x3]
      %v1549 = vld [vmem:[%s1527 + $0xa8] sm:$0xff]
      %v1550 = vld [vmem:[%s1527 + $0xb0] sm:$0xff]
      %v1551 = vld [vmem:[%s1527 + $0xb8] sm:$0x3]
      %v1576 = vrot.slane %v1528, 1
      %v1577 = vrot.slane %v1529, 1
      %v1578 = vsel %vm780, %v1576, %v1577
      %v1579 = vrot.slane %v1530, 1
      %v1580 = vsel %vm780, %v1577, %v1579
      %v1581 = vrot.slane %v1531, 1
      %v1582 = vrot.slane %v1532, 1
      %v1583 = vsel %vm780, %v1581, %v1582
      %v1584 = vrot.slane %v1533, 1
      %v1585 = vsel %vm780, %v1582, %v1584
      %v1586 = vrot.slane %v1534, 1
      %v1587 = vrot.slane %v1535, 1
      %v1588 = vsel %vm780, %v1586, %v1587
      %v1589 = vrot.slane %v1536, 1
      %v1590 = vsel %vm780, %v1587, %v1589
      %v1591 = vrot.slane %v1537, 1
      %v1592 = vrot.slane %v1538, 1
      %v1593 = vsel %vm780, %v1591, %v1592
      %v1594 = vrot.slane %v1539, 1
      %v1595 = vsel %vm780, %v1592, %v1594
      %v1596 = vrot.slane %v1540, 1
      %v1597 = vrot.slane %v1541, 1
      %v1598 = vsel %vm780, %v1596, %v1597
      %v1599 = vrot.slane %v1542, 1
      %v1600 = vsel %vm780, %v1597, %v1599
      %v1601 = vrot.slane %v1543, 1
      %v1602 = vrot.slane %v1544, 1
      %v1603 = vsel %vm780, %v1601, %v1602
      %v1604 = vrot.slane %v1545, 1
      %v1605 = vsel %vm780, %v1602, %v1604
      %v1606 = vrot.slane %v1546, 1
      %v1607 = vrot.slane %v1547, 1
      %v1608 = vsel %vm780, %v1606, %v1607
      %v1609 = vrot.slane %v1548, 1
      %v1610 = vsel %vm780, %v1607, %v1609
      %v1611 = vrot.slane %v1549, 1
      %v1612 = vrot.slane %v1550, 1
      %v1613 = vsel %vm780, %v1611, %v1612
      %v1614 = vrot.slane %v1551, 1
      %v1615 = vsel %vm780, %v1612, %v1614
      %1616 = vrot.lane.b32.xlu0 %v1578, 4
      %v1617 = vpop.permute.xlu0 %1616
      %1618 = vrot.lane.b32.xlu0 %v1580, 4
      %v1619 = vpop.permute.xlu0 %1618
      %1620 = vrot.lane.b32.xlu0 %v1583, 4
      %v1621 = vpop.permute.xlu0 %1620
      %1622 = vrot.lane.b32.xlu0 %v1585, 4
      %v1623 = vpop.permute.xlu0 %1622
      %1624 = vrot.lane.b32.xlu0 %v1588, 4
      %v1625 = vpop.permute.xlu0 %1624
      %1626 = vrot.lane.b32.xlu0 %v1590, 4
      %v1627 = vpop.permute.xlu0 %1626
      %1628 = vrot.lane.b32.xlu0 %v1593, 4
      %v1629 = vpop.permute.xlu0 %1628
      %1630 = vrot.lane.b32.xlu0 %v1595, 4
      %v1631 = vpop.permute.xlu0 %1630
      %1632 = vrot.lane.b32.xlu0 %v1598, 4
      %v1633 = vpop.permute.xlu0 %1632
      %1634 = vrot.lane.b32.xlu0 %v1600, 4
      %v1635 = vpop.permute.xlu0 %1634
      %1636 = vrot.lane.b32.xlu0 %v1603, 4
      %v1637 = vpop.permute.xlu0 %1636
      %1638 = vrot.lane.b32.xlu0 %v1605, 4
      %v1639 = vpop.permute.xlu0 %1638
      %1640 = vrot.lane.b32.xlu0 %v1608, 4
      %v1641 = vpop.permute.xlu0 %1640
      %1642 = vrot.lane.b32.xlu0 %v1610, 4
      %v1643 = vpop.permute.xlu0 %1642
      %1644 = vrot.lane.b32.xlu0 %v1613, 4
      %v1645 = vpop.permute.xlu0 %1644
      %1646 = vrot.lane.b32.xlu0 %v1615, 4
      %v1647 = vpop.permute.xlu0 %1646
      %v1664 = vrot.slane %v1528, 2
      %v1665 = vrot.slane %v1529, 2
      %v1666 = vsel %vm869, %v1664, %v1665
      %v1667 = vrot.slane %v1530, 2
      %v1668 = vsel %vm869, %v1665, %v1667
      %v1669 = vrot.slane %v1531, 2
      %v1670 = vrot.slane %v1532, 2
      %v1671 = vsel %vm869, %v1669, %v1670
      %v1672 = vrot.slane %v1533, 2
      %v1673 = vsel %vm869, %v1670, %v1672
      %v1674 = vrot.slane %v1534, 2
      %v1675 = vrot.slane %v1535, 2
      %v1676 = vsel %vm869, %v1674, %v1675
      %v1677 = vrot.slane %v1536, 2
      %v1678 = vsel %vm869, %v1675, %v1677
      %v1679 = vrot.slane %v1537, 2
      %v1680 = vrot.slane %v1538, 2
      %v1681 = vsel %vm869, %v1679, %v1680
      %v1682 = vrot.slane %v1539, 2
      %v1683 = vsel %vm869, %v1680, %v1682
      %v1684 = vrot.slane %v1540, 2
      %v1685 = vrot.slane %v1541, 2
      %v1686 = vsel %vm869, %v1684, %v1685
      %v1687 = vrot.slane %v1542, 2
      %v1688 = vsel %vm869, %v1685, %v1687
      %v1689 = vrot.slane %v1543, 2
      %v1690 = vrot.slane %v1544, 2
      %v1691 = vsel %vm869, %v1689, %v1690
      %v1692 = vrot.slane %v1545, 2
      %v1693 = vsel %vm869, %v1690, %v1692
      %v1694 = vrot.slane %v1546, 2
      %v1695 = vrot.slane %v1547, 2
      %v1696 = vsel %vm869, %v1694, %v1695
      %v1697 = vrot.slane %v1548, 2
      %v1698 = vsel %vm869, %v1695, %v1697
      %v1699 = vrot.slane %v1549, 2
      %v1700 = vrot.slane %v1550, 2
      %v1701 = vsel %vm869, %v1699, %v1700
      %v1702 = vrot.slane %v1551, 2
      %v1703 = vsel %vm869, %v1700, %v1702
      %1704 = vrot.lane.b32.xlu0 %v1666, 8
      %v1705 = vpop.permute.xlu0 %1704
      %1706 = vrot.lane.b32.xlu0 %v1668, 8
      %v1707 = vpop.permute.xlu0 %1706
      %1708 = vrot.lane.b32.xlu0 %v1671, 8
      %v1709 = vpop.permute.xlu0 %1708
      %1710 = vrot.lane.b32.xlu0 %v1673, 8
      %v1711 = vpop.permute.xlu0 %1710
      %1712 = vrot.lane.b32.xlu0 %v1676, 8
      %v1713 = vpop.permute.xlu0 %1712
      %1714 = vrot.lane.b32.xlu0 %v1678, 8
      %v1715 = vpop.permute.xlu0 %1714
      %1716 = vrot.lane.b32.xlu0 %v1681, 8
      %v1717 = vpop.permute.xlu0 %1716
      %1718 = vrot.lane.b32.xlu0 %v1683, 8
      %v1719 = vpop.permute.xlu0 %1718
      %1720 = vrot.lane.b32.xlu0 %v1686, 8
      %v1721 = vpop.permute.xlu0 %1720
      %1722 = vrot.lane.b32.xlu0 %v1688, 8
      %v1723 = vpop.permute.xlu0 %1722
      %1724 = vrot.lane.b32.xlu0 %v1691, 8
      %v1725 = vpop.permute.xlu0 %1724
      %1726 = vrot.lane.b32.xlu0 %v1693, 8
      %v1727 = vpop.permute.xlu0 %1726
      %1728 = vrot.lane.b32.xlu0 %v1696, 8
      %v1729 = vpop.permute.xlu0 %1728
      %1730 = vrot.lane.b32.xlu0 %v1698, 8
      %v1731 = vpop.permute.xlu0 %1730
      %1732 = vrot.lane.b32.xlu0 %v1701, 8
      %v1733 = vpop.permute.xlu0 %1732
      %1734 = vrot.lane.b32.xlu0 %v1703, 8
      %v1735 = vpop.permute.xlu0 %1734
      %v1752 = vsel %vm710, %v1528, %v1617
      %v1753 = vsel %vm710, %v1529, %v1619
      %v1754 = vsel %vm710, %v1531, %v1621
      %v1755 = vsel %vm710, %v1532, %v1623
      %v1756 = vsel %vm710, %v1534, %v1625
      %v1757 = vsel %vm710, %v1535, %v1627
      %v1758 = vsel %vm710, %v1537, %v1629
      %v1759 = vsel %vm710, %v1538, %v1631
      %v1760 = vsel %vm710, %v1540, %v1633
      %v1761 = vsel %vm710, %v1541, %v1635
      %v1762 = vsel %vm710, %v1543, %v1637
      %v1763 = vsel %vm710, %v1544, %v1639
      %v1764 = vsel %vm710, %v1546, %v1641
      %v1765 = vsel %vm710, %v1547, %v1643
      %v1766 = vsel %vm710, %v1549, %v1645
      %v1767 = vsel %vm710, %v1550, %v1647
      %v1768 = vsel %vm974, %v1752, %v1705
      %v1769 = vsel %vm974, %v1753, %v1707
      %v1770 = vsel %vm974, %v1754, %v1709
      %v1771 = vsel %vm974, %v1755, %v1711
      %v1772 = vsel %vm974, %v1756, %v1713
      %v1773 = vsel %vm974, %v1757, %v1715
      %v1774 = vsel %vm974, %v1758, %v1717
      %v1775 = vsel %vm974, %v1759, %v1719
      %v1776 = vsel %vm974, %v1760, %v1721
      %v1777 = vsel %vm974, %v1761, %v1723
      %v1778 = vsel %vm974, %v1762, %v1725
      %v1779 = vsel %vm974, %v1763, %v1727
      %v1780 = vsel %vm974, %v1764, %v1729
      %v1781 = vsel %vm974, %v1765, %v1731
      %v1782 = vsel %vm974, %v1766, %v1733
      %v1783 = vsel %vm974, %v1767, %v1735
      %v1784 = vpack.c.bf16 %v1769, %v1768
      %v1785 = vpack.c.bf16 %v1771, %v1770
      %v1786 = vpack.c.bf16 %v1773, %v1772
      %v1787 = vpack.c.bf16 %v1775, %v1774
      %v1788 = vpack.c.bf16 %v1777, %v1776
      %v1789 = vpack.c.bf16 %v1779, %v1778
      %v1790 = vpack.c.bf16 %v1781, %v1780
      %v1791 = vpack.c.bf16 %v1783, %v1782
      %s1792 = scalar_lea.vmem %s5, 16
      %v1793 = vld [vmem:[%s1792] sm:$0xf]
      %v1794 = vld [vmem:[%s1792 + $0x4] sm:$0x3]
      %v1797 = vunpack.c.l.b16 %v1793
      %v1798 = vunpack.c.l.b16 %v1794
      %v1799 = vpack.c.b16 %v1798, %v1797
      %v1801 = vsel %vm1273, %v1784, 0
      %v1804 = vsel %vm1273, %v1785, 0
      %v1807 = vsel %vm1273, %v1786, 0
      %v1810 = vsel %vm1273, %v1787, 0
      %v1813 = vsel %vm1273, %v1788, 0
      %v1816 = vsel %vm1273, %v1789, 0
      %v1819 = vsel %vm1273, %v1790, 0
      %v1822 = vsel %vm1273, %v1791, 0
      %v1825 = vsel %vm869, %v1799, 0
      %1827 = vmatprep.subr.bf16.mxu0 0
      %1828 = vmatpush1.bf16.msra.mxu0 %v1825
      %1829 = vmatprep.subr.bf16.mxu0 0
      %1830 = vmatpush1.bf16.msra.mxu0 0
      %1831 = vmatprep.subr.bf16.mxu0 0
      %1832 = vmatpush1.bf16.msra.mxu0 0
      %1833 = vmatprep.subr.bf16.mxu0 0
      %1834 = vmatpush1.bf16.msra.mxu0 0
      %1835 = vmatprep.subr.bf16.mxu0 0
      %1836 = vmatpush1.bf16.msra.mxu0 0
      %1837 = vmatprep.subr.bf16.mxu0 0
      %1838 = vmatpush1.bf16.msra.mxu0 0
      %1839 = vmatprep.subr.bf16.mxu0 0
      %1840 = vmatpush1.bf16.msra.mxu0 0
      %1841 = vmatprep.subr.bf16.mxu0 0
      %1842 = vmatpush1.bf16.msra.mxu0 0
      %1843 = vmatprep.subr.bf16.mxu0 0
      %1844 = vmatpush1.bf16.msra.mxu0 0
      %1845 = vmatprep.subr.bf16.mxu0 0
      %1846 = vmatpush1.bf16.msra.mxu0 0
      %1847 = vmatprep.subr.bf16.mxu0 0
      %1848 = vmatpush1.bf16.msra.mxu0 0
      %1849 = vmatprep.subr.bf16.mxu0 0
      %1850 = vmatpush1.bf16.msra.mxu0 0
      %1851 = vmatprep.subr.bf16.mxu0 0
      %1852 = vmatpush1.bf16.msra.mxu0 0
      %1853 = vmatprep.subr.bf16.mxu0 0
      %1854 = vmatpush1.bf16.msra.mxu0 0
      %1855 = vmatprep.subr.bf16.mxu0 0
      %1856 = vmatpush1.bf16.msra.mxu0 0
      %1857 = vmatprep.subr.bf16.mxu0 0
      %1858 = vmatpush1.bf16.msra.mxu0 0
      %1859 = vmatprep.mubr.bf16.mxu0 0
      %1860 = vmatmul.mubr.bf16.gmra.mrb[0].mxu0 %v1801
      %v1861 = vpop.f32.mrb[0].mxu0
      %v1862 = vadd.f32 0.0, %v1861
      %v1863 = vpop.f32.mrb[0].mxu0
      %v1864 = vpop.f32.mrb[0].mxu0
      %v1865 = vadd.f32 0.0, %v1864
      %v1866 = vpop.f32.mrb[0].mxu0
      %1867 = vmatprep.mubr.bf16.mxu0 0
      %1868 = vmatmul.mubr.bf16.gmra.mrb[0].mxu0 %v1804
      %v1869 = vpop.f32.mrb[0].mxu0
      %v1870 = vadd.f32 0.0, %v1869
      %v1871 = vpop.f32.mrb[0].mxu0
      %v1872 = vpop.f32.mrb[0].mxu0
      %v1873 = vadd.f32 0.0, %v1872
      %v1874 = vpop.f32.mrb[0].mxu0
      %1875 = vmatprep.mubr.bf16.mxu0 0
      %1876 = vmatmul.mubr.bf16.gmra.mrb[0].mxu0 %v1807
      %v1877 = vpop.f32.mrb[0].mxu0
      %v1878 = vadd.f32 0.0, %v1877
      %v1879 = vpop.f32.mrb[0].mxu0
      %v1880 = vpop.f32.mrb[0].mxu0
      %v1881 = vadd.f32 0.0, %v1880
      %v1882 = vpop.f32.mrb[0].mxu0
      %1883 = vmatprep.mubr.bf16.mxu0 0
      %1884 = vmatmul.mubr.bf16.gmra.mrb[0].mxu0 %v1810
      %v1885 = vpop.f32.mrb[0].mxu0
      %v1886 = vadd.f32 0.0, %v1885
      %v1887 = vpop.f32.mrb[0].mxu0
      %v1888 = vpop.f32.mrb[0].mxu0
      %v1889 = vadd.f32 0.0, %v1888
      %v1890 = vpop.f32.mrb[0].mxu0
      %1891 = vmatprep.mubr.bf16.mxu0 0
      %1892 = vmatmul.mubr.bf16.gmra.mrb[0].mxu0 %v1813
      %v1893 = vpop.f32.mrb[0].mxu0
      %v1894 = vadd.f32 0.0, %v1893
      %v1895 = vpop.f32.mrb[0].mxu0
      %v1896 = vpop.f32.mrb[0].mxu0
      %v1897 = vadd.f32 0.0, %v1896
      %v1898 = vpop.f32.mrb[0].mxu0
      %1899 = vmatprep.mubr.bf16.mxu0 0
      %1900 = vmatmul.mubr.bf16.gmra.mrb[0].mxu0 %v1816
      %v1901 = vpop.f32.mrb[0].mxu0
      %v1902 = vadd.f32 0.0, %v1901
      %v1903 = vpop.f32.mrb[0].mxu0
      %v1904 = vpop.f32.mrb[0].mxu0
      %v1905 = vadd.f32 0.0, %v1904
      %v1906 = vpop.f32.mrb[0].mxu0
      %1907 = vmatprep.mubr.bf16.mxu0 0
      %1908 = vmatmul.mubr.bf16.gmra.mrb[0].mxu0 %v1819
      %v1909 = vpop.f32.mrb[0].mxu0
      %v1910 = vadd.f32 0.0, %v1909
      %v1911 = vpop.f32.mrb[0].mxu0
      %v1912 = vpop.f32.mrb[0].mxu0
      %v1913 = vadd.f32 0.0, %v1912
      %v1914 = vpop.f32.mrb[0].mxu0
      %1915 = vmatprep.mubr.bf16.mxu0 0
      %1916 = vmatmul.mubr.bf16.gmra.mrb[0].mxu0 %v1822
      %v1917 = vpop.f32.mrb[0].mxu0
      %v1918 = vadd.f32 0.0, %v1917
      %v1919 = vpop.f32.mrb[0].mxu0
      %v1920 = vpop.f32.mrb[0].mxu0
      %v1921 = vadd.f32 0.0, %v1920
      %v1922 = vpop.f32.mrb[0].mxu0
      %1923 = vdwg.mxu0
      %v1924 = vadd.f32 %v1465, %v1862
      %v1925 = vadd.f32 %v1468, %v1865
      %v1926 = vadd.f32 %v1473, %v1870
      %v1927 = vadd.f32 %v1476, %v1873
      %v1928 = vadd.f32 %v1481, %v1878
      %v1929 = vadd.f32 %v1484, %v1881
      %v1930 = vadd.f32 %v1489, %v1886
      %v1931 = vadd.f32 %v1492, %v1889
      %v1932 = vadd.f32 %v1497, %v1894
      %v1933 = vadd.f32 %v1500, %v1897
      %v1934 = vadd.f32 %v1505, %v1902
      %v1935 = vadd.f32 %v1508, %v1905
      %v1936 = vadd.f32 %v1513, %v1910
      %v1937 = vadd.f32 %v1516, %v1913
      %v1938 = vadd.f32 %v1521, %v1918
      %v1939 = vadd.f32 %v1524, %v1921
      %v1940 = vld [vmem:[%s6] sm:$0x1]
      %v1942 = vlaneseq
      %v1943 = vshrl.u32 %v1942, 7
      %v1944 = vsub.s32 0, %v1943
      %v1945 = vrot.slane %v1940, %v1944
      %v1947 = vadd.f32 %v1924, %v1945
      %v1948 = vadd.f32 %v1925, %v1945
      %v1949 = vadd.f32 %v1926, %v1945
      %v1950 = vadd.f32 %v1927, %v1945
      %v1951 = vadd.f32 %v1928, %v1945
      %v1952 = vadd.f32 %v1929, %v1945
      %v1953 = vadd.f32 %v1930, %v1945
      %v1954 = vadd.f32 %v1931, %v1945
      %v1955 = vadd.f32 %v1932, %v1945
      %v1956 = vadd.f32 %v1933, %v1945
      %v1957 = vadd.f32 %v1934, %v1945
      %v1958 = vadd.f32 %v1935, %v1945
      %v1959 = vadd.f32 %v1936, %v1945
      %v1960 = vadd.f32 %v1937, %v1945
      %v1961 = vadd.f32 %v1938, %v1945
      %v1962 = vadd.f32 %v1939, %v1945
      // Predicated region
      $region53: #{resnet_block_forward.4} parent=47 // pred_check
        %p1963 = pneg %p460
      $region54: #{resnet_block_forward.4} parent=47 // pred_check_branch
        %1965 = sbr.rel (%p1963) target = $region56
      $region55: #{resnet_block_forward.4} parent=47 // pred_region
        %vm1966 = vcmask 58368
        %1967 = vst.msk [vmem:[%s456] sm:$0x3] %vm1966, 0.0
      $region56: #{resnet_block_forward.4} parent=47 // pred_fallthru
        _
      %v1968 = vld [vmem:[%s456] sm:$0x3]
      %v1969 = vsel %vm974, %v1947, 0.0
      %v1970 = vsel %vm974, %v1948, 0.0
      %v1971 = vadd.f32 %v1969, %v1970
      %v1972 = vsel %vm974, %v1949, 0.0
      %v1973 = vadd.f32 %v1971, %v1972
      %v1974 = vsel %vm974, %v1950, 0.0
      %v1975 = vadd.f32 %v1973, %v1974
      %v1976 = vsel %vm974, %v1951, 0.0
      %v1977 = vadd.f32 %v1975, %v1976
      %v1978 = vsel %vm974, %v1952, 0.0
      %v1979 = vadd.f32 %v1977, %v1978
      %v1980 = vsel %vm974, %v1953, 0.0
      %v1981 = vadd.f32 %v1979, %v1980
      %v1982 = vsel %vm974, %v1954, 0.0
      %v1983 = vadd.f32 %v1981, %v1982
      %v1984 = vsel %vm974, %v1955, 0.0
      %v1985 = vadd.f32 %v1983, %v1984
      %v1986 = vsel %vm974, %v1956, 0.0
      %v1987 = vadd.f32 %v1985, %v1986
      %v1988 = vsel %vm974, %v1957, 0.0
      %v1989 = vadd.f32 %v1987, %v1988
      %v1990 = vsel %vm974, %v1958, 0.0
      %v1991 = vadd.f32 %v1989, %v1990
      %v1992 = vsel %vm974, %v1959, 0.0
      %v1993 = vadd.f32 %v1991, %v1992
      %v1994 = vsel %vm974, %v1960, 0.0
      %v1995 = vadd.f32 %v1993, %v1994
      %v1996 = vsel %vm974, %v1961, 0.0
      %v1997 = vadd.f32 %v1995, %v1996
      %v1998 = vsel %vm974, %v1962, 0.0
      %v1999 = vadd.f32 %v1997, %v1998
      %v2000 = vrot.slane %v1999, 4
      %v2001 = vadd.f32 %v1999, %v2000
      %v2002 = vrot.slane %v2001, 2
      %v2003 = vadd.f32 %v2001, %v2002
      %v2004 = vrot.slane %v2003, 1
      %v2005 = vadd.f32 %v2003, %v2004
      %v2006 = vmul.f32 %v1947, %v1947
      %v2007 = vmul.f32 %v1948, %v1948
      %v2008 = vmul.f32 %v1949, %v1949
      %v2009 = vmul.f32 %v1950, %v1950
      %v2010 = vmul.f32 %v1951, %v1951
      %v2011 = vmul.f32 %v1952, %v1952
      %v2012 = vmul.f32 %v1953, %v1953
      %v2013 = vmul.f32 %v1954, %v1954
      %v2014 = vmul.f32 %v1955, %v1955
      %v2015 = vmul.f32 %v1956, %v1956
      %v2016 = vmul.f32 %v1957, %v1957
      %v2017 = vmul.f32 %v1958, %v1958
      %v2018 = vmul.f32 %v1959, %v1959
      %v2019 = vmul.f32 %v1960, %v1960
      %v2020 = vmul.f32 %v1961, %v1961
      %v2021 = vmul.f32 %v1962, %v1962
      %v2022 = vsel %vm974, %v2006, 0.0
      %v2023 = vsel %vm974, %v2007, 0.0
      %v2024 = vadd.f32 %v2022, %v2023
      %v2025 = vsel %vm974, %v2008, 0.0
      %v2026 = vadd.f32 %v2024, %v2025
      %v2027 = vsel %vm974, %v2009, 0.0
      %v2028 = vadd.f32 %v2026, %v2027
      %v2029 = vsel %vm974, %v2010, 0.0
      %v2030 = vadd.f32 %v2028, %v2029
      %v2031 = vsel %vm974, %v2011, 0.0
      %v2032 = vadd.f32 %v2030, %v2031
      %v2033 = vsel %vm974, %v2012, 0.0
      %v2034 = vadd.f32 %v2032, %v2033
      %v2035 = vsel %vm974, %v2013, 0.0
      %v2036 = vadd.f32 %v2034, %v2035
      %v2037 = vsel %vm974, %v2014, 0.0
      %v2038 = vadd.f32 %v2036, %v2037
      %v2039 = vsel %vm974, %v2015, 0.0
      %v2040 = vadd.f32 %v2038, %v2039
      %v2041 = vsel %vm974, %v2016, 0.0
      %v2042 = vadd.f32 %v2040, %v2041
      %v2043 = vsel %vm974, %v2017, 0.0
      %v2044 = vadd.f32 %v2042, %v2043
      %v2045 = vsel %vm974, %v2018, 0.0
      %v2046 = vadd.f32 %v2044, %v2045
      %v2047 = vsel %vm974, %v2019, 0.0
      %v2048 = vadd.f32 %v2046, %v2047
      %v2049 = vsel %vm974, %v2020, 0.0
      %v2050 = vadd.f32 %v2048, %v2049
      %v2051 = vsel %vm974, %v2021, 0.0
      %v2052 = vadd.f32 %v2050, %v2051
      %v2053 = vrot.slane %v2052, 4
      %v2054 = vadd.f32 %v2052, %v2053
      %v2055 = vrot.slane %v2054, 2
      %v2056 = vadd.f32 %v2054, %v2055
      %v2057 = vrot.slane %v2056, 1
      %v2058 = vadd.f32 %v2056, %v2057
      %vm2059 = vcmask 1040384
      %v2060 = vsel %vm2059, %v2005, %v2058
      %v2061 = vadd.f32 %v1968, %v2060
      %vm2062 = vcmask 58368
      %2063 = vst.msk [vmem:[%s456] sm:$0x3] %vm2062, %v2061
      %v2064 = vpack.c.bf16 %v1948, %v1947
      %v2065 = vpack.c.bf16 %v1950, %v1949
      %v2066 = vpack.c.bf16 %v1952, %v1951
      %v2067 = vpack.c.bf16 %v1954, %v1953
      %v2068 = vpack.c.bf16 %v1956, %v1955
      %v2069 = vpack.c.bf16 %v1958, %v1957
      %v2070 = vpack.c.bf16 %v1960, %v1959
      %v2071 = vpack.c.bf16 %v1962, %v1961
      %v2080 = vunpack.c.l.b16 %v2064
      %v2081 = vunpack.c.h.b16 %v2064
      %v2082 = vunpack.c.l.b16 %v2065
      %v2083 = vunpack.c.h.b16 %v2065
      %v2084 = vunpack.c.l.b16 %v2066
      %v2085 = vunpack.c.h.b16 %v2066
      %v2086 = vunpack.c.l.b16 %v2067
      %v2087 = vunpack.c.h.b16 %v2067
      %v2088 = vunpack.c.l.b16 %v2068
      %v2089 = vunpack.c.h.b16 %v2068
      %v2090 = vunpack.c.l.b16 %v2069
      %v2091 = vunpack.c.h.b16 %v2069
      %v2092 = vunpack.c.l.b16 %v2070
      %v2093 = vunpack.c.h.b16 %v2070
      %v2094 = vunpack.c.l.b16 %v2071
      %v2095 = vunpack.c.h.b16 %v2071
      %v2096 = vpack.c.b16 %v2080, %v2080
      %v2097 = vpack.c.b16 %v2081, %v2081
      %v2098 = vpack.c.b16 %v2082, %v2082
      %v2099 = vpack.c.b16 %v2083, %v2083
      %v2100 = vpack.c.b16 %v2084, %v2084
      %v2101 = vpack.c.b16 %v2085, %v2085
      %v2102 = vpack.c.b16 %v2086, %v2086
      %v2103 = vpack.c.b16 %v2087, %v2087
      %v2104 = vpack.c.b16 %v2088, %v2088
      %v2105 = vpack.c.b16 %v2089, %v2089
      %v2106 = vpack.c.b16 %v2090, %v2090
      %v2107 = vpack.c.b16 %v2091, %v2091
      %v2108 = vpack.c.b16 %v2092, %v2092
      %v2109 = vpack.c.b16 %v2093, %v2093
      %v2110 = vpack.c.b16 %v2094, %v2094
      %v2111 = vpack.c.b16 %v2095, %v2095
      %vm2128 = vcmask 60416
      %2129 = vst.msk [vmem:[%s451] sm:$0xf] %vm2128, %v2096
      %2130 = vst.msk [vmem:[%s451 + $0x4] sm:$0xf] %vm2128, %v2097
      %2131 = vst.msk [vmem:[%s451 + $0x8] sm:$0xf] %vm2128, %v2098
      %2132 = vst.msk [vmem:[%s451 + $0xc] sm:$0xf] %vm2128, %v2099
      %2133 = vst.msk [vmem:[%s451 + $0x10] sm:$0xf] %vm2128, %v2100
      %2134 = vst.msk [vmem:[%s451 + $0x14] sm:$0xf] %vm2128, %v2101
      %2135 = vst.msk [vmem:[%s451 + $0x18] sm:$0xf] %vm2128, %v2102
      %2136 = vst.msk [vmem:[%s451 + $0x1c] sm:$0xf] %vm2128, %v2103
      %2137 = vst.msk [vmem:[%s451 + $0x20] sm:$0xf] %vm2128, %v2104
      %2138 = vst.msk [vmem:[%s451 + $0x24] sm:$0xf] %vm2128, %v2105
      %2139 = vst.msk [vmem:[%s451 + $0x28] sm:$0xf] %vm2128, %v2106
      %2140 = vst.msk [vmem:[%s451 + $0x2c] sm:$0xf] %vm2128, %v2107
      %2141 = vst.msk [vmem:[%s451 + $0x30] sm:$0xf] %vm2128, %v2108
      %2142 = vst.msk [vmem:[%s451 + $0x34] sm:$0xf] %vm2128, %v2109
      %2143 = vst.msk [vmem:[%s451 + $0x38] sm:$0xf] %vm2128, %v2110
      %2144 = vst.msk [vmem:[%s451 + $0x3c] sm:$0xf] %vm2128, %v2111
      %s2145 = smul.u32 8, %s25
      %p2146 = scmp.lt.s32.totalorder %s24, 1
      %s2147 = scalar_select %p2146, %s24, 1
      %p2148 = scmp.lt.s32.totalorder %s2145, 15
      %s2149 = scalar_select %p2148, %s2145, 15
      %s2150 = smul.addr %s2149, 2
      %s2151 = smul.addr %s2147, 32
      %s2152 = sadd.s32 %s2150, %s2151
      %s2153 = smul.addr %s2152, 4
      %s2154 = scalar_lea.vmem %s7, %s2153
      %p2155 = scmp.lt.s32.totalorder %s24, 1
      %s2156 = scalar_select %p2155, %s24, 1
      %s2157 = smul.addr %s2156, 2
      %s2158 = scalar_lea.vmem %s8, %s2157
      // Predicated region
      $region57: #{resnet_block_forward.4} parent=47 // pred_check
        %p2159 = pneg %p230
      $region58: #{resnet_block_forward.4} parent=47 // pred_check_branch
        %2161 = sbr.rel (%p2159) target = $region60
      $region59: #{resnet_block_forward.4} parent=47 // pred_region
        %s2162 = smul.u32 8, %s25
      $region60: #{resnet_block_forward.4} parent=47 // pred_fallthru
        _
      // Predicated region
      $region61: #{resnet_block_forward.4} parent=47 // pred_check
        %p2163 = pneg %p256
      $region62: #{resnet_block_forward.4} parent=47 // pred_check_branch
        %2165 = sbr.rel (%p2163) target = $region64
      $region63: #{resnet_block_forward.4} parent=47 // pred_region
        _
      $region64: #{resnet_block_forward.4} parent=47 // pred_fallthru
        _
    $region48: #{resnet_block_forward.4} parent=5 // pred_fallthru
      _
    %p2166 = scmp.le.s32.totalorder 2, %s15
    // Predicated region
    $region65: #{resnet_block_forward.4} parent=5 // pred_check
      %p2167 = pneg %p2166
    $region66: #{resnet_block_forward.4} parent=5 // pred_check_branch
      %2169 = sbr.rel (%p2167) target = $region68
    $region67: #{resnet_block_forward.4} parent=5 // pred_region
      %s2170 = ssub.s32 %s15, 2
      // Predicated region
      $region69: #{resnet_block_forward.4} parent=67 // pred_check
        %p2171 = pneg %p236
      $region70: #{resnet_block_forward.4} parent=67 // pred_check_branch
        %2173 = sbr.rel (%p2171) target = $region72
      $region71: #{resnet_block_forward.4} parent=67 // pred_region
        %s2174 = smul.u32 8, %s27
        %p2175 = scmp.lt.s32.totalorder %s26, 1
        %s2176 = scalar_select %p2175, %s26, 1
        %p2177 = scmp.lt.s32.totalorder %s2174, 15
        %s2178 = scalar_select %p2177, %s2174, 15
        %s2179 = smul.addr %s2178, 2
        %s2180 = smul.addr %s2176, 32
        %s2181 = sadd.s32 %s2179, %s2180
        %s2182 = smul.addr %s2181, 4
        %s2183 = scalar_lea.vmem %s7, %s2182
      $region72: #{resnet_block_forward.4} parent=67 // pred_fallthru
        _
      // Predicated region
      $region73: #{resnet_block_forward.4} parent=67 // pred_check
        %p2184 = pneg %p262
      $region74: #{resnet_block_forward.4} parent=67 // pred_check_branch
        %2186 = sbr.rel (%p2184) target = $region76
      $region75: #{resnet_block_forward.4} parent=67 // pred_region
        %p2187 = scmp.lt.s32.totalorder %s26, 1
        %s2188 = scalar_select %p2187, %s26, 1
        %s2189 = smul.addr %s2188, 2
        %s2190 = scalar_lea.vmem %s8, %s2189
      $region76: #{resnet_block_forward.4} parent=67 // pred_fallthru
        _
    $region68: #{resnet_block_forward.4} parent=5 // pred_fallthru
      _
  $region6: #{resnet_block_forward.4} parent=0 // loop_footer
    %s19 = sadd.s32 1, %s15
  $region7: #{resnet_block_forward.4} parent=0 // loop_footer_branch
    %14 = sbr.rel target = $region3
  $region8: #{resnet_block_forward.4} parent=0 // loop_exit
    _

// kernel: resnet_block_forward.5
$region0: #{resnet_block_forward.5}
  #allocation0 [shape = 'u32[]', space=smem, size = 0x4, offset = 0x4, fixed_abs, tag = 'smem constant byte address 0x4 - core index']
  #allocation1 [shape = 'u32[144,128]{1,0:T(1,128)}', space=vmem, size = 0x12000, scoped, tag = 'internal scratch']
  #allocation2 [shape = 'f32[10,18,8]{2,1,0:T(8,128)}', space=vmem, size = 0x1e000, scoped, tag = 'scratch operand']
  %s0 = inlined_call_operand.vmem [shape: bf16[2,16,16,8], index: 0, kind: input, shape index: {}]
  %s1 = inlined_call_operand.vmem [shape: bf16[2,2,16,8], index: 1, kind: input, shape index: {}]
  %s2 = inlined_call_operand.vmem [shape: bf16[2,2,16,8], index: 2, kind: input, shape index: {}]
  %s3 = inlined_call_operand.vmem [shape: f32[2,16,16,4], index: 3, kind: input, shape index: {}]
  %s4 = inlined_call_operand.vmem [shape: f32[2,1,8], index: 4, kind: input, shape index: {}]
  %s5 = inlined_call_operand.vmem [shape: f32[2,1,8], index: 5, kind: input, shape index: {}]
  %s6 = inlined_call_operand.vmem [shape: bf16[3,24,8], index: 6, kind: input, shape index: {}]
  %s7 = inlined_call_operand.vmem [shape: f32[1,8], index: 7, kind: input, shape index: {}]
  %s8 = inlined_call_operand.vmem [shape: bf16[4,8], index: 8, kind: input, shape index: {}]
  %s9 = inlined_call_operand.vmem [shape: f32[1,8], index: 9, kind: input, shape index: {}]
  %s10 = inlined_call_operand.vmem [shape: f32[2,16,16,8], index: 10, kind: output, shape index: {}]
  %s11 = sld [smem:[#allocation0]]
  $region73: #{resnet_block_forward.5} parent=0
    _
  %s13 = ssub.s32 1, %s11
  %s14 = scalar_select 0, %s13, %s11
  loop: start=0, step=1, limit=6
  $region2: #{resnet_block_forward.5} parent=0 // loop_pre_header
    _
  $region3: #{resnet_block_forward.5} parent=0 // loop_header
    %s16 = sphi 0, %s20
    %p17 = scmp.ge.s32.totalorder %s16, 6
    %s23 = sphi 0, %s35
    %s24 = sphi 0, %s31
    %s25 = sphi 0, %s23
    %s26 = sphi 0, %s24
    %s27 = sphi 0, %s25
    %s28 = sphi 0, %s26
    %s40 = sphi 0, %s42
    %s43 = sphi 0, %s40
    %s44 = sphi 0, %s43
    %s60 = sphi 0, %s44
    %s68 = sphi 0, %s70
    %s71 = sphi 0, %s68
    %s72 = sphi 0, %s71
    %s88 = sphi 0, %s72
    %s96 = sphi 0, %s98
    %s99 = sphi 0, %s96
    %s100 = sphi 0, %s99
    %s116 = sphi 0, %s100
    %s124 = sphi 0, %s126
    %s127 = sphi 0, %s124
    %s128 = sphi 0, %s127
    %s144 = sphi 0, %s128
    %s150 = sphi 0, %s152
    %s153 = sphi 0, %s150
    %s154 = sphi 0, %s153
    %s170 = sphi 0, %s154
    %s176 = sphi 0, %s178
    %s179 = sphi 0, %s176
    %s180 = sphi 0, %s179
    %s196 = sphi 0, %s180
    %s200 = sphi 0, %s200
    %s202 = sphi 0, %s200
    %s203 = sphi 0, %s202
    %s217 = sphi 0, %s203
    %s221 = sphi 0, %s221
    %s223 = sphi 0, %s221
    %s224 = sphi 0, %s223
    %s238 = sphi 0, %s224
    %s242 = sphi 0, %s242
    %s244 = sphi 0, %s242
    %s245 = sphi 0, %s244
    %s259 = sphi 0, %s245
    %s263 = sphi 0, %s263
    %s265 = sphi 0, %s263
    %s266 = sphi 0, %s265
    %s280 = sphi 0, %s266
    %s288 = sphi 0, %s290
    %s291 = sphi 0, %s288
    %s292 = sphi 0, %s291
    %s308 = sphi 0, %s292
  $region4: #{resnet_block_forward.5} parent=0 // loop_header_branch
    %19 = sbr.rel (%p17) target = $region8
  $region5: #{resnet_block_forward.5} parent=0 // loop_body
    %s21 = ssub.s32 %s16, 1
    %s22 = ssub.s32 %s16, 2
    %s29 = sadd.s32 1, %s24
    %p30 = scmp.ge.s32.totalorder %s29, 2
    %s31 = scalar_select %p30, 0, %s29
    %s32 = sadd.s32 1, %s23
    %s33 = scalar_select %p30, %s32, %s23
    %p34 = scmp.ge.s32.totalorder %s33, 2
    %s35 = scalar_select %p34, 0, %s33
    %s36 = ssub.s32 %s23, %s35
    %s37 = ssub.s32 %s24, %s31
    %s38 = sor.u32 %s36, %s37
    %p39 = scmp.eq.s32.totalorder %s38, 0
    %s41 = sadd.s32 %s40, 1
    %s42 = scalar_select %p39, %s40, %s41
    %p45 = pneg %p39
    %p46 = scmp.eq.s32.totalorder %s16, 3
    %p47 = por %p45, %p46
    %p48 = scmp.ne.s32.totalorder %s40, %s43
    %p49 = scmp.eq.s32.totalorder %s16, 0
    %p50 = por %p48, %p49
    %p51 = scmp.ne.s32.totalorder %s40, %s43
    %p52 = scmp.eq.s32.totalorder %s21, 3
    %p53 = por %p51, %p52
    %p54 = scmp.ne.s32.totalorder %s43, %s44
    %p55 = scmp.eq.s32.totalorder %s21, 0
    %p56 = por %p54, %p55
    %p57 = scmp.ne.s32.totalorder %s43, %s44
    %p58 = scmp.eq.s32.totalorder %s22, 3
    %p59 = por %p57, %p58
    %p61 = scmp.ne.s32.totalorder %s44, %s60
    %p62 = scmp.eq.s32.totalorder %s22, 0
    %p63 = por %p61, %p62
    %s64 = ssub.s32 %s23, %s35
    %s65 = ssub.s32 %s24, %s31
    %s66 = sor.u32 %s64, %s65
    %p67 = scmp.eq.s32.totalorder %s66, 0
    %s69 = sadd.s32 %s68, 1
    %s70 = scalar_select %p67, %s68, %s69
    %p73 = pneg %p67
    %p74 = scmp.eq.s32.totalorder %s16, 3
    %p75 = por %p73, %p74
    %p76 = scmp.ne.s32.totalorder %s68, %s71
    %p77 = scmp.eq.s32.totalorder %s16, 0
    %p78 = por %p76, %p77
    %p79 = scmp.ne.s32.totalorder %s68, %s71
    %p80 = scmp.eq.s32.totalorder %s21, 3
    %p81 = por %p79, %p80
    %p82 = scmp.ne.s32.totalorder %s71, %s72
    %p83 = scmp.eq.s32.totalorder %s21, 0
    %p84 = por %p82, %p83
    %p85 = scmp.ne.s32.totalorder %s71, %s72
    %p86 = scmp.eq.s32.totalorder %s22, 3
    %p87 = por %p85, %p86
    %p89 = scmp.ne.s32.totalorder %s72, %s88
    %p90 = scmp.eq.s32.totalorder %s22, 0
    %p91 = por %p89, %p90
    %s92 = ssub.s32 %s23, %s35
    %s93 = ssub.s32 %s24, %s31
    %s94 = sor.u32 %s92, %s93
    %p95 = scmp.eq.s32.totalorder %s94, 0
    %s97 = sadd.s32 %s96, 1
    %s98 = scalar_select %p95, %s96, %s97
    %p101 = pneg %p95
    %p102 = scmp.eq.s32.totalorder %s16, 3
    %p103 = por %p101, %p102
    %p104 = scmp.ne.s32.totalorder %s96, %s99
    %p105 = scmp.eq.s32.totalorder %s16, 0
    %p106 = por %p104, %p105
    %p107 = scmp.ne.s32.totalorder %s96, %s99
    %p108 = scmp.eq.s32.totalorder %s21, 3
    %p109 = por %p107, %p108
    %p110 = scmp.ne.s32.totalorder %s99, %s100
    %p111 = scmp.eq.s32.totalorder %s21, 0
    %p112 = por %p110, %p111
    %p113 = scmp.ne.s32.totalorder %s99, %s100
    %p114 = scmp.eq.s32.totalorder %s22, 3
    %p115 = por %p113, %p114
    %p117 = scmp.ne.s32.totalorder %s100, %s116
    %p118 = scmp.eq.s32.totalorder %s22, 0
    %p119 = por %p117, %p118
    %s120 = ssub.s32 %s23, %s35
    %s121 = ssub.s32 %s24, %s31
    %s122 = sor.u32 %s120, %s121
    %p123 = scmp.eq.s32.totalorder %s122, 0
    %s125 = sadd.s32 %s124, 1
    %s126 = scalar_select %p123, %s124, %s125
    %p129 = pneg %p123
    %p130 = scmp.eq.s32.totalorder %s16, 3
    %p131 = por %p129, %p130
    %p132 = scmp.ne.s32.totalorder %s124, %s127
    %p133 = scmp.eq.s32.totalorder %s16, 0
    %p134 = por %p132, %p133
    %p135 = scmp.ne.s32.totalorder %s124, %s127
    %p136 = scmp.eq.s32.totalorder %s21, 3
    %p137 = por %p135, %p136
    %p138 = scmp.ne.s32.totalorder %s127, %s128
    %p139 = scmp.eq.s32.totalorder %s21, 0
    %p140 = por %p138, %p139
    %p141 = scmp.ne.s32.totalorder %s127, %s128
    %p142 = scmp.eq.s32.totalorder %s22, 3
    %p143 = por %p141, %p142
    %p145 = scmp.ne.s32.totalorder %s128, %s144
    %p146 = scmp.eq.s32.totalorder %s22, 0
    %p147 = por %p145, %p146
    %s148 = ssub.s32 %s23, %s35
    %p149 = scmp.eq.s32.totalorder %s148, 0
    %s151 = sadd.s32 %s150, 1
    %s152 = scalar_select %p149, %s150, %s151
    %p155 = pneg %p149
    %p156 = scmp.eq.s32.totalorder %s16, 3
    %p157 = por %p155, %p156
    %p158 = scmp.ne.s32.totalorder %s150, %s153
    %p159 = scmp.eq.s32.totalorder %s16, 0
    %p160 = por %p158, %p159
    %p161 = scmp.ne.s32.totalorder %s150, %s153
    %p162 = scmp.eq.s32.totalorder %s21, 3
    %p163 = por %p161, %p162
    %p164 = scmp.ne.s32.totalorder %s153, %s154
    %p165 = scmp.eq.s32.totalorder %s21, 0
    %p166 = por %p164, %p165
    %p167 = scmp.ne.s32.totalorder %s153, %s154
    %p168 = scmp.eq.s32.totalorder %s22, 3
    %p169 = por %p167, %p168
    %p171 = scmp.ne.s32.totalorder %s154, %s170
    %p172 = scmp.eq.s32.totalorder %s22, 0
    %p173 = por %p171, %p172
    %s174 = ssub.s32 %s23, %s35
    %p175 = scmp.eq.s32.totalorder %s174, 0
    %s177 = sadd.s32 %s176, 1
    %s178 = scalar_select %p175, %s176, %s177
    %p181 = pneg %p175
    %p182 = scmp.eq.s32.totalorder %s16, 3
    %p183 = por %p181, %p182
    %p184 = scmp.ne.s32.totalorder %s176, %s179
    %p185 = scmp.eq.s32.totalorder %s16, 0
    %p186 = por %p184, %p185
    %p187 = scmp.ne.s32.totalorder %s176, %s179
    %p188 = scmp.eq.s32.totalorder %s21, 3
    %p189 = por %p187, %p188
    %p190 = scmp.ne.s32.totalorder %s179, %s180
    %p191 = scmp.eq.s32.totalorder %s21, 0
    %p192 = por %p190, %p191
    %p193 = scmp.ne.s32.totalorder %s179, %s180
    %p194 = scmp.eq.s32.totalorder %s22, 3
    %p195 = por %p193, %p194
    %p197 = scmp.ne.s32.totalorder %s180, %s196
    %p198 = scmp.eq.s32.totalorder %s22, 0
    %p199 = por %p197, %p198
    %s201 = sadd.s32 %s200, 1
    %p204 = scmp.eq.s32.totalorder %s16, 3
    %p205 = scmp.ne.s32.totalorder %s200, %s202
    %p206 = scmp.eq.s32.totalorder %s16, 0
    %p207 = por %p205, %p206
    %p208 = scmp.ne.s32.totalorder %s200, %s202
    %p209 = scmp.eq.s32.totalorder %s21, 3
    %p210 = por %p208, %p209
    %p211 = scmp.ne.s32.totalorder %s202, %s203
    %p212 = scmp.eq.s32.totalorder %s21, 0
    %p213 = por %p211, %p212
    %p214 = scmp.ne.s32.totalorder %s202, %s203
    %p215 = scmp.eq.s32.totalorder %s22, 3
    %p216 = por %p214, %p215
    %p218 = scmp.ne.s32.totalorder %s203, %s217
    %p219 = scmp.eq.s32.totalorder %s22, 0
    %p220 = por %p218, %p219
    %s222 = sadd.s32 %s221, 1
    %p225 = scmp.eq.s32.totalorder %s16, 3
    %p226 = scmp.ne.s32.totalorder %s221, %s223
    %p227 = scmp.eq.s32.totalorder %s16, 0
    %p228 = por %p226, %p227
    %p229 = scmp.ne.s32.totalorder %s221, %s223
    %p230 = scmp.eq.s32.totalorder %s21, 3
    %p231 = por %p229, %p230
    %p232 = scmp.ne.s32.totalorder %s223, %s224
    %p233 = scmp.eq.s32.totalorder %s21, 0
    %p234 = por %p232, %p233
    %p235 = scmp.ne.s32.totalorder %s223, %s224
    %p236 = scmp.eq.s32.totalorder %s22, 3
    %p237 = por %p235, %p236
    %p239 = scmp.ne.s32.totalorder %s224, %s238
    %p240 = scmp.eq.s32.totalorder %s22, 0
    %p241 = por %p239, %p240
    %s243 = sadd.s32 %s242, 1
    %p246 = scmp.eq.s32.totalorder %s16, 3
    %p247 = scmp.ne.s32.totalorder %s242, %s244
    %p248 = scmp.eq.s32.totalorder %s16, 0
    %p249 = por %p247, %p248
    %p250 = scmp.ne.s32.totalorder %s242, %s244
    %p251 = scmp.eq.s32.totalorder %s21, 3
    %p252 = por %p250, %p251
    %p253 = scmp.ne.s32.totalorder %s244, %s245
    %p254 = scmp.eq.s32.totalorder %s21, 0
    %p255 = por %p253, %p254
    %p256 = scmp.ne.s32.totalorder %s244, %s245
    %p257 = scmp.eq.s32.totalorder %s22, 3
    %p258 = por %p256, %p257
    %p260 = scmp.ne.s32.totalorder %s245, %s259
    %p261 = scmp.eq.s32.totalorder %s22, 0
    %p262 = por %p260, %p261
    %s264 = sadd.s32 %s263, 1
    %p267 = scmp.eq.s32.totalorder %s16, 3
    %p268 = scmp.ne.s32.totalorder %s263, %s265
    %p269 = scmp.eq.s32.totalorder %s16, 0
    %p270 = por %p268, %p269
    %p271 = scmp.ne.s32.totalorder %s263, %s265
    %p272 = scmp.eq.s32.totalorder %s21, 3
    %p273 = por %p271, %p272
    %p274 = scmp.ne.s32.totalorder %s265, %s266
    %p275 = scmp.eq.s32.totalorder %s21, 0
    %p276 = por %p274, %p275
    %p277 = scmp.ne.s32.totalorder %s265, %s266
    %p278 = scmp.eq.s32.totalorder %s22, 3
    %p279 = por %p277, %p278
    %p281 = scmp.ne.s32.totalorder %s266, %s280
    %p282 = scmp.eq.s32.totalorder %s22, 0
    %p283 = por %p281, %p282
    %s284 = ssub.s32 %s23, %s35
    %s285 = ssub.s32 %s24, %s31
    %s286 = sor.u32 %s284, %s285
    %p287 = scmp.eq.s32.totalorder %s286, 0
    %s289 = sadd.s32 %s288, 1
    %s290 = scalar_select %p287, %s288, %s289
    %p293 = pneg %p287
    %p294 = scmp.eq.s32.totalorder %s16, 3
    %p295 = por %p293, %p294
    %p296 = scmp.ne.s32.totalorder %s288, %s291
    %p297 = scmp.eq.s32.totalorder %s16, 0
    %p298 = por %p296, %p297
    %p299 = scmp.ne.s32.totalorder %s288, %s291
    %p300 = scmp.eq.s32.totalorder %s21, 3
    %p301 = por %p299, %p300
    %p302 = scmp.ne.s32.totalorder %s291, %s292
    %p303 = scmp.eq.s32.totalorder %s21, 0
    %p304 = por %p302, %p303
    %p305 = scmp.ne.s32.totalorder %s291, %s292
    %p306 = scmp.eq.s32.totalorder %s22, 3
    %p307 = por %p305, %p306
    %p309 = scmp.ne.s32.totalorder %s292, %s308
    %p310 = scmp.eq.s32.totalorder %s22, 0
    %p311 = por %p309, %p310
    %p312 = scmp.le.s32.totalorder 1, %s16
    %p313 = scmp.lt.s32.totalorder %s16, 5
    %p314 = pnand %p312, %p313
    %p315 = pneg %p314
    // Predicated region
    $region9: #{resnet_block_forward.5} parent=5 // pred_check
      _
    $region10: #{resnet_block_forward.5} parent=5 // pred_check_branch
      %317 = sbr.rel (%p314) target = $region12
    $region11: #{resnet_block_forward.5} parent=5 // pred_region
      %s318 = ssub.s32 %s16, 1
      // Predicated region
      $region13: #{resnet_block_forward.5} parent=11 // pred_check
        %p319 = pneg %p213
      $region14: #{resnet_block_forward.5} parent=11 // pred_check_branch
        %321 = sbr.rel (%p319) target = $region16
      $region15: #{resnet_block_forward.5} parent=11 // pred_region
        _
      $region16: #{resnet_block_forward.5} parent=11 // pred_fallthru
        _
      // Predicated region
      $region17: #{resnet_block_forward.5} parent=11 // pred_check
        %p322 = pneg %p234
      $region18: #{resnet_block_forward.5} parent=11 // pred_check_branch
        %324 = sbr.rel (%p322) target = $region20
      $region19: #{resnet_block_forward.5} parent=11 // pred_region
        _
      $region20: #{resnet_block_forward.5} parent=11 // pred_fallthru
        _
      // Predicated region
      $region21: #{resnet_block_forward.5} parent=11 // pred_check
        %p325 = pneg %p255
      $region22: #{resnet_block_forward.5} parent=11 // pred_check_branch
        %327 = sbr.rel (%p325) target = $region24
      $region23: #{resnet_block_forward.5} parent=11 // pred_region
        _
      $region24: #{resnet_block_forward.5} parent=11 // pred_fallthru
        _
      // Predicated region
      $region25: #{resnet_block_forward.5} parent=11 // pred_check
        %p328 = pneg %p276
      $region26: #{resnet_block_forward.5} parent=11 // pred_check_branch
        %330 = sbr.rel (%p328) target = $region28
      $region27: #{resnet_block_forward.5} parent=11 // pred_region
        _
      $region28: #{resnet_block_forward.5} parent=11 // pred_fallthru
        _
    $region12: #{resnet_block_forward.5} parent=5 // pred_fallthru
      _
    %p331 = scmp.lt.s32.totalorder %s16, 4
    // Predicated region
    $region29: #{resnet_block_forward.5} parent=5 // pred_check
      %p332 = pneg %p331
    $region30: #{resnet_block_forward.5} parent=5 // pred_check_branch
      %334 = sbr.rel (%p332) target = $region32
    $region31: #{resnet_block_forward.5} parent=5 // pred_region
      // Predicated region
      $region33: #{resnet_block_forward.5} parent=31 // pred_check
        %p335 = pneg %p50
      $region34: #{resnet_block_forward.5} parent=31 // pred_check_branch
        %337 = sbr.rel (%p335) target = $region36
      $region35: #{resnet_block_forward.5} parent=31 // pred_region
        %s338 = smul.u32 8, %s24
        %p339 = scmp.lt.s32.totalorder %s23, 1
        %s340 = scalar_select %p339, %s23, 1
        %p341 = scmp.lt.s32.totalorder %s338, 15
        %s342 = scalar_select %p341, %s338, 15
        %s343 = smul.addr %s342, 2
        %s344 = smul.addr %s340, 32
        %s345 = sadd.s32 %s343, %s344
        %s346 = smul.addr %s345, 4
        %s347 = scalar_lea.vmem %s0, %s346
        %s348 = smul.u32 8, %s24
      $region36: #{resnet_block_forward.5} parent=31 // pred_fallthru
        _
      // Predicated region
      $region37: #{resnet_block_forward.5} parent=31 // pred_check
        %p349 = pneg %p78
      $region38: #{resnet_block_forward.5} parent=31 // pred_check_branch
        %351 = sbr.rel (%p349) target = $region40
      $region39: #{resnet_block_forward.5} parent=31 // pred_region
        %p352 = scmp.lt.s32.totalorder %s23, 1
        %s353 = scalar_select %p352, %s23, 1
        %p354 = scmp.lt.s32.totalorder %s24, 1
        %s355 = scalar_select %p354, %s24, 1
        %s356 = smul.addr %s355, 2
        %s357 = smul.addr %s353, 4
        %s358 = sadd.s32 %s356, %s357
        %s359 = smul.addr %s358, 4
        %s360 = scalar_lea.vmem %s1, %s359
      $region40: #{resnet_block_forward.5} parent=31 // pred_fallthru
        _
      // Predicated region
      $region41: #{resnet_block_forward.5} parent=31 // pred_check
        %p361 = pneg %p106
      $region42: #{resnet_block_forward.5} parent=31 // pred_check_branch
        %363 = sbr.rel (%p361) target = $region44
      $region43: #{resnet_block_forward.5} parent=31 // pred_region
        %p364 = scmp.lt.s32.totalorder %s23, 1
        %s365 = scalar_select %p364, %s23, 1
        %p366 = scmp.lt.s32.totalorder %s24, 1
        %s367 = scalar_select %p366, %s24, 1
        %s368 = smul.addr %s367, 2
        %s369 = smul.addr %s365, 4
        %s370 = sadd.s32 %s368, %s369
        %s371 = smul.addr %s370, 4
        %s372 = scalar_lea.vmem %s2, %s371
      $region44: #{resnet_block_forward.5} parent=31 // pred_fallthru
        _
      // Predicated region
      $region45: #{resnet_block_forward.5} parent=31 // pred_check
        %p373 = pneg %p134
      $region46: #{resnet_block_forward.5} parent=31 // pred_check_branch
        %375 = sbr.rel (%p373) target = $region48
      $region47: #{resnet_block_forward.5} parent=31 // pred_region
        %s376 = smul.u32 8, %s24
        %p377 = scmp.lt.s32.totalorder %s23, 1
        %s378 = scalar_select %p377, %s23, 1
        %p379 = scmp.lt.s32.totalorder %s376, 15
        %s380 = scalar_select %p379, %s376, 15
        %s381 = smul.addr %s380, 2
        %s382 = smul.addr %s378, 32
        %s383 = sadd.s32 %s381, %s382
        %s384 = smul.addr %s383, 8
        %s385 = scalar_lea.vmem %s3, %s384
        %s386 = smul.u32 8, %s24
      $region48: #{resnet_block_forward.5} parent=31 // pred_fallthru
        _
      // Predicated region
      $region49: #{resnet_block_forward.5} parent=31 // pred_check
        %p387 = pneg %p160
      $region50: #{resnet_block_forward.5} parent=31 // pred_check_branch
        %389 = sbr.rel (%p387) target = $region52
      $region51: #{resnet_block_forward.5} parent=31 // pred_region
        %p390 = scmp.lt.s32.totalorder %s23, 1
        %s391 = scalar_select %p390, %s23, 1
        %s392 = scalar_lea.vmem %s4, %s391
      $region52: #{resnet_block_forward.5} parent=31 // pred_fallthru
        _
      // Predicated region
      $region53: #{resnet_block_forward.5} parent=31 // pred_check
        %p393 = pneg %p186
      $region54: #{resnet_block_forward.5} parent=31 // pred_check_branch
        %395 = sbr.rel (%p393) target = $region56
      $region55: #{resnet_block_forward.5} parent=31 // pred_region
        %p396 = scmp.lt.s32.totalorder %s23, 1
        %s397 = scalar_select %p396, %s23, 1
        %s398 = scalar_lea.vmem %s5, %s397
      $region56: #{resnet_block_forward.5} parent=31 // pred_fallthru
        _
    $region32: #{resnet_block_forward.5} parent=5 // pred_fallthru
      _
    %p399 = scmp.le.s32.totalorder 1, %s16
    %p400 = scmp.lt.s32.totalorder %s16, 5
    %p401 = pnand %p399, %p400
    %p402 = pneg %p401
    // Predicated region
    $region57: #{resnet_block_forward.5} parent=5 // pred_check
      _
    $region58: #{resnet_block_forward.5} parent=5 // pred_check_branch
      %404 = sbr.rel (%p401) target = $region60
    $region59: #{resnet_block_forward.5} parent=5 // pred_region
      %s405 = ssub.s32 %s16, 1
      %s406 = smul.u32 8, %s26
      %p407 = scmp.lt.s32.totalorder %s25, 1
      %s408 = scalar_select %p407, %s25, 1
      %p409 = scmp.lt.s32.totalorder %s406, 15
      %s410 = scalar_select %p409, %s406, 15
      %s411 = smul.addr %s410, 2
      %s412 = smul.addr %s408, 32
      %s413 = sadd.s32 %s411, %s412
      %s414 = smul.addr %s413, 4
      %s415 = scalar_lea.vmem %s0, %s414
      %p416 = pneg %p56
      %p417 = pneg %p53
      %p418 = scmp.lt.s32.totalorder %s25, 1
      %s419 = scalar_select %p418, %s25, 1
      %p420 = scmp.lt.s32.totalorder %s26, 1
      %s421 = scalar_select %p420, %s26, 1
      %s422 = smul.addr %s421, 2
      %s423 = smul.addr %s419, 4
      %s424 = sadd.s32 %s422, %s423
      %s425 = smul.addr %s424, 4
      %s426 = scalar_lea.vmem %s1, %s425
      %p427 = pneg %p84
      %p428 = pneg %p81
      %p429 = scmp.lt.s32.totalorder %s25, 1
      %s430 = scalar_select %p429, %s25, 1
      %p431 = scmp.lt.s32.totalorder %s26, 1
      %s432 = scalar_select %p431, %s26, 1
      %s433 = smul.addr %s432, 2
      %s434 = smul.addr %s430, 4
      %s435 = sadd.s32 %s433, %s434
      %s436 = smul.addr %s435, 4
      %s437 = scalar_lea.vmem %s2, %s436
      %p438 = pneg %p112
      %p439 = pneg %p109
      %s440 = smul.u32 8, %s26
      %p441 = scmp.lt.s32.totalorder %s25, 1
      %s442 = scalar_select %p441, %s25, 1
      %p443 = scmp.lt.s32.totalorder %s440, 15
      %s444 = scalar_select %p443, %s440, 15
      %s445 = smul.addr %s444, 2
      %s446 = smul.addr %s442, 32
      %s447 = sadd.s32 %s445, %s446
      %s448 = smul.addr %s447, 8
      %s449 = scalar_lea.vmem %s3, %s448
      %p450 = pneg %p140
      %p451 = pneg %p137
      %p452 = scmp.lt.s32.totalorder %s25, 1
      %s453 = scalar_select %p452, %s25, 1
      %s454 = scalar_lea.vmem %s4, %s453
      %p455 = pneg %p166
      %p456 = pneg %p163
      %p457 = scmp.lt.s32.totalorder %s25, 1
      %s458 = scalar_select %p457, %s25, 1
      %s459 = scalar_lea.vmem %s5, %s458
      %p460 = pneg %p192
      %p461 = pneg %p189
      %p462 = pneg %p213
      %p463 = pneg %p210
      %p464 = pneg %p234
      %p465 = pneg %p231
      %p466 = pneg %p255
      %p467 = pneg %p252
      %p468 = pneg %p276
      %p469 = pneg %p273
      %p470 = pneg %p304
      %p471 = pneg %p301
      %s472 = smul.u32 8, %s26
      %p473 = scmp.lt.s32.totalorder %s25, 1
      %s474 = scalar_select %p473, %s25, 1
      %p475 = scmp.lt.s32.totalorder %s472, 15
      %s476 = scalar_select %p475, %s472, 15
      %s477 = smul.addr %s476, 2
      %s478 = smul.addr %s474, 32
      %s479 = sadd.s32 %s477, %s478
      %s480 = smul.addr %s479, 8
      %s481 = scalar_lea.vmem %s10, %s480
      %s482 = smul.u32 8, %s26
      %p483 = scmp.lt.s32.totalorder %s25, 1
      %s484 = scalar_select %p483, %s25, 1
      %p485 = scmp.lt.s32.totalorder %s482, 15
      %s486 = scalar_select %p485, %s482, 15
      %s487 = smul.addr %s486, 2
      %s488 = smul.addr %s484, 32
      %s489 = sadd.s32 %s487, %s488
      %s490 = smul.addr %s489, 4
      %s491 = scalar_lea.vmem %s0, %s490
      %s492 = smul.u32 8, %s26
      %p493 = scmp.lt.s32.totalorder %s25, 1
      %s494 = scalar_select %p493, %s25, 1
      %p495 = scmp.lt.s32.totalorder %s26, 1
      %s496 = scalar_select %p495, %s26, 1
      %s497 = smul.addr %s496, 2
      %s498 = smul.addr %s494, 4
      %s499 = sadd.s32 %s497, %s498
      %s500 = smul.addr %s499, 4
      %s501 = scalar_lea.vmem %s1, %s500
      %p502 = scmp.lt.s32.totalorder %s25, 1
      %s503 = scalar_select %p502, %s25, 1
      %p504 = scmp.lt.s32.totalorder %s26, 1
      %s505 = scalar_select %p504, %s26, 1
      %s506 = smul.addr %s505, 2
      %s507 = smul.addr %s503, 4
      %s508 = sadd.s32 %s506, %s507
      %s509 = smul.addr %s508, 4
      %s510 = scalar_lea.vmem %s2, %s509
      %s511 = smul.u32 8, %s26
      %p512 = scmp.lt.s32.totalorder %s25, 1
      %s513 = scalar_select %p512, %s25, 1
      %p514 = scmp.lt.s32.totalorder %s511, 15
      %s515 = scalar_select %p514, %s511, 15
      %s516 = smul.addr %s515, 2
      %s517 = smul.addr %s513, 32
      %s518 = sadd.s32 %s516, %s517
      %s519 = smul.addr %s518, 8
      %s520 = scalar_lea.vmem %s3, %s519
      %s521 = smul.u32 8, %s26
      %p522 = scmp.lt.s32.totalorder %s25, 1
      %s523 = scalar_select %p522, %s25, 1
      %s524 = scalar_lea.vmem %s4, %s523
      %p525 = scmp.lt.s32.totalorder %s25, 1
      %s526 = scalar_select %p525, %s25, 1
      %s527 = scalar_lea.vmem %s5, %s526
      %s528 = smul.u32 8, %s26
      %p529 = scmp.lt.s32.totalorder %s25, 1
      %s530 = scalar_select %p529, %s25, 1
      %p531 = scmp.lt.s32.totalorder %s528, 15
      %s532 = scalar_select %p531, %s528, 15
      %s533 = smul.addr %s532, 2
      %s534 = smul.addr %s530, 32
      %s535 = sadd.s32 %s533, %s534
      %s536 = smul.addr %s535, 8
      %s537 = scalar_lea.vmem %s10, %s536
      %s538 = smul.u32 8, %s26
      %v540 = vld [vmem:[%s524] sm:$0x1]
      %v541 = vld [vmem:[%s527] sm:$0x1]
      %vm542 = vcmask 57344
      %543 = vst.msk [vmem:[#allocation2] sm:$0x1] %vm542, 0.0
      %544 = vst.msk [vmem:[#allocation2 + $0x18] sm:$0x1] %vm542, 0.0
      %545 = vst.msk [vmem:[#allocation2 + $0x30] sm:$0x1] %vm542, 0.0
      %546 = vst.msk [vmem:[#allocation2 + $0x48] sm:$0x1] %vm542, 0.0
      %547 = vst.msk [vmem:[#allocation2 + $0x60] sm:$0x1] %vm542, 0.0
      %548 = vst.msk [vmem:[#allocation2 + $0x78] sm:$0x1] %vm542, 0.0
      %549 = vst.msk [vmem:[#allocation2 + $0x90] sm:$0x1] %vm542, 0.0
      %550 = vst.msk [vmem:[#allocation2 + $0xa8] sm:$0x1] %vm542, 0.0
      %551 = vst.msk [vmem:[#allocation2 + $0xc0] sm:$0x1] %vm542, 0.0
      %552 = vst.msk [vmem:[#allocation2 + $0xd8] sm:$0x1] %vm542, 0.0
      %553 = vst.msk [vmem:[#allocation2 + $0x11] sm:$0x1] %vm542, 0.0
      %554 = vst.msk [vmem:[#allocation2 + $0x29] sm:$0x1] %vm542, 0.0
      %555 = vst.msk [vmem:[#allocation2 + $0x41] sm:$0x1] %vm542, 0.0
      %556 = vst.msk [vmem:[#allocation2 + $0x59] sm:$0x1] %vm542, 0.0
      %557 = vst.msk [vmem:[#allocation2 + $0x71] sm:$0x1] %vm542, 0.0
      %558 = vst.msk [vmem:[#allocation2 + $0x89] sm:$0x1] %vm542, 0.0
      %559 = vst.msk [vmem:[#allocation2 + $0xa1] sm:$0x1] %vm542, 0.0
      %560 = vst.msk [vmem:[#allocation2 + $0xb9] sm:$0x1] %vm542, 0.0
      %561 = vst.msk [vmem:[#allocation2 + $0xd1] sm:$0x1] %vm542, 0.0
      %562 = vst.msk [vmem:[#allocation2 + $0xe9] sm:$0x1] %vm542, 0.0
      %v563 = vld [vmem:[%s491] sm:$0xf]
      %v564 = vld [vmem:[%s491 + $0x4] sm:$0xf]
      %v565 = vld [vmem:[%s491 + $0x8] sm:$0xf]
      %v566 = vld [vmem:[%s491 + $0xc] sm:$0xf]
      %v567 = vld [vmem:[%s491 + $0x10] sm:$0xf]
      %v568 = vld [vmem:[%s491 + $0x14] sm:$0xf]
      %v569 = vld [vmem:[%s491 + $0x18] sm:$0xf]
      %v570 = vld [vmem:[%s491 + $0x1c] sm:$0xf]
      %v571 = vld [vmem:[%s491 + $0x20] sm:$0xf]
      %v572 = vld [vmem:[%s491 + $0x24] sm:$0xf]
      %v573 = vld [vmem:[%s491 + $0x28] sm:$0xf]
      %v574 = vld [vmem:[%s491 + $0x2c] sm:$0xf]
      %v575 = vld [vmem:[%s491 + $0x30] sm:$0xf]
      %v576 = vld [vmem:[%s491 + $0x34] sm:$0xf]
      %v577 = vld [vmem:[%s491 + $0x38] sm:$0xf]
      %v578 = vld [vmem:[%s491 + $0x3c] sm:$0xf]
      %v579 = vunpack.c.l.bf16 %v563
      %v580 = vunpack.c.l.bf16 %v564
      %v581 = vunpack.c.l.bf16 %v565
      %v582 = vunpack.c.l.bf16 %v566
      %v583 = vunpack.c.l.bf16 %v567
      %v584 = vunpack.c.l.bf16 %v568
      %v585 = vunpack.c.l.bf16 %v569
      %v586 = vunpack.c.l.bf16 %v570
      %v587 = vunpack.c.l.bf16 %v571
      %v588 = vunpack.c.l.bf16 %v572
      %v589 = vunpack.c.l.bf16 %v573
      %v590 = vunpack.c.l.bf16 %v574
      %v591 = vunpack.c.l.bf16 %v575
      %v592 = vunpack.c.l.bf16 %v576
      %v593 = vunpack.c.l.bf16 %v577
      %v594 = vunpack.c.l.bf16 %v578
      %v596 = vlaneseq
      %v597 = vshrl.u32 %v596, 7
      %v598 = vsub.s32 0, %v597
      %v599 = vrot.slane %v540, %v598
      %v601 = vmul.f32 %v579, %v599
      %v602 = vmul.f32 %v580, %v599
      %v603 = vmul.f32 %v581, %v599
      %v604 = vmul.f32 %v582, %v599
      %v605 = vmul.f32 %v583, %v599
      %v606 = vmul.f32 %v584, %v599
      %v607 = vmul.f32 %v585, %v599
      %v608 = vmul.f32 %v586, %v599
      %v609 = vmul.f32 %v587, %v599
      %v610 = vmul.f32 %v588, %v599
      %v611 = vmul.f32 %v589, %v599
      %v612 = vmul.f32 %v590, %v599
      %v613 = vmul.f32 %v591, %v599
      %v614 = vmul.f32 %v592, %v599
      %v615 = vmul.f32 %v593, %v599
      %v616 = vmul.f32 %v594, %v599
      %v618 = vlaneseq
      %v619 = vshrl.u32 %v618, 7
      %v620 = vsub.s32 0, %v619
      %v621 = vrot.slane %v541, %v620
      %v623 = vadd.f32 %v601, %v621
      %v624 = vadd.f32 %v602, %v621
      %v625 = vadd.f32 %v603, %v621
      %v626 = vadd.f32 %v604, %v621
      %v627 = vadd.f32 %v605, %v621
      %v628 = vadd.f32 %v606, %v621
      %v629 = vadd.f32 %v607, %v621
      %v630 = vadd.f32 %v608, %v621
      %v631 = vadd.f32 %v609, %v621
      %v632 = vadd.f32 %v610, %v621
      %v633 = vadd.f32 %v611, %v621
      %v634 = vadd.f32 %v612, %v621
      %v635 = vadd.f32 %v613, %v621
      %v636 = vadd.f32 %v614, %v621
      %v637 = vadd.f32 %v615, %v621
      %v638 = vadd.f32 %v616, %v621
      %v639 = vxor.u32 %v623, 2147483648
      %v640 = vxor.u32 %v624, 2147483648
      %v641 = vxor.u32 %v625, 2147483648
      %v642 = vxor.u32 %v626, 2147483648
      %v643 = vxor.u32 %v627, 2147483648
      %v644 = vxor.u32 %v628, 2147483648
      %v645 = vxor.u32 %v629, 2147483648
      %v646 = vxor.u32 %v630, 2147483648
      %v647 = vxor.u32 %v631, 2147483648
      %v648 = vxor.u32 %v632, 2147483648
      %v649 = vxor.u32 %v633, 2147483648
      %v650 = vxor.u32 %v634, 2147483648
      %v651 = vxor.u32 %v635, 2147483648
      %v652 = vxor.u32 %v636, 2147483648
      %v653 = vxor.u32 %v637, 2147483648
      %v654 = vxor.u32 %v638, 2147483648
      %v655 = vmul.f32 %v639, 1.442695
      %v656 = vpow.pop %v655
      %v657 = vmul.f32 %v640, 1.442695
      %v658 = vpow.pop %v657
      %v659 = vmul.f32 %v641, 1.442695
      %v660 = vpow.pop %v659
      %v661 = vmul.f32 %v642, 1.442695
      %v662 = vpow.pop %v661
      %v663 = vmul.f32 %v643, 1.442695
      %v664 = vpow.pop %v663
      %v665 = vmul.f32 %v644, 1.442695
      %v666 = vpow.pop %v665
      %v667 = vmul.f32 %v645, 1.442695
      %v668 = vpow.pop %v667
      %v669 = vmul.f32 %v646, 1.442695
      %v670 = vpow.pop %v669
      %v671 = vmul.f32 %v647, 1.442695
      %v672 = vpow.pop %v671
      %v673 = vmul.f32 %v648, 1.442695
      %v674 = vpow.pop %v673
      %v675 = vmul.f32 %v649, 1.442695
      %v676 = vpow.pop %v675
      %v677 = vmul.f32 %v650, 1.442695
      %v678 = vpow.pop %v677
      %v679 = vmul.f32 %v651, 1.442695
      %v680 = vpow.pop %v679
      %v681 = vmul.f32 %v652, 1.442695
      %v682 = vpow.pop %v681
      %v683 = vmul.f32 %v653, 1.442695
      %v684 = vpow.pop %v683
      %v685 = vmul.f32 %v654, 1.442695
      %v686 = vpow.pop %v685
      %v687 = vadd.f32 %v656, 1.0
      %v688 = vadd.f32 %v658, 1.0
      %v689 = vadd.f32 %v660, 1.0
      %v690 = vadd.f32 %v662, 1.0
      %v691 = vadd.f32 %v664, 1.0
      %v692 = vadd.f32 %v666, 1.0
      %v693 = vadd.f32 %v668, 1.0
      %v694 = vadd.f32 %v670, 1.0
      %v695 = vadd.f32 %v672, 1.0
      %v696 = vadd.f32 %v674, 1.0
      %v697 = vadd.f32 %v676, 1.0
      %v698 = vadd.f32 %v678, 1.0
      %v699 = vadd.f32 %v680, 1.0
      %v700 = vadd.f32 %v682, 1.0
      %v701 = vadd.f32 %v684, 1.0
      %v702 = vadd.f32 %v686, 1.0
      %v703 = vrcp.pop %v687
      %v704 = vmul.f32 1.0, %v703
      %v705 = vrcp.pop %v688
      %v706 = vmul.f32 1.0, %v705
      %v707 = vrcp.pop %v689
      %v708 = vmul.f32 1.0, %v707
      %v709 = vrcp.pop %v690
      %v710 = vmul.f32 1.0, %v709
      %v711 = vrcp.pop %v691
      %v712 = vmul.f32 1.0, %v711
      %v713 = vrcp.pop %v692
      %v714 = vmul.f32 1.0, %v713
      %v715 = vrcp.pop %v693
      %v716 = vmul.f32 1.0, %v715
      %v717 = vrcp.pop %v694
      %v718 = vmul.f32 1.0, %v717
      %v719 = vrcp.pop %v695
      %v720 = vmul.f32 1.0, %v719
      %v721 = vrcp.pop %v696
      %v722 = vmul.f32 1.0, %v721
      %v723 = vrcp.pop %v697
      %v724 = vmul.f32 1.0, %v723
      %v725 = vrcp.pop %v698
      %v726 = vmul.f32 1.0, %v725
      %v727 = vrcp.pop %v699
      %v728 = vmul.f32 1.0, %v727
      %v729 = vrcp.pop %v700
      %v730 = vmul.f32 1.0, %v729
      %v731 = vrcp.pop %v701
      %v732 = vmul.f32 1.0, %v731
      %v733 = vrcp.pop %v702
      %v734 = vmul.f32 1.0, %v733
      %v735 = vmul.f32 %v623, %v704
      %v736 = vmul.f32 %v624, %v706
      %v737 = vmul.f32 %v625, %v708
      %v738 = vmul.f32 %v626, %v710
      %v739 = vmul.f32 %v627, %v712
      %v740 = vmul.f32 %v628, %v714
      %v741 = vmul.f32 %v629, %v716
      %v742 = vmul.f32 %v630, %v718
      %v743 = vmul.f32 %v631, %v720
      %v744 = vmul.f32 %v632, %v722
      %v745 = vmul.f32 %v633, %v724
      %v746 = vmul.f32 %v634, %v726
      %v747 = vmul.f32 %v635, %v728
      %v748 = vmul.f32 %v636, %v730
      %v749 = vmul.f32 %v637, %v732
      %v750 = vmul.f32 %v638, %v734
      %v751 = vld [vmem:[%s501] sm:$0xf]
      %v752 = vld [vmem:[%s501 + $0x4] sm:$0xf]
      %v753 = vunpack.c.l.bf16 %v751
      %v754 = vunpack.c.l.bf16 %v752
      %v755 = vmul.f32 %v753, %v599
      %v756 = vmul.f32 %v754, %v599
      %v757 = vadd.f32 %v755, %v621
      %v758 = vadd.f32 %v756, %v621
      %v759 = vxor.u32 %v757, 2147483648
      %v760 = vxor.u32 %v758, 2147483648
      %v761 = vmul.f32 %v759, 1.442695
      %v762 = vpow.pop %v761
      %v763 = vmul.f32 %v760, 1.442695
      %v764 = vpow.pop %v763
      %v765 = vadd.f32 %v762, 1.0
      %v766 = vadd.f32 %v764, 1.0
      %v767 = vrcp.pop %v765
      %v768 = vmul.f32 1.0, %v767
      %v769 = vrcp.pop %v766
      %v770 = vmul.f32 1.0, %v769
      %v771 = vmul.f32 %v757, %v768
      %v772 = vmul.f32 %v758, %v770
      %v773 = vld [vmem:[%s510] sm:$0xf]
      %v774 = vld [vmem:[%s510 + $0x4] sm:$0xf]
      %v775 = vunpack.c.l.bf16 %v773
      %v776 = vunpack.c.l.bf16 %v774
      %v777 = vmul.f32 %v775, %v599
      %v778 = vmul.f32 %v776, %v599
      %v779 = vadd.f32 %v777, %v621
      %v780 = vadd.f32 %v778, %v621
      %v781 = vxor.u32 %v779, 2147483648
      %v782 = vxor.u32 %v780, 2147483648
      %v783 = vmul.f32 %v781, 1.442695
      %v784 = vpow.pop %v783
      %v785 = vmul.f32 %v782, 1.442695
      %v786 = vpow.pop %v785
      %v787 = vadd.f32 %v784, 1.0
      %v788 = vadd.f32 %v786, 1.0
      %v789 = vrcp.pop %v787
      %v790 = vmul.f32 1.0, %v789
      %v791 = vrcp.pop %v788
      %v792 = vmul.f32 1.0, %v791
      %v793 = vmul.f32 %v779, %v790
      %v794 = vmul.f32 %v780, %v792
      %p795 = scmp.gt.s32.totalorder %s26, 0
      %s796 = scalar_select %p795, 1, 0
      %s797 = scvt.s32.f32 %s796
      %v798 = vstv %s797
      %v799 = vmul.f32 %v771, %v798
      %v800 = vmul.f32 %v772, %v798
      %p801 = scmp.lt.s32.totalorder %s26, 1
      %s802 = scalar_select %p801, 1, 0
      %s803 = scvt.s32.f32 %s802
      %v804 = vstv %s803
      %v805 = vmul.f32 %v793, %v804
      %v806 = vmul.f32 %v794, %v804
      %s807 = scalar_lea.vmem [#allocation2], 24
      %vm808 = vcmask 64512
      %809 = vst.msk [vmem:[%s807 + $0x1] sm:$0xff] %vm808, %v735
      %810 = vst.msk [vmem:[%s807 + $0x9] sm:$0xff] %vm808, %v736
      %811 = vst.msk [vmem:[%s807 + $0x19] sm:$0xff] %vm808, %v737
      %812 = vst.msk [vmem:[%s807 + $0x21] sm:$0xff] %vm808, %v738
      %813 = vst.msk [vmem:[%s807 + $0x31] sm:$0xff] %vm808, %v739
      %814 = vst.msk [vmem:[%s807 + $0x39] sm:$0xff] %vm808, %v740
      %815 = vst.msk [vmem:[%s807 + $0x49] sm:$0xff] %vm808, %v741
      %816 = vst.msk [vmem:[%s807 + $0x51] sm:$0xff] %vm808, %v742
      %817 = vst.msk [vmem:[%s807 + $0x61] sm:$0xff] %vm808, %v743
      %818 = vst.msk [vmem:[%s807 + $0x69] sm:$0xff] %vm808, %v744
      %819 = vst.msk [vmem:[%s807 + $0x79] sm:$0xff] %vm808, %v745
      %820 = vst.msk [vmem:[%s807 + $0x81] sm:$0xff] %vm808, %v746
      %821 = vst.msk [vmem:[%s807 + $0x91] sm:$0xff] %vm808, %v747
      %822 = vst.msk [vmem:[%s807 + $0x99] sm:$0xff] %vm808, %v748
      %823 = vst.msk [vmem:[%s807 + $0xa9] sm:$0xff] %vm808, %v749
      %824 = vst.msk [vmem:[%s807 + $0xb1] sm:$0xff] %vm808, %v750
      %825 = vst.msk [vmem:[#allocation2 + $0x1] sm:$0xff] %vm808, %v799
      %826 = vst.msk [vmem:[#allocation2 + $0x9] sm:$0xff] %vm808, %v800
      %s827 = scalar_lea.vmem [#allocation2], 216
      %828 = vst.msk [vmem:[%s827 + $0x1] sm:$0xff] %vm808, %v805
      %829 = vst.msk [vmem:[%s827 + $0x9] sm:$0xff] %vm808, %v806
      %v830 = vld [vmem:[#allocation2] sm:$0xff]
      %v831 = vld [vmem:[#allocation2 + $0x8] sm:$0xff]
      %v832 = vld [vmem:[#allocation2 + $0x10] sm:$0x3]
      %v833 = vld [vmem:[#allocation2 + $0x18] sm:$0xff]
      %v834 = vld [vmem:[#allocation2 + $0x20] sm:$0xff]
      %v835 = vld [vmem:[#allocation2 + $0x28] sm:$0x3]
      %v836 = vld [vmem:[#allocation2 + $0x30] sm:$0xff]
      %v837 = vld [vmem:[#allocation2 + $0x38] sm:$0xff]
      %v838 = vld [vmem:[#allocation2 + $0x40] sm:$0x3]
      %v839 = vld [vmem:[#allocation2 + $0x48] sm:$0xff]
      %v840 = vld [vmem:[#allocation2 + $0x50] sm:$0xff]
      %v841 = vld [vmem:[#allocation2 + $0x58] sm:$0x3]
      %v842 = vld [vmem:[#allocation2 + $0x60] sm:$0xff]
      %v843 = vld [vmem:[#allocation2 + $0x68] sm:$0xff]
      %v844 = vld [vmem:[#allocation2 + $0x70] sm:$0x3]
      %v845 = vld [vmem:[#allocation2 + $0x78] sm:$0xff]
      %v846 = vld [vmem:[#allocation2 + $0x80] sm:$0xff]
      %v847 = vld [vmem:[#allocation2 + $0x88] sm:$0x3]
      %v848 = vld [vmem:[#allocation2 + $0x90] sm:$0xff]
      %v849 = vld [vmem:[#allocation2 + $0x98] sm:$0xff]
      %v850 = vld [vmem:[#allocation2 + $0xa0] sm:$0x3]
      %v851 = vld [vmem:[#allocation2 + $0xa8] sm:$0xff]
      %v852 = vld [vmem:[#allocation2 + $0xb0] sm:$0xff]
      %v853 = vld [vmem:[#allocation2 + $0xb8] sm:$0x3]
      %vm878 = vcmask 1046528
      %v879 = vrot.slane %v830, 1
      %v880 = vrot.slane %v831, 1
      %v881 = vsel %vm878, %v879, %v880
      %v882 = vrot.slane %v832, 1
      %v883 = vsel %vm878, %v880, %v882
      %v884 = vrot.slane %v833, 1
      %v885 = vrot.slane %v834, 1
      %v886 = vsel %vm878, %v884, %v885
      %v887 = vrot.slane %v835, 1
      %v888 = vsel %vm878, %v885, %v887
      %v889 = vrot.slane %v836, 1
      %v890 = vrot.slane %v837, 1
      %v891 = vsel %vm878, %v889, %v890
      %v892 = vrot.slane %v838, 1
      %v893 = vsel %vm878, %v890, %v892
      %v894 = vrot.slane %v839, 1
      %v895 = vrot.slane %v840, 1
      %v896 = vsel %vm878, %v894, %v895
      %v897 = vrot.slane %v841, 1
      %v898 = vsel %vm878, %v895, %v897
      %v899 = vrot.slane %v842, 1
      %v900 = vrot.slane %v843, 1
      %v901 = vsel %vm878, %v899, %v900
      %v902 = vrot.slane %v844, 1
      %v903 = vsel %vm878, %v900, %v902
      %v904 = vrot.slane %v845, 1
      %v905 = vrot.slane %v846, 1
      %v906 = vsel %vm878, %v904, %v905
      %v907 = vrot.slane %v847, 1
      %v908 = vsel %vm878, %v905, %v907
      %v909 = vrot.slane %v848, 1
      %v910 = vrot.slane %v849, 1
      %v911 = vsel %vm878, %v909, %v910
      %v912 = vrot.slane %v850, 1
      %v913 = vsel %vm878, %v910, %v912
      %v914 = vrot.slane %v851, 1
      %v915 = vrot.slane %v852, 1
      %v916 = vsel %vm878, %v914, %v915
      %v917 = vrot.slane %v853, 1
      %v918 = vsel %vm878, %v915, %v917
      %919 = vrot.lane.b32.xlu0 %v881, 8
      %v920 = vpop.permute.xlu0 %919
      %921 = vrot.lane.b32.xlu0 %v883, 8
      %v922 = vpop.permute.xlu0 %921
      %923 = vrot.lane.b32.xlu0 %v886, 8
      %v924 = vpop.permute.xlu0 %923
      %925 = vrot.lane.b32.xlu0 %v888, 8
      %v926 = vpop.permute.xlu0 %925
      %927 = vrot.lane.b32.xlu0 %v891, 8
      %v928 = vpop.permute.xlu0 %927
      %929 = vrot.lane.b32.xlu0 %v893, 8
      %v930 = vpop.permute.xlu0 %929
      %931 = vrot.lane.b32.xlu0 %v896, 8
      %v932 = vpop.permute.xlu0 %931
      %933 = vrot.lane.b32.xlu0 %v898, 8
      %v934 = vpop.permute.xlu0 %933
      %935 = vrot.lane.b32.xlu0 %v901, 8
      %v936 = vpop.permute.xlu0 %935
      %937 = vrot.lane.b32.xlu0 %v903, 8
      %v938 = vpop.permute.xlu0 %937
      %939 = vrot.lane.b32.xlu0 %v906, 8
      %v940 = vpop.permute.xlu0 %939
      %941 = vrot.lane.b32.xlu0 %v908, 8
      %v942 = vpop.permute.xlu0 %941
      %943 = vrot.lane.b32.xlu0 %v911, 8
      %v944 = vpop.permute.xlu0 %943
      %945 = vrot.lane.b32.xlu0 %v913, 8
      %v946 = vpop.permute.xlu0 %945
      %947 = vrot.lane.b32.xlu0 %v916, 8
      %v948 = vpop.permute.xlu0 %947
      %949 = vrot.lane.b32.xlu0 %v918, 8
      %v950 = vpop.permute.xlu0 %949
      %vm967 = vcmask 1045504
      %v968 = vrot.slane %v830, 2
      %v969 = vrot.slane %v831, 2
      %v970 = vsel %vm967, %v968, %v969
      %v971 = vrot.slane %v832, 2
      %v972 = vsel %vm967, %v969, %v971
      %v973 = vrot.slane %v833, 2
      %v974 = vrot.slane %v834, 2
      %v975 = vsel %vm967, %v973, %v974
      %v976 = vrot.slane %v835, 2
      %v977 = vsel %vm967, %v974, %v976
      %v978 = vrot.slane %v836, 2
      %v979 = vrot.slane %v837, 2
      %v980 = vsel %vm967, %v978, %v979
      %v981 = vrot.slane %v838, 2
      %v982 = vsel %vm967, %v979, %v981
      %v983 = vrot.slane %v839, 2
      %v984 = vrot.slane %v840, 2
      %v985 = vsel %vm967, %v983, %v984
      %v986 = vrot.slane %v841, 2
      %v987 = vsel %vm967, %v984, %v986
      %v988 = vrot.slane %v842, 2
      %v989 = vrot.slane %v843, 2
      %v990 = vsel %vm967, %v988, %v989
      %v991 = vrot.slane %v844, 2
      %v992 = vsel %vm967, %v989, %v991
      %v993 = vrot.slane %v845, 2
      %v994 = vrot.slane %v846, 2
      %v995 = vsel %vm967, %v993, %v994
      %v996 = vrot.slane %v847, 2
      %v997 = vsel %vm967, %v994, %v996
      %v998 = vrot.slane %v848, 2
      %v999 = vrot.slane %v849, 2
      %v1000 = vsel %vm967, %v998, %v999
      %v1001 = vrot.slane %v850, 2
      %v1002 = vsel %vm967, %v999, %v1001
      %v1003 = vrot.slane %v851, 2
      %v1004 = vrot.slane %v852, 2
      %v1005 = vsel %vm967, %v1003, %v1004
      %v1006 = vrot.slane %v853, 2
      %v1007 = vsel %vm967, %v1004, %v1006
      %1008 = vrot.lane.b32.xlu0 %v970, 16
      %v1009 = vpop.permute.xlu0 %1008
      %1010 = vrot.lane.b32.xlu0 %v972, 16
      %v1011 = vpop.permute.xlu0 %1010
      %1012 = vrot.lane.b32.xlu0 %v975, 16
      %v1013 = vpop.permute.xlu0 %1012
      %1014 = vrot.lane.b32.xlu0 %v977, 16
      %v1015 = vpop.permute.xlu0 %1014
      %1016 = vrot.lane.b32.xlu0 %v980, 16
      %v1017 = vpop.permute.xlu0 %1016
      %1018 = vrot.lane.b32.xlu0 %v982, 16
      %v1019 = vpop.permute.xlu0 %1018
      %1020 = vrot.lane.b32.xlu0 %v985, 16
      %v1021 = vpop.permute.xlu0 %1020
      %1022 = vrot.lane.b32.xlu0 %v987, 16
      %v1023 = vpop.permute.xlu0 %1022
      %1024 = vrot.lane.b32.xlu0 %v990, 16
      %v1025 = vpop.permute.xlu0 %1024
      %1026 = vrot.lane.b32.xlu0 %v992, 16
      %v1027 = vpop.permute.xlu0 %1026
      %1028 = vrot.lane.b32.xlu0 %v995, 16
      %v1029 = vpop.permute.xlu0 %1028
      %1030 = vrot.lane.b32.xlu0 %v997, 16
      %v1031 = vpop.permute.xlu0 %1030
      %1032 = vrot.lane.b32.xlu0 %v1000, 16
      %v1033 = vpop.permute.xlu0 %1032
      %1034 = vrot.lane.b32.xlu0 %v1002, 16
      %v1035 = vpop.permute.xlu0 %1034
      %1036 = vrot.lane.b32.xlu0 %v1005, 16
      %v1037 = vpop.permute.xlu0 %1036
      %1038 = vrot.lane.b32.xlu0 %v1007, 16
      %v1039 = vpop.permute.xlu0 %1038
      %v1056 = vsel %vm808, %v830, %v920
      %v1057 = vsel %vm808, %v831, %v922
      %v1058 = vsel %vm808, %v833, %v924
      %v1059 = vsel %vm808, %v834, %v926
      %v1060 = vsel %vm808, %v836, %v928
      %v1061 = vsel %vm808, %v837, %v930
      %v1062 = vsel %vm808, %v839, %v932
      %v1063 = vsel %vm808, %v840, %v934
      %v1064 = vsel %vm808, %v842, %v936
      %v1065 = vsel %vm808, %v843, %v938
      %v1066 = vsel %vm808, %v845, %v940
      %v1067 = vsel %vm808, %v846, %v942
      %v1068 = vsel %vm808, %v848, %v944
      %v1069 = vsel %vm808, %v849, %v946
      %v1070 = vsel %vm808, %v851, %v948
      %v1071 = vsel %vm808, %v852, %v950
      %vm1072 = vcmask 130048
      %v1073 = vsel %vm1072, %v1056, %v1009
      %v1074 = vsel %vm1072, %v1057, %v1011
      %v1075 = vsel %vm1072, %v1058, %v1013
      %v1076 = vsel %vm1072, %v1059, %v1015
      %v1077 = vsel %vm1072, %v1060, %v1017
      %v1078 = vsel %vm1072, %v1061, %v1019
      %v1079 = vsel %vm1072, %v1062, %v1021
      %v1080 = vsel %vm1072, %v1063, %v1023
      %v1081 = vsel %vm1072, %v1064, %v1025
      %v1082 = vsel %vm1072, %v1065, %v1027
      %v1083 = vsel %vm1072, %v1066, %v1029
      %v1084 = vsel %vm1072, %v1067, %v1031
      %v1085 = vsel %vm1072, %v1068, %v1033
      %v1086 = vsel %vm1072, %v1069, %v1035
      %v1087 = vsel %vm1072, %v1070, %v1037
      %v1088 = vsel %vm1072, %v1071, %v1039
      %v1089 = vpack.c.bf16 %v1074, %v1073
      %v1090 = vpack.c.bf16 %v1076, %v1075
      %v1091 = vpack.c.bf16 %v1078, %v1077
      %v1092 = vpack.c.bf16 %v1080, %v1079
      %v1093 = vpack.c.bf16 %v1082, %v1081
      %v1094 = vpack.c.bf16 %v1084, %v1083
      %v1095 = vpack.c.bf16 %v1086, %v1085
      %v1096 = vpack.c.bf16 %v1088, %v1087
      %v1097 = vld [vmem:[%s6] sm:$0xf]
      %v1098 = vld [vmem:[%s6 + $0x4] sm:$0xf]
      %v1099 = vld [vmem:[%s6 + $0x8] sm:$0xf]
      %v1100 = vld [vmem:[%s807] sm:$0xff]
      %v1101 = vld [vmem:[%s807 + $0x8] sm:$0xff]
      %v1102 = vld [vmem:[%s807 + $0x10] sm:$0x3]
      %v1103 = vld [vmem:[%s807 + $0x18] sm:$0xff]
      %v1104 = vld [vmem:[%s807 + $0x20] sm:$0xff]
      %v1105 = vld [vmem:[%s807 + $0x28] sm:$0x3]
      %v1106 = vld [vmem:[%s807 + $0x30] sm:$0xff]
      %v1107 = vld [vmem:[%s807 + $0x38] sm:$0xff]
      %v1108 = vld [vmem:[%s807 + $0x40] sm:$0x3]
      %v1109 = vld [vmem:[%s807 + $0x48] sm:$0xff]
      %v1110 = vld [vmem:[%s807 + $0x50] sm:$0xff]
      %v1111 = vld [vmem:[%s807 + $0x58] sm:$0x3]
      %v1112 = vld [vmem:[%s807 + $0x60] sm:$0xff]
      %v1113 = vld [vmem:[%s807 + $0x68] sm:$0xff]
      %v1114 = vld [vmem:[%s807 + $0x70] sm:$0x3]
      %v1115 = vld [vmem:[%s807 + $0x78] sm:$0xff]
      %v1116 = vld [vmem:[%s807 + $0x80] sm:$0xff]
      %v1117 = vld [vmem:[%s807 + $0x88] sm:$0x3]
      %v1118 = vld [vmem:[%s807 + $0x90] sm:$0xff]
      %v1119 = vld [vmem:[%s807 + $0x98] sm:$0xff]
      %v1120 = vld [vmem:[%s807 + $0xa0] sm:$0x3]
      %v1121 = vld [vmem:[%s807 + $0xa8] sm:$0xff]
      %v1122 = vld [vmem:[%s807 + $0xb0] sm:$0xff]
      %v1123 = vld [vmem:[%s807 + $0xb8] sm:$0x3]
      %v1148 = vrot.slane %v1100, 1
      %v1149 = vrot.slane %v1101, 1
      %v1150 = vsel %vm878, %v1148, %v1149
      %v1151 = vrot.slane %v1102, 1
      %v1152 = vsel %vm878, %v1149, %v1151
      %v1153 = vrot.slane %v1103, 1
      %v1154 = vrot.slane %v1104, 1
      %v1155 = vsel %vm878, %v1153, %v1154
      %v1156 = vrot.slane %v1105, 1
      %v1157 = vsel %vm878, %v1154, %v1156
      %v1158 = vrot.slane %v1106, 1
      %v1159 = vrot.slane %v1107, 1
      %v1160 = vsel %vm878, %v1158, %v1159
      %v1161 = vrot.slane %v1108, 1
      %v1162 = vsel %vm878, %v1159, %v1161
      %v1163 = vrot.slane %v1109, 1
      %v1164 = vrot.slane %v1110, 1
      %v1165 = vsel %vm878, %v1163, %v1164
      %v1166 = vrot.slane %v1111, 1
      %v1167 = vsel %vm878, %v1164, %v1166
      %v1168 = vrot.slane %v1112, 1
      %v1169 = vrot.slane %v1113, 1
      %v1170 = vsel %vm878, %v1168, %v1169
      %v1171 = vrot.slane %v1114, 1
      %v1172 = vsel %vm878, %v1169, %v1171
      %v1173 = vrot.slane %v1115, 1
      %v1174 = vrot.slane %v1116, 1
      %v1175 = vsel %vm878, %v1173, %v1174
      %v1176 = vrot.slane %v1117, 1
      %v1177 = vsel %vm878, %v1174, %v1176
      %v1178 = vrot.slane %v1118, 1
      %v1179 = vrot.slane %v1119, 1
      %v1180 = vsel %vm878, %v1178, %v1179
      %v1181 = vrot.slane %v1120, 1
      %v1182 = vsel %vm878, %v1179, %v1181
      %v1183 = vrot.slane %v1121, 1
      %v1184 = vrot.slane %v1122, 1
      %v1185 = vsel %vm878, %v1183, %v1184
      %v1186 = vrot.slane %v1123, 1
      %v1187 = vsel %vm878, %v1184, %v1186
      %1188 = vrot.lane.b32.xlu0 %v1150, 8
      %v1189 = vpop.permute.xlu0 %1188
      %1190 = vrot.lane.b32.xlu0 %v1152, 8
      %v1191 = vpop.permute.xlu0 %1190
      %1192 = vrot.lane.b32.xlu0 %v1155, 8
      %v1193 = vpop.permute.xlu0 %1192
      %1194 = vrot.lane.b32.xlu0 %v1157, 8
      %v1195 = vpop.permute.xlu0 %1194
      %1196 = vrot.lane.b32.xlu0 %v1160, 8
      %v1197 = vpop.permute.xlu0 %1196
      %1198 = vrot.lane.b32.xlu0 %v1162, 8
      %v1199 = vpop.permute.xlu0 %1198
      %1200 = vrot.lane.b32.xlu0 %v1165, 8
      %v1201 = vpop.permute.xlu0 %1200
      %1202 = vrot.lane.b32.xlu0 %v1167, 8
      %v1203 = vpop.permute.xlu0 %1202
      %1204 = vrot.lane.b32.xlu0 %v1170, 8
      %v1205 = vpop.permute.xlu0 %1204
      %1206 = vrot.lane.b32.xlu0 %v1172, 8
      %v1207 = vpop.permute.xlu0 %1206
      %1208 = vrot.lane.b32.xlu0 %v1175, 8
      %v1209 = vpop.permute.xlu0 %1208
      %1210 = vrot.lane.b32.xlu0 %v1177, 8
      %v1211 = vpop.permute.xlu0 %1210
      %1212 = vrot.lane.b32.xlu0 %v1180, 8
      %v1213 = vpop.permute.xlu0 %1212
      %1214 = vrot.lane.b32.xlu0 %v1182, 8
      %v1215 = vpop.permute.xlu0 %1214
      %1216 = vrot.lane.b32.xlu0 %v1185, 8
      %v1217 = vpop.permute.xlu0 %1216
      %1218 = vrot.lane.b32.xlu0 %v1187, 8
      %v1219 = vpop.permute.xlu0 %1218
      %v1236 = vrot.slane %v1100, 2
      %v1237 = vrot.slane %v1101, 2
      %v1238 = vsel %vm967, %v1236, %v1237
      %v1239 = vrot.slane %v1102, 2
      %v1240 = vsel %vm967, %v1237, %v1239
      %v1241 = vrot.slane %v1103, 2
      %v1242 = vrot.slane %v1104, 2
      %v1243 = vsel %vm967, %v1241, %v1242
      %v1244 = vrot.slane %v1105, 2
      %v1245 = vsel %vm967, %v1242, %v1244
      %v1246 = vrot.slane %v1106, 2
      %v1247 = vrot.slane %v1107, 2
      %v1248 = vsel %vm967, %v1246, %v1247
      %v1249 = vrot.slane %v1108, 2
      %v1250 = vsel %vm967, %v1247, %v1249
      %v1251 = vrot.slane %v1109, 2
      %v1252 = vrot.slane %v1110, 2
      %v1253 = vsel %vm967, %v1251, %v1252
      %v1254 = vrot.slane %v1111, 2
      %v1255 = vsel %vm967, %v1252, %v1254
      %v1256 = vrot.slane %v1112, 2
      %v1257 = vrot.slane %v1113, 2
      %v1258 = vsel %vm967, %v1256, %v1257
      %v1259 = vrot.slane %v1114, 2
      %v1260 = vsel %vm967, %v1257, %v1259
      %v1261 = vrot.slane %v1115, 2
      %v1262 = vrot.slane %v1116, 2
      %v1263 = vsel %vm967, %v1261, %v1262
      %v1264 = vrot.slane %v1117, 2
      %v1265 = vsel %vm967, %v1262, %v1264
      %v1266 = vrot.slane %v1118, 2
      %v1267 = vrot.slane %v1119, 2
      %v1268 = vsel %vm967, %v1266, %v1267
      %v1269 = vrot.slane %v1120, 2
      %v1270 = vsel %vm967, %v1267, %v1269
      %v1271 = vrot.slane %v1121, 2
      %v1272 = vrot.slane %v1122, 2
      %v1273 = vsel %vm967, %v1271, %v1272
      %v1274 = vrot.slane %v1123, 2
      %v1275 = vsel %vm967, %v1272, %v1274
      %1276 = vrot.lane.b32.xlu0 %v1238, 16
      %v1277 = vpop.permute.xlu0 %1276
      %1278 = vrot.lane.b32.xlu0 %v1240, 16
      %v1279 = vpop.permute.xlu0 %1278
      %1280 = vrot.lane.b32.xlu0 %v1243, 16
      %v1281 = vpop.permute.xlu0 %1280
      %1282 = vrot.lane.b32.xlu0 %v1245, 16
      %v1283 = vpop.permute.xlu0 %1282
      %1284 = vrot.lane.b32.xlu0 %v1248, 16
      %v1285 = vpop.permute.xlu0 %1284
      %1286 = vrot.lane.b32.xlu0 %v1250, 16
      %v1287 = vpop.permute.xlu0 %1286
      %1288 = vrot.lane.b32.xlu0 %v1253, 16
      %v1289 = vpop.permute.xlu0 %1288
      %1290 = vrot.lane.b32.xlu0 %v1255, 16
      %v1291 = vpop.permute.xlu0 %1290
      %1292 = vrot.lane.b32.xlu0 %v1258, 16
      %v1293 = vpop.permute.xlu0 %1292
      %1294 = vrot.lane.b32.xlu0 %v1260, 16
      %v1295 = vpop.permute.xlu0 %1294
      %1296 = vrot.lane.b32.xlu0 %v1263, 16
      %v1297 = vpop.permute.xlu0 %1296
      %1298 = vrot.lane.b32.xlu0 %v1265, 16
      %v1299 = vpop.permute.xlu0 %1298
      %1300 = vrot.lane.b32.xlu0 %v1268, 16
      %v1301 = vpop.permute.xlu0 %1300
      %1302 = vrot.lane.b32.xlu0 %v1270, 16
      %v1303 = vpop.permute.xlu0 %1302
      %1304 = vrot.lane.b32.xlu0 %v1273, 16
      %v1305 = vpop.permute.xlu0 %1304
      %1306 = vrot.lane.b32.xlu0 %v1275, 16
      %v1307 = vpop.permute.xlu0 %1306
      %v1324 = vsel %vm808, %v1100, %v1189
      %v1325 = vsel %vm808, %v1101, %v1191
      %v1326 = vsel %vm808, %v1103, %v1193
      %v1327 = vsel %vm808, %v1104, %v1195
      %v1328 = vsel %vm808, %v1106, %v1197
      %v1329 = vsel %vm808, %v1107, %v1199
      %v1330 = vsel %vm808, %v1109, %v1201
      %v1331 = vsel %vm808, %v1110, %v1203
      %v1332 = vsel %vm808, %v1112, %v1205
      %v1333 = vsel %vm808, %v1113, %v1207
      %v1334 = vsel %vm808, %v1115, %v1209
      %v1335 = vsel %vm808, %v1116, %v1211
      %v1336 = vsel %vm808, %v1118, %v1213
      %v1337 = vsel %vm808, %v1119, %v1215
      %v1338 = vsel %vm808, %v1121, %v1217
      %v1339 = vsel %vm808, %v1122, %v1219
      %v1340 = vsel %vm1072, %v1324, %v1277
      %v1341 = vsel %vm1072, %v1325, %v1279
      %v1342 = vsel %vm1072, %v1326, %v1281
      %v1343 = vsel %vm1072, %v1327, %v1283
      %v1344 = vsel %vm1072, %v1328, %v1285
      %v1345 = vsel %vm1072, %v1329, %v1287
      %v1346 = vsel %vm1072, %v1330, %v1289
      %v1347 = vsel %vm1072, %v1331, %v1291
      %v1348 = vsel %vm1072, %v1332, %v1293
      %v1349 = vsel %vm1072, %v1333, %v1295
      %v1350 = vsel %vm1072, %v1334, %v1297
      %v1351 = vsel %vm1072, %v1335, %v1299
      %v1352 = vsel %vm1072, %v1336, %v1301
      %v1353 = vsel %vm1072, %v1337, %v1303
      %v1354 = vsel %vm1072, %v1338, %v1305
      %v1355 = vsel %vm1072, %v1339, %v1307
      %v1356 = vpack.c.bf16 %v1341, %v1340
      %v1357 = vpack.c.bf16 %v1343, %v1342
      %v1358 = vpack.c.bf16 %v1345, %v1344
      %v1359 = vpack.c.bf16 %v1347, %v1346
      %v1360 = vpack.c.bf16 %v1349, %v1348
      %v1361 = vpack.c.bf16 %v1351, %v1350
      %v1362 = vpack.c.bf16 %v1353, %v1352
      %v1363 = vpack.c.bf16 %v1355, %v1354
      %s1364 = scalar_lea.vmem %s6, 12
      %v1365 = vld [vmem:[%s1364] sm:$0xf]
      %v1366 = vld [vmem:[%s1364 + $0x4] sm:$0xf]
      %v1367 = vld [vmem:[%s1364 + $0x8] sm:$0xf]
      %v1371 = vunpack.c.l.b16 %v1365
      %v1372 = vunpack.c.l.b16 %v1366
      %v1373 = vunpack.c.l.b16 %v1367
      %v1374 = vpack.c.b16 %v1372, %v1371
      %v1375 = vpack.c.b16 %v1373, %v1373
      %vm1377 = vcmask 195584
      %v1379 = vsel %vm1377, %v1356, 0
      %v1382 = vsel %vm1377, %v1357, 0
      %v1385 = vsel %vm1377, %v1358, 0
      %v1388 = vsel %vm1377, %v1359, 0
      %v1391 = vsel %vm1377, %v1360, 0
      %v1394 = vsel %vm1377, %v1361, 0
      %v1397 = vsel %vm1377, %v1362, 0
      %v1400 = vsel %vm1377, %v1363, 0
      %vm1402 = vcmask 1043456
      %v1404 = vsel %vm1402, %v1375, 0
      %1406 = vmatprep.subr.bf16.mxu0 0
      %1407 = vmatpush1.bf16.msra.mxu0 %v1374
      %1408 = vmatprep.subr.bf16.mxu0 0
      %1409 = vmatpush1.bf16.msra.mxu0 %v1404
      %1410 = vmatprep.subr.bf16.mxu0 0
      %1411 = vmatpush1.bf16.msra.mxu0 0
      %1412 = vmatprep.subr.bf16.mxu0 0
      %1413 = vmatpush1.bf16.msra.mxu0 0
      %1414 = vmatprep.subr.bf16.mxu0 0
      %1415 = vmatpush1.bf16.msra.mxu0 0
      %1416 = vmatprep.subr.bf16.mxu0 0
      %1417 = vmatpush1.bf16.msra.mxu0 0
      %1418 = vmatprep.subr.bf16.mxu0 0
      %1419 = vmatpush1.bf16.msra.mxu0 0
      %1420 = vmatprep.subr.bf16.mxu0 0
      %1421 = vmatpush1.bf16.msra.mxu0 0
      %1422 = vmatprep.subr.bf16.mxu0 0
      %1423 = vmatpush1.bf16.msra.mxu0 0
      %1424 = vmatprep.subr.bf16.mxu0 0
      %1425 = vmatpush1.bf16.msra.mxu0 0
      %1426 = vmatprep.subr.bf16.mxu0 0
      %1427 = vmatpush1.bf16.msra.mxu0 0
      %1428 = vmatprep.subr.bf16.mxu0 0
      %1429 = vmatpush1.bf16.msra.mxu0 0
      %1430 = vmatprep.subr.bf16.mxu0 0
      %1431 = vmatpush1.bf16.msra.mxu0 0
      %1432 = vmatprep.subr.bf16.mxu0 0
      %1433 = vmatpush1.bf16.msra.mxu0 0
      %1434 = vmatprep.subr.bf16.mxu0 0
      %1435 = vmatpush1.bf16.msra.mxu0 0
      %1436 = vmatprep.subr.bf16.mxu0 0
      %1437 = vmatpush1.bf16.msra.mxu0 0
      %1438 = vmatprep.mubr.bf16.mxu0 0
      %1439 = vmatmul.mubr.bf16.gmra.mrb[0].mxu0 %v1379
      %v1440 = vpop.f32.mrb[0].mxu0
      %v1441 = vadd.f32 0.0, %v1440
      %v1442 = vpop.f32.mrb[0].mxu0
      %v1443 = vpop.f32.mrb[0].mxu0
      %v1444 = vadd.f32 0.0, %v1443
      %v1445 = vpop.f32.mrb[0].mxu0
      %1446 = vmatprep.mubr.bf16.mxu0 0
      %1447 = vmatmul.mubr.bf16.gmra.mrb[0].mxu0 %v1382
      %v1448 = vpop.f32.mrb[0].mxu0
      %v1449 = vadd.f32 0.0, %v1448
      %v1450 = vpop.f32.mrb[0].mxu0
      %v1451 = vpop.f32.mrb[0].mxu0
      %v1452 = vadd.f32 0.0, %v1451
      %v1453 = vpop.f32.mrb[0].mxu0
      %1454 = vmatprep.mubr.bf16.mxu0 0
      %1455 = vmatmul.mubr.bf16.gmra.mrb[0].mxu0 %v1385
      %v1456 = vpop.f32.mrb[0].mxu0
      %v1457 = vadd.f32 0.0, %v1456
      %v1458 = vpop.f32.mrb[0].mxu0
      %v1459 = vpop.f32.mrb[0].mxu0
      %v1460 = vadd.f32 0.0, %v1459
      %v1461 = vpop.f32.mrb[0].mxu0
      %1462 = vmatprep.mubr.bf16.mxu0 0
      %1463 = vmatmul.mubr.bf16.gmra.mrb[0].mxu0 %v1388
      %v1464 = vpop.f32.mrb[0].mxu0
      %v1465 = vadd.f32 0.0, %v1464
      %v1466 = vpop.f32.mrb[0].mxu0
      %v1467 = vpop.f32.mrb[0].mxu0
      %v1468 = vadd.f32 0.0, %v1467
      %v1469 = vpop.f32.mrb[0].mxu0
      %1470 = vmatprep.mubr.bf16.mxu0 0
      %1471 = vmatmul.mubr.bf16.gmra.mrb[0].mxu0 %v1391
      %v1472 = vpop.f32.mrb[0].mxu0
      %v1473 = vadd.f32 0.0, %v1472
      %v1474 = vpop.f32.mrb[0].mxu0
      %v1475 = vpop.f32.mrb[0].mxu0
      %v1476 = vadd.f32 0.0, %v1475
      %v1477 = vpop.f32.mrb[0].mxu0
      %1478 = vmatprep.mubr.bf16.mxu0 0
      %1479 = vmatmul.mubr.bf16.gmra.mrb[0].mxu0 %v1394
      %v1480 = vpop.f32.mrb[0].mxu0
      %v1481 = vadd.f32 0.0, %v1480
      %v1482 = vpop.f32.mrb[0].mxu0
      %v1483 = vpop.f32.mrb[0].mxu0
      %v1484 = vadd.f32 0.0, %v1483
      %v1485 = vpop.f32.mrb[0].mxu0
      %1486 = vmatprep.mubr.bf16.mxu0 0
      %1487 = vmatmul.mubr.bf16.gmra.mrb[0].mxu0 %v1397
      %v1488 = vpop.f32.mrb[0].mxu0
      %v1489 = vadd.f32 0.0, %v1488
      %v1490 = vpop.f32.mrb[0].mxu0
      %v1491 = vpop.f32.mrb[0].mxu0
      %v1492 = vadd.f32 0.0, %v1491
      %v1493 = vpop.f32.mrb[0].mxu0
      %1494 = vmatprep.mubr.bf16.mxu0 0
      %1495 = vmatmul.mubr.bf16.gmra.mrb[0].mxu0 %v1400
      %v1496 = vpop.f32.mrb[0].mxu0
      %v1497 = vadd.f32 0.0, %v1496
      %v1498 = vpop.f32.mrb[0].mxu0
      %v1499 = vpop.f32.mrb[0].mxu0
      %v1500 = vadd.f32 0.0, %v1499
      %v1501 = vpop.f32.mrb[0].mxu0
      %1502 = vdwg.mxu0
      %v1506 = vunpack.c.l.b16 %v1097
      %v1507 = vunpack.c.l.b16 %v1098
      %v1508 = vunpack.c.l.b16 %v1099
      %v1509 = vpack.c.b16 %v1507, %v1506
      %v1510 = vpack.c.b16 %v1508, %v1508
      %v1513 = vsel %vm1377, %v1089, 0
      %v1516 = vsel %vm1377, %v1090, 0
      %v1519 = vsel %vm1377, %v1091, 0
      %v1522 = vsel %vm1377, %v1092, 0
      %v1525 = vsel %vm1377, %v1093, 0
      %v1528 = vsel %vm1377, %v1094, 0
      %v1531 = vsel %vm1377, %v1095, 0
      %v1534 = vsel %vm1377, %v1096, 0
      %v1537 = vsel %vm1402, %v1510, 0
      %1539 = vmatprep.subr.bf16.mxu0 0
      %1540 = vmatpush1.bf16.msra.mxu0 %v1509
      %1541 = vmatprep.subr.bf16.mxu0 0
      %1542 = vmatpush1.bf16.msra.mxu0 %v1537
      %1543 = vmatprep.subr.bf16.mxu0 0
      %1544 = vmatpush1.bf16.msra.mxu0 0
      %1545 = vmatprep.subr.bf16.mxu0 0
      %1546 = vmatpush1.bf16.msra.mxu0 0
      %1547 = vmatprep.subr.bf16.mxu0 0
      %1548 = vmatpush1.bf16.msra.mxu0 0
      %1549 = vmatprep.subr.bf16.mxu0 0
      %1550 = vmatpush1.bf16.msra.mxu0 0
      %1551 = vmatprep.subr.bf16.mxu0 0
      %1552 = vmatpush1.bf16.msra.mxu0 0
      %1553 = vmatprep.subr.bf16.mxu0 0
      %1554 = vmatpush1.bf16.msra.mxu0 0
      %1555 = vmatprep.subr.bf16.mxu0 0
      %1556 = vmatpush1.bf16.msra.mxu0 0
      %1557 = vmatprep.subr.bf16.mxu0 0
      %1558 = vmatpush1.bf16.msra.mxu0 0
      %1559 = vmatprep.subr.bf16.mxu0 0
      %1560 = vmatpush1.bf16.msra.mxu0 0
      %1561 = vmatprep.subr.bf16.mxu0 0
      %1562 = vmatpush1.bf16.msra.mxu0 0
      %1563 = vmatprep.subr.bf16.mxu0 0
      %1564 = vmatpush1.bf16.msra.mxu0 0
      %1565 = vmatprep.subr.bf16.mxu0 0
      %1566 = vmatpush1.bf16.msra.mxu0 0
      %1567 = vmatprep.subr.bf16.mxu0 0
      %1568 = vmatpush1.bf16.msra.mxu0 0
      %1569 = vmatprep.subr.bf16.mxu0 0
      %1570 = vmatpush1.bf16.msra.mxu0 0
      %1571 = vmatprep.mubr.bf16.mxu0 0
      %1572 = vmatmul.mubr.bf16.gmra.mrb[0].mxu0 %v1513
      %v1573 = vpop.f32.mrb[0].mxu0
      %v1574 = vadd.f32 %v1441, %v1573
      %v1575 = vpop.f32.mrb[0].mxu0
      %v1576 = vpop.f32.mrb[0].mxu0
      %v1577 = vadd.f32 %v1444, %v1576
      %v1578 = vpop.f32.mrb[0].mxu0
      %1579 = vmatprep.mubr.bf16.mxu0 0
      %1580 = vmatmul.mubr.bf16.gmra.mrb[0].mxu0 %v1516
      %v1581 = vpop.f32.mrb[0].mxu0
      %v1582 = vadd.f32 %v1449, %v1581
      %v1583 = vpop.f32.mrb[0].mxu0
      %v1584 = vpop.f32.mrb[0].mxu0
      %v1585 = vadd.f32 %v1452, %v1584
      %v1586 = vpop.f32.mrb[0].mxu0
      %1587 = vmatprep.mubr.bf16.mxu0 0
      %1588 = vmatmul.mubr.bf16.gmra.mrb[0].mxu0 %v1519
      %v1589 = vpop.f32.mrb[0].mxu0
      %v1590 = vadd.f32 %v1457, %v1589
      %v1591 = vpop.f32.mrb[0].mxu0
      %v1592 = vpop.f32.mrb[0].mxu0
      %v1593 = vadd.f32 %v1460, %v1592
      %v1594 = vpop.f32.mrb[0].mxu0
      %1595 = vmatprep.mubr.bf16.mxu0 0
      %1596 = vmatmul.mubr.bf16.gmra.mrb[0].mxu0 %v1522
      %v1597 = vpop.f32.mrb[0].mxu0
      %v1598 = vadd.f32 %v1465, %v1597
      %v1599 = vpop.f32.mrb[0].mxu0
      %v1600 = vpop.f32.mrb[0].mxu0
      %v1601 = vadd.f32 %v1468, %v1600
      %v1602 = vpop.f32.mrb[0].mxu0
      %1603 = vmatprep.mubr.bf16.mxu0 0
      %1604 = vmatmul.mubr.bf16.gmra.mrb[0].mxu0 %v1525
      %v1605 = vpop.f32.mrb[0].mxu0
      %v1606 = vadd.f32 %v1473, %v1605
      %v1607 = vpop.f32.mrb[0].mxu0
      %v1608 = vpop.f32.mrb[0].mxu0
      %v1609 = vadd.f32 %v1476, %v1608
      %v1610 = vpop.f32.mrb[0].mxu0
      %1611 = vmatprep.mubr.bf16.mxu0 0
      %1612 = vmatmul.mubr.bf16.gmra.mrb[0].mxu0 %v1528
      %v1613 = vpop.f32.mrb[0].mxu0
      %v1614 = vadd.f32 %v1481, %v1613
      %v1615 = vpop.f32.mrb[0].mxu0
      %v1616 = vpop.f32.mrb[0].mxu0
      %v1617 = vadd.f32 %v1484, %v1616
      %v1618 = vpop.f32.mrb[0].mxu0
      %1619 = vmatprep.mubr.bf16.mxu0 0
      %1620 = vmatmul.mubr.bf16.gmra.mrb[0].mxu0 %v1531
      %v1621 = vpop.f32.mrb[0].mxu0
      %v1622 = vadd.f32 %v1489, %v1621
      %v1623 = vpop.f32.mrb[0].mxu0
      %v1624 = vpop.f32.mrb[0].mxu0
      %v1625 = vadd.f32 %v1492, %v1624
      %v1626 = vpop.f32.mrb[0].mxu0
      %1627 = vmatprep.mubr.bf16.mxu0 0
      %1628 = vmatmul.mubr.bf16.gmra.mrb[0].mxu0 %v1534
      %v1629 = vpop.f32.mrb[0].mxu0
      %v1630 = vadd.f32 %v1497, %v1629
      %v1631 = vpop.f32.mrb[0].mxu0
      %v1632 = vpop.f32.mrb[0].mxu0
      %v1633 = vadd.f32 %v1500, %v1632
      %v1634 = vpop.f32.mrb[0].mxu0
      %1635 = vdwg.mxu0
      %s1636 = scalar_lea.vmem [#allocation2], 48
      %v1637 = vld [vmem:[%s1636] sm:$0xff]
      %v1638 = vld [vmem:[%s1636 + $0x8] sm:$0xff]
      %v1639 = vld [vmem:[%s1636 + $0x10] sm:$0x3]
      %v1640 = vld [vmem:[%s1636 + $0x18] sm:$0xff]
      %v1641 = vld [vmem:[%s1636 + $0x20] sm:$0xff]
      %v1642 = vld [vmem:[%s1636 + $0x28] sm:$0x3]
      %v1643 = vld [vmem:[%s1636 + $0x30] sm:$0xff]
      %v1644 = vld [vmem:[%s1636 + $0x38] sm:$0xff]
      %v1645 = vld [vmem:[%s1636 + $0x40] sm:$0x3]
      %v1646 = vld [vmem:[%s1636 + $0x48] sm:$0xff]
      %v1647 = vld [vmem:[%s1636 + $0x50] sm:$0xff]
      %v1648 = vld [vmem:[%s1636 + $0x58] sm:$0x3]
      %v1649 = vld [vmem:[%s1636 + $0x60] sm:$0xff]
      %v1650 = vld [vmem:[%s1636 + $0x68] sm:$0xff]
      %v1651 = vld [vmem:[%s1636 + $0x70] sm:$0x3]
      %v1652 = vld [vmem:[%s1636 + $0x78] sm:$0xff]
      %v1653 = vld [vmem:[%s1636 + $0x80] sm:$0xff]
      %v1654 = vld [vmem:[%s1636 + $0x88] sm:$0x3]
      %v1655 = vld [vmem:[%s1636 + $0x90] sm:$0xff]
      %v1656 = vld [vmem:[%s1636 + $0x98] sm:$0xff]
      %v1657 = vld [vmem:[%s1636 + $0xa0] sm:$0x3]
      %v1658 = vld [vmem:[%s1636 + $0xa8] sm:$0xff]
      %v1659 = vld [vmem:[%s1636 + $0xb0] sm:$0xff]
      %v1660 = vld [vmem:[%s1636 + $0xb8] sm:$0x3]
      %v1685 = vrot.slane %v1637, 1
      %v1686 = vrot.slane %v1638, 1
      %v1687 = vsel %vm878, %v1685, %v1686
      %v1688 = vrot.slane %v1639, 1
      %v1689 = vsel %vm878, %v1686, %v1688
      %v1690 = vrot.slane %v1640, 1
      %v1691 = vrot.slane %v1641, 1
      %v1692 = vsel %vm878, %v1690, %v1691
      %v1693 = vrot.slane %v1642, 1
      %v1694 = vsel %vm878, %v1691, %v1693
      %v1695 = vrot.slane %v1643, 1
      %v1696 = vrot.slane %v1644, 1
      %v1697 = vsel %vm878, %v1695, %v1696
      %v1698 = vrot.slane %v1645, 1
      %v1699 = vsel %vm878, %v1696, %v1698
      %v1700 = vrot.slane %v1646, 1
      %v1701 = vrot.slane %v1647, 1
      %v1702 = vsel %vm878, %v1700, %v1701
      %v1703 = vrot.slane %v1648, 1
      %v1704 = vsel %vm878, %v1701, %v1703
      %v1705 = vrot.slane %v1649, 1
      %v1706 = vrot.slane %v1650, 1
      %v1707 = vsel %vm878, %v1705, %v1706
      %v1708 = vrot.slane %v1651, 1
      %v1709 = vsel %vm878, %v1706, %v1708
      %v1710 = vrot.slane %v1652, 1
      %v1711 = vrot.slane %v1653, 1
      %v1712 = vsel %vm878, %v1710, %v1711
      %v1713 = vrot.slane %v1654, 1
      %v1714 = vsel %vm878, %v1711, %v1713
      %v1715 = vrot.slane %v1655, 1
      %v1716 = vrot.slane %v1656, 1
      %v1717 = vsel %vm878, %v1715, %v1716
      %v1718 = vrot.slane %v1657, 1
      %v1719 = vsel %vm878, %v1716, %v1718
      %v1720 = vrot.slane %v1658, 1
      %v1721 = vrot.slane %v1659, 1
      %v1722 = vsel %vm878, %v1720, %v1721
      %v1723 = vrot.slane %v1660, 1
      %v1724 = vsel %vm878, %v1721, %v1723
      %1725 = vrot.lane.b32.xlu0 %v1687, 8
      %v1726 = vpop.permute.xlu0 %1725
      %1727 = vrot.lane.b32.xlu0 %v1689, 8
      %v1728 = vpop.permute.xlu0 %1727
      %1729 = vrot.lane.b32.xlu0 %v1692, 8
      %v1730 = vpop.permute.xlu0 %1729
      %1731 = vrot.lane.b32.xlu0 %v1694, 8
      %v1732 = vpop.permute.xlu0 %1731
      %1733 = vrot.lane.b32.xlu0 %v1697, 8
      %v1734 = vpop.permute.xlu0 %1733
      %1735 = vrot.lane.b32.xlu0 %v1699, 8
      %v1736 = vpop.permute.xlu0 %1735
      %1737 = vrot.lane.b32.xlu0 %v1702, 8
      %v1738 = vpop.permute.xlu0 %1737
      %1739 = vrot.lane.b32.xlu0 %v1704, 8
      %v1740 = vpop.permute.xlu0 %1739
      %1741 = vrot.lane.b32.xlu0 %v1707, 8
      %v1742 = vpop.permute.xlu0 %1741
      %1743 = vrot.lane.b32.xlu0 %v1709, 8
      %v1744 = vpop.permute.xlu0 %1743
      %1745 = vrot.lane.b32.xlu0 %v1712, 8
      %v1746 = vpop.permute.xlu0 %1745
      %1747 = vrot.lane.b32.xlu0 %v1714, 8
      %v1748 = vpop.permute.xlu0 %1747
      %1749 = vrot.lane.b32.xlu0 %v1717, 8
      %v1750 = vpop.permute.xlu0 %1749
      %1751 = vrot.lane.b32.xlu0 %v1719, 8
      %v1752 = vpop.permute.xlu0 %1751
      %1753 = vrot.lane.b32.xlu0 %v1722, 8
      %v1754 = vpop.permute.xlu0 %1753
      %1755 = vrot.lane.b32.xlu0 %v1724, 8
      %v1756 = vpop.permute.xlu0 %1755
      %v1773 = vrot.slane %v1637, 2
      %v1774 = vrot.slane %v1638, 2
      %v1775 = vsel %vm967, %v1773, %v1774
      %v1776 = vrot.slane %v1639, 2
      %v1777 = vsel %vm967, %v1774, %v1776
      %v1778 = vrot.slane %v1640, 2
      %v1779 = vrot.slane %v1641, 2
      %v1780 = vsel %vm967, %v1778, %v1779
      %v1781 = vrot.slane %v1642, 2
      %v1782 = vsel %vm967, %v1779, %v1781
      %v1783 = vrot.slane %v1643, 2
      %v1784 = vrot.slane %v1644, 2
      %v1785 = vsel %vm967, %v1783, %v1784
      %v1786 = vrot.slane %v1645, 2
      %v1787 = vsel %vm967, %v1784, %v1786
      %v1788 = vrot.slane %v1646, 2
      %v1789 = vrot.slane %v1647, 2
      %v1790 = vsel %vm967, %v1788, %v1789
      %v1791 = vrot.slane %v1648, 2
      %v1792 = vsel %vm967, %v1789, %v1791
      %v1793 = vrot.slane %v1649, 2
      %v1794 = vrot.slane %v1650, 2
      %v1795 = vsel %vm967, %v1793, %v1794
      %v1796 = vrot.slane %v1651, 2
      %v1797 = vsel %vm967, %v1794, %v1796
      %v1798 = vrot.slane %v1652, 2
      %v1799 = vrot.slane %v1653, 2
      %v1800 = vsel %vm967, %v1798, %v1799
      %v1801 = vrot.slane %v1654, 2
      %v1802 = vsel %vm967, %v1799, %v1801
      %v1803 = vrot.slane %v1655, 2
      %v1804 = vrot.slane %v1656, 2
      %v1805 = vsel %vm967, %v1803, %v1804
      %v1806 = vrot.slane %v1657, 2
      %v1807 = vsel %vm967, %v1804, %v1806
      %v1808 = vrot.slane %v1658, 2
      %v1809 = vrot.slane %v1659, 2
      %v1810 = vsel %vm967, %v1808, %v1809
      %v1811 = vrot.slane %v1660, 2
      %v1812 = vsel %vm967, %v1809, %v1811
      %1813 = vrot.lane.b32.xlu0 %v1775, 16
      %v1814 = vpop.permute.xlu0 %1813
      %1815 = vrot.lane.b32.xlu0 %v1777, 16
      %v1816 = vpop.permute.xlu0 %1815
      %1817 = vrot.lane.b32.xlu0 %v1780, 16
      %v1818 = vpop.permute.xlu0 %1817
      %1819 = vrot.lane.b32.xlu0 %v1782, 16
      %v1820 = vpop.permute.xlu0 %1819
      %1821 = vrot.lane.b32.xlu0 %v1785, 16
      %v1822 = vpop.permute.xlu0 %1821
      %1823 = vrot.lane.b32.xlu0 %v1787, 16
      %v1824 = vpop.permute.xlu0 %1823
      %1825 = vrot.lane.b32.xlu0 %v1790, 16
      %v1826 = vpop.permute.xlu0 %1825
      %1827 = vrot.lane.b32.xlu0 %v1792, 16
      %v1828 = vpop.permute.xlu0 %1827
      %1829 = vrot.lane.b32.xlu0 %v1795, 16
      %v1830 = vpop.permute.xlu0 %1829
      %1831 = vrot.lane.b32.xlu0 %v1797, 16
      %v1832 = vpop.permute.xlu0 %1831
      %1833 = vrot.lane.b32.xlu0 %v1800, 16
      %v1834 = vpop.permute.xlu0 %1833
      %1835 = vrot.lane.b32.xlu0 %v1802, 16
      %v1836 = vpop.permute.xlu0 %1835
      %1837 = vrot.lane.b32.xlu0 %v1805, 16
      %v1838 = vpop.permute.xlu0 %1837
      %1839 = vrot.lane.b32.xlu0 %v1807, 16
      %v1840 = vpop.permute.xlu0 %1839
      %1841 = vrot.lane.b32.xlu0 %v1810, 16
      %v1842 = vpop.permute.xlu0 %1841
      %1843 = vrot.lane.b32.xlu0 %v1812, 16
      %v1844 = vpop.permute.xlu0 %1843
      %v1861 = vsel %vm808, %v1637, %v1726
      %v1862 = vsel %vm808, %v1638, %v1728
      %v1863 = vsel %vm808, %v1640, %v1730
      %v1864 = vsel %vm808, %v1641, %v1732
      %v1865 = vsel %vm808, %v1643, %v1734
      %v1866 = vsel %vm808, %v1644, %v1736
      %v1867 = vsel %vm808, %v1646, %v1738
      %v1868 = vsel %vm808, %v1647, %v1740
      %v1869 = vsel %vm808, %v1649, %v1742
      %v1870 = vsel %vm808, %v1650, %v1744
      %v1871 = vsel %vm808, %v1652, %v1746
      %v1872 = vsel %vm808, %v1653, %v1748
      %v1873 = vsel %vm808, %v1655, %v1750
      %v1874 = vsel %vm808, %v1656, %v1752
      %v1875 = vsel %vm808, %v1658, %v1754
      %v1876 = vsel %vm808, %v1659, %v1756
      %v1877 = vsel %vm1072, %v1861, %v1814
      %v1878 = vsel %vm1072, %v1862, %v1816
      %v1879 = vsel %vm1072, %v1863, %v1818
      %v1880 = vsel %vm1072, %v1864, %v1820
      %v1881 = vsel %vm1072, %v1865, %v1822
      %v1882 = vsel %vm1072, %v1866, %v1824
      %v1883 = vsel %vm1072, %v1867, %v1826
      %v1884 = vsel %vm1072, %v1868, %v1828
      %v1885 = vsel %vm1072, %v1869, %v1830
      %v1886 = vsel %vm1072, %v1870, %v1832
      %v1887 = vsel %vm1072, %v1871, %v1834
      %v1888 = vsel %vm1072, %v1872, %v1836
      %v1889 = vsel %vm1072, %v1873, %v1838
      %v1890 = vsel %vm1072, %v1874, %v1840
      %v1891 = vsel %vm1072, %v1875, %v1842
      %v1892 = vsel %vm1072, %v1876, %v1844
      %v1893 = vpack.c.bf16 %v1878, %v1877
      %v1894 = vpack.c.bf16 %v1880, %v1879
      %v1895 = vpack.c.bf16 %v1882, %v1881
      %v1896 = vpack.c.bf16 %v1884, %v1883
      %v1897 = vpack.c.bf16 %v1886, %v1885
      %v1898 = vpack.c.bf16 %v1888, %v1887
      %v1899 = vpack.c.bf16 %v1890, %v1889
      %v1900 = vpack.c.bf16 %v1892, %v1891
      %s1901 = scalar_lea.vmem %s6, 24
      %v1902 = vld [vmem:[%s1901] sm:$0xf]
      %v1903 = vld [vmem:[%s1901 + $0x4] sm:$0xf]
      %v1904 = vld [vmem:[%s1901 + $0x8] sm:$0xf]
      %v1908 = vunpack.c.l.b16 %v1902
      %v1909 = vunpack.c.l.b16 %v1903
      %v1910 = vunpack.c.l.b16 %v1904
      %v1911 = vpack.c.b16 %v1909, %v1908
      %v1912 = vpack.c.b16 %v1910, %v1910
      %v1915 = vsel %vm1377, %v1893, 0
      %v1918 = vsel %vm1377, %v1894, 0
      %v1921 = vsel %vm1377, %v1895, 0
      %v1924 = vsel %vm1377, %v1896, 0
      %v1927 = vsel %vm1377, %v1897, 0
      %v1930 = vsel %vm1377, %v1898, 0
      %v1933 = vsel %vm1377, %v1899, 0
      %v1936 = vsel %vm1377, %v1900, 0
      %v1939 = vsel %vm1402, %v1912, 0
      %1941 = vmatprep.subr.bf16.mxu0 0
      %1942 = vmatpush1.bf16.msra.mxu0 %v1911
      %1943 = vmatprep.subr.bf16.mxu0 0
      %1944 = vmatpush1.bf16.msra.mxu0 %v1939
      %1945 = vmatprep.subr.bf16.mxu0 0
      %1946 = vmatpush1.bf16.msra.mxu0 0
      %1947 = vmatprep.subr.bf16.mxu0 0
      %1948 = vmatpush1.bf16.msra.mxu0 0
      %1949 = vmatprep.subr.bf16.mxu0 0
      %1950 = vmatpush1.bf16.msra.mxu0 0
      %1951 = vmatprep.subr.bf16.mxu0 0
      %1952 = vmatpush1.bf16.msra.mxu0 0
      %1953 = vmatprep.subr.bf16.mxu0 0
      %1954 = vmatpush1.bf16.msra.mxu0 0
      %1955 = vmatprep.subr.bf16.mxu0 0
      %1956 = vmatpush1.bf16.msra.mxu0 0
      %1957 = vmatprep.subr.bf16.mxu0 0
      %1958 = vmatpush1.bf16.msra.mxu0 0
      %1959 = vmatprep.subr.bf16.mxu0 0
      %1960 = vmatpush1.bf16.msra.mxu0 0
      %1961 = vmatprep.subr.bf16.mxu0 0
      %1962 = vmatpush1.bf16.msra.mxu0 0
      %1963 = vmatprep.subr.bf16.mxu0 0
      %1964 = vmatpush1.bf16.msra.mxu0 0
      %1965 = vmatprep.subr.bf16.mxu0 0
      %1966 = vmatpush1.bf16.msra.mxu0 0
      %1967 = vmatprep.subr.bf16.mxu0 0
      %1968 = vmatpush1.bf16.msra.mxu0 0
      %1969 = vmatprep.subr.bf16.mxu0 0
      %1970 = vmatpush1.bf16.msra.mxu0 0
      %1971 = vmatprep.subr.bf16.mxu0 0
      %1972 = vmatpush1.bf16.msra.mxu0 0
      %1973 = vmatprep.mubr.bf16.mxu0 0
      %1974 = vmatmul.mubr.bf16.gmra.mrb[0].mxu0 %v1915
      %v1975 = vpop.f32.mrb[0].mxu0
      %v1976 = vadd.f32 0.0, %v1975
      %v1977 = vpop.f32.mrb[0].mxu0
      %v1978 = vpop.f32.mrb[0].mxu0
      %v1979 = vadd.f32 0.0, %v1978
      %v1980 = vpop.f32.mrb[0].mxu0
      %1981 = vmatprep.mubr.bf16.mxu0 0
      %1982 = vmatmul.mubr.bf16.gmra.mrb[0].mxu0 %v1918
      %v1983 = vpop.f32.mrb[0].mxu0
      %v1984 = vadd.f32 0.0, %v1983
      %v1985 = vpop.f32.mrb[0].mxu0
      %v1986 = vpop.f32.mrb[0].mxu0
      %v1987 = vadd.f32 0.0, %v1986
      %v1988 = vpop.f32.mrb[0].mxu0
      %1989 = vmatprep.mubr.bf16.mxu0 0
      %1990 = vmatmul.mubr.bf16.gmra.mrb[0].mxu0 %v1921
      %v1991 = vpop.f32.mrb[0].mxu0
      %v1992 = vadd.f32 0.0, %v1991
      %v1993 = vpop.f32.mrb[0].mxu0
      %v1994 = vpop.f32.mrb[0].mxu0
      %v1995 = vadd.f32 0.0, %v1994
      %v1996 = vpop.f32.mrb[0].mxu0
      %1997 = vmatprep.mubr.bf16.mxu0 0
      %1998 = vmatmul.mubr.bf16.gmra.mrb[0].mxu0 %v1924
      %v1999 = vpop.f32.mrb[0].mxu0
      %v2000 = vadd.f32 0.0, %v1999
      %v2001 = vpop.f32.mrb[0].mxu0
      %v2002 = vpop.f32.mrb[0].mxu0
      %v2003 = vadd.f32 0.0, %v2002
      %v2004 = vpop.f32.mrb[0].mxu0
      %2005 = vmatprep.mubr.bf16.mxu0 0
      %2006 = vmatmul.mubr.bf16.gmra.mrb[0].mxu0 %v1927
      %v2007 = vpop.f32.mrb[0].mxu0
      %v2008 = vadd.f32 0.0, %v2007
      %v2009 = vpop.f32.mrb[0].mxu0
      %v2010 = vpop.f32.mrb[0].mxu0
      %v2011 = vadd.f32 0.0, %v2010
      %v2012 = vpop.f32.mrb[0].mxu0
      %2013 = vmatprep.mubr.bf16.mxu0 0
      %2014 = vmatmul.mubr.bf16.gmra.mrb[0].mxu0 %v1930
      %v2015 = vpop.f32.mrb[0].mxu0
      %v2016 = vadd.f32 0.0, %v2015
      %v2017 = vpop.f32.mrb[0].mxu0
      %v2018 = vpop.f32.mrb[0].mxu0
      %v2019 = vadd.f32 0.0, %v2018
      %v2020 = vpop.f32.mrb[0].mxu0
      %2021 = vmatprep.mubr.bf16.mxu0 0
      %2022 = vmatmul.mubr.bf16.gmra.mrb[0].mxu0 %v1933
      %v2023 = vpop.f32.mrb[0].mxu0
      %v2024 = vadd.f32 0.0, %v2023
      %v2025 = vpop.f32.mrb[0].mxu0
      %v2026 = vpop.f32.mrb[0].mxu0
      %v2027 = vadd.f32 0.0, %v2026
      %v2028 = vpop.f32.mrb[0].mxu0
      %2029 = vmatprep.mubr.bf16.mxu0 0
      %2030 = vmatmul.mubr.bf16.gmra.mrb[0].mxu0 %v1936
      %v2031 = vpop.f32.mrb[0].mxu0
      %v2032 = vadd.f32 0.0, %v2031
      %v2033 = vpop.f32.mrb[0].mxu0
      %v2034 = vpop.f32.mrb[0].mxu0
      %v2035 = vadd.f32 0.0, %v2034
      %v2036 = vpop.f32.mrb[0].mxu0
      %2037 = vdwg.mxu0
      %v2038 = vadd.f32 %v1574, %v1976
      %v2039 = vadd.f32 %v1577, %v1979
      %v2040 = vadd.f32 %v1582, %v1984
      %v2041 = vadd.f32 %v1585, %v1987
      %v2042 = vadd.f32 %v1590, %v1992
      %v2043 = vadd.f32 %v1593, %v1995
      %v2044 = vadd.f32 %v1598, %v2000
      %v2045 = vadd.f32 %v1601, %v2003
      %v2046 = vadd.f32 %v1606, %v2008
      %v2047 = vadd.f32 %v1609, %v2011
      %v2048 = vadd.f32 %v1614, %v2016
      %v2049 = vadd.f32 %v1617, %v2019
      %v2050 = vadd.f32 %v1622, %v2024
      %v2051 = vadd.f32 %v1625, %v2027
      %v2052 = vadd.f32 %v1630, %v2032
      %v2053 = vadd.f32 %v1633, %v2035
      %v2054 = vld [vmem:[%s7] sm:$0x1]
      %v2056 = vlaneseq
      %v2057 = vshrl.u32 %v2056, 7
      %v2058 = vsub.s32 0, %v2057
      %v2059 = vrot.slane %v2054, %v2058
      %v2061 = vadd.f32 %v2038, %v2059
      %v2062 = vadd.f32 %v2039, %v2059
      %v2063 = vadd.f32 %v2040, %v2059
      %v2064 = vadd.f32 %v2041, %v2059
      %v2065 = vadd.f32 %v2042, %v2059
      %v2066 = vadd.f32 %v2043, %v2059
      %v2067 = vadd.f32 %v2044, %v2059
      %v2068 = vadd.f32 %v2045, %v2059
      %v2069 = vadd.f32 %v2046, %v2059
      %v2070 = vadd.f32 %v2047, %v2059
      %v2071 = vadd.f32 %v2048, %v2059
      %v2072 = vadd.f32 %v2049, %v2059
      %v2073 = vadd.f32 %v2050, %v2059
      %v2074 = vadd.f32 %v2051, %v2059
      %v2075 = vadd.f32 %v2052, %v2059
      %v2076 = vadd.f32 %v2053, %v2059
      %v2077 = vld [vmem:[%s520] sm:$0xff]
      %v2078 = vld [vmem:[%s520 + $0x8] sm:$0xff]
      %v2079 = vld [vmem:[%s520 + $0x10] sm:$0xff]
      %v2080 = vld [vmem:[%s520 + $0x18] sm:$0xff]
      %v2081 = vld [vmem:[%s520 + $0x20] sm:$0xff]
      %v2082 = vld [vmem:[%s520 + $0x28] sm:$0xff]
      %v2083 = vld [vmem:[%s520 + $0x30] sm:$0xff]
      %v2084 = vld [vmem:[%s520 + $0x38] sm:$0xff]
      %v2085 = vld [vmem:[%s520 + $0x40] sm:$0xff]
      %v2086 = vld [vmem:[%s520 + $0x48] sm:$0xff]
      %v2087 = vld [vmem:[%s520 + $0x50] sm:$0xff]
      %v2088 = vld [vmem:[%s520 + $0x58] sm:$0xff]
      %v2089 = vld [vmem:[%s520 + $0x60] sm:$0xff]
      %v2090 = vld [vmem:[%s520 + $0x68] sm:$0xff]
      %v2091 = vld [vmem:[%s520 + $0x70] sm:$0xff]
      %v2092 = vld [vmem:[%s520 + $0x78] sm:$0xff]
      %v2093 = vpack.c.bf16 %v2078, %v2077
      %v2094 = vpack.c.bf16 %v2080, %v2079
      %v2095 = vpack.c.bf16 %v2082, %v2081
      %v2096 = vpack.c.bf16 %v2084, %v2083
      %v2097 = vpack.c.bf16 %v2086, %v2085
      %v2098 = vpack.c.bf16 %v2088, %v2087
      %v2099 = vpack.c.bf16 %v2090, %v2089
      %v2100 = vpack.c.bf16 %v2092, %v2091
      %v2101 = vld [vmem:[%s8] sm:$0x3]
      %v2102 = vld [vmem:[%s9] sm:$0x1]
      %v2104 = vlaneseq
      %v2105 = vshrl.u32 %v2104, 7
      %v2106 = vsub.s32 0, %v2105
      %v2107 = vrot.slane %v2102, %v2106
      %vm2109 = vcmask 31744
      %v2111 = vsel %vm2109, %v2093, 0
      %v2114 = vsel %vm2109, %v2094, 0
      %v2117 = vsel %vm2109, %v2095, 0
      %v2120 = vsel %vm2109, %v2096, 0
      %v2123 = vsel %vm2109, %v2097, 0
      %v2126 = vsel %vm2109, %v2098, 0
      %v2129 = vsel %vm2109, %v2099, 0
      %v2132 = vsel %vm2109, %v2100, 0
      %vm2134 = vcmask 1041408
      %v2136 = vsel %vm2134, %v2101, 0
      %2138 = vmatprep.subr.bf16.mxu0 0
      %2139 = vmatpush1.bf16.msra.mxu0 %v2136
      %2140 = vmatprep.subr.bf16.mxu0 0
      %2141 = vmatpush1.bf16.msra.mxu0 0
      %2142 = vmatprep.subr.bf16.mxu0 0
      %2143 = vmatpush1.bf16.msra.mxu0 0
      %2144 = vmatprep.subr.bf16.mxu0 0
      %2145 = vmatpush1.bf16.msra.mxu0 0
      %2146 = vmatprep.subr.bf16.mxu0 0
      %2147 = vmatpush1.bf16.msra.mxu0 0
      %2148 = vmatprep.subr.bf16.mxu0 0
      %2149 = vmatpush1.bf16.msra.mxu0 0
      %2150 = vmatprep.subr.bf16.mxu0 0
      %2151 = vmatpush1.bf16.msra.mxu0 0
      %2152 = vmatprep.subr.bf16.mxu0 0
      %2153 = vmatpush1.bf16.msra.mxu0 0
      %2154 = vmatprep.subr.bf16.mxu0 0
      %2155 = vmatpush1.bf16.msra.mxu0 0
      %2156 = vmatprep.subr.bf16.mxu0 0
      %2157 = vmatpush1.bf16.msra.mxu0 0
      %2158 = vmatprep.subr.bf16.mxu0 0
      %2159 = vmatpush1.bf16.msra.mxu0 0
      %2160 = vmatprep.subr.bf16.mxu0 0
      %2161 = vmatpush1.bf16.msra.mxu0 0
      %2162 = vmatprep.subr.bf16.mxu0 0
      %2163 = vmatpush1.bf16.msra.mxu0 0
      %2164 = vmatprep.subr.bf16.mxu0 0
      %2165 = vmatpush1.bf16.msra.mxu0 0
      %2166 = vmatprep.subr.bf16.mxu0 0
      %2167 = vmatpush1.bf16.msra.mxu0 0
      %2168 = vmatprep.subr.bf16.mxu0 0
      %2169 = vmatpush1.bf16.msra.mxu0 0
      %2170 = vmatprep.mubr.bf16.mxu0 0
      %2171 = vmatmul.mubr.bf16.gmra.mrb[0].mxu0 %v2111
      %v2172 = vpop.f32.mrb[0].mxu0
      %v2173 = vadd.f32 %v2107, %v2172
      %v2174 = vpop.f32.mrb[0].mxu0
      %v2175 = vpop.f32.mrb[0].mxu0
      %v2176 = vadd.f32 %v2107, %v2175
      %v2177 = vpop.f32.mrb[0].mxu0
      %2178 = vmatprep.mubr.bf16.mxu0 0
      %2179 = vmatmul.mubr.bf16.gmra.mrb[0].mxu0 %v2114
      %v2180 = vpop.f32.mrb[0].mxu0
      %v2181 = vadd.f32 %v2107, %v2180
      %v2182 = vpop.f32.mrb[0].mxu0
      %v2183 = vpop.f32.mrb[0].mxu0
      %v2184 = vadd.f32 %v2107, %v2183
      %v2185 = vpop.f32.mrb[0].mxu0
      %2186 = vmatprep.mubr.bf16.mxu0 0
      %2187 = vmatmul.mubr.bf16.gmra.mrb[0].mxu0 %v2117
      %v2188 = vpop.f32.mrb[0].mxu0
      %v2189 = vadd.f32 %v2107, %v2188
      %v2190 = vpop.f32.mrb[0].mxu0
      %v2191 = vpop.f32.mrb[0].mxu0
      %v2192 = vadd.f32 %v2107, %v2191
      %v2193 = vpop.f32.mrb[0].mxu0
      %2194 = vmatprep.mubr.bf16.mxu0 0
      %2195 = vmatmul.mubr.bf16.gmra.mrb[0].mxu0 %v2120
      %v2196 = vpop.f32.mrb[0].mxu0
      %v2197 = vadd.f32 %v2107, %v2196
      %v2198 = vpop.f32.mrb[0].mxu0
      %v2199 = vpop.f32.mrb[0].mxu0
      %v2200 = vadd.f32 %v2107, %v2199
      %v2201 = vpop.f32.mrb[0].mxu0
      %2202 = vmatprep.mubr.bf16.mxu0 0
      %2203 = vmatmul.mubr.bf16.gmra.mrb[0].mxu0 %v2123
      %v2204 = vpop.f32.mrb[0].mxu0
      %v2205 = vadd.f32 %v2107, %v2204
      %v2206 = vpop.f32.mrb[0].mxu0
      %v2207 = vpop.f32.mrb[0].mxu0
      %v2208 = vadd.f32 %v2107, %v2207
      %v2209 = vpop.f32.mrb[0].mxu0
      %2210 = vmatprep.mubr.bf16.mxu0 0
      %2211 = vmatmul.mubr.bf16.gmra.mrb[0].mxu0 %v2126
      %v2212 = vpop.f32.mrb[0].mxu0
      %v2213 = vadd.f32 %v2107, %v2212
      %v2214 = vpop.f32.mrb[0].mxu0
      %v2215 = vpop.f32.mrb[0].mxu0
      %v2216 = vadd.f32 %v2107, %v2215
      %v2217 = vpop.f32.mrb[0].mxu0
      %2218 = vmatprep.mubr.bf16.mxu0 0
      %2219 = vmatmul.mubr.bf16.gmra.mrb[0].mxu0 %v2129
      %v2220 = vpop.f32.mrb[0].mxu0
      %v2221 = vadd.f32 %v2107, %v2220
      %v2222 = vpop.f32.mrb[0].mxu0
      %v2223 = vpop.f32.mrb[0].mxu0
      %v2224 = vadd.f32 %v2107, %v2223
      %v2225 = vpop.f32.mrb[0].mxu0
      %2226 = vmatprep.mubr.bf16.mxu0 0
      %2227 = vmatmul.mubr.bf16.gmra.mrb[0].mxu0 %v2132
      %v2228 = vpop.f32.mrb[0].mxu0
      %v2229 = vadd.f32 %v2107, %v2228
      %v2230 = vpop.f32.mrb[0].mxu0
      %v2231 = vpop.f32.mrb[0].mxu0
      %v2232 = vadd.f32 %v2107, %v2231
      %v2233 = vpop.f32.mrb[0].mxu0
      %2234 = vdwg.mxu0
      %v2235 = vadd.f32 %v2173, %v2061
      %v2236 = vadd.f32 %v2176, %v2062
      %v2237 = vadd.f32 %v2181, %v2063
      %v2238 = vadd.f32 %v2184, %v2064
      %v2239 = vadd.f32 %v2189, %v2065
      %v2240 = vadd.f32 %v2192, %v2066
      %v2241 = vadd.f32 %v2197, %v2067
      %v2242 = vadd.f32 %v2200, %v2068
      %v2243 = vadd.f32 %v2205, %v2069
      %v2244 = vadd.f32 %v2208, %v2070
      %v2245 = vadd.f32 %v2213, %v2071
      %v2246 = vadd.f32 %v2216, %v2072
      %v2247 = vadd.f32 %v2221, %v2073
      %v2248 = vadd.f32 %v2224, %v2074
      %v2249 = vadd.f32 %v2229, %v2075
      %v2250 = vadd.f32 %v2232, %v2076
      %2251 = vst.msk [vmem:[%s537] sm:$0xff] %vm808, %v2235
      %2252 = vst.msk [vmem:[%s537 + $0x8] sm:$0xff] %vm808, %v2236
      %2253 = vst.msk [vmem:[%s537 + $0x10] sm:$0xff] %vm808, %v2237
      %2254 = vst.msk [vmem:[%s537 + $0x18] sm:$0xff] %vm808, %v2238
      %2255 = vst.msk [vmem:[%s537 + $0x20] sm:$0xff] %vm808, %v2239
      %2256 = vst.msk [vmem:[%s537 + $0x28] sm:$0xff] %vm808, %v2240
      %2257 = vst.msk [vmem:[%s537 + $0x30] sm:$0xff] %vm808, %v2241
      %2258 = vst.msk [vmem:[%s537 + $0x38] sm:$0xff] %vm808, %v2242
      %2259 = vst.msk [vmem:[%s537 + $0x40] sm:$0xff] %vm808, %v2243
      %2260 = vst.msk [vmem:[%s537 + $0x48] sm:$0xff] %vm808, %v2244
      %2261 = vst.msk [vmem:[%s537 + $0x50] sm:$0xff] %vm808, %v2245
      %2262 = vst.msk [vmem:[%s537 + $0x58] sm:$0xff] %vm808, %v2246
      %2263 = vst.msk [vmem:[%s537 + $0x60] sm:$0xff] %vm808, %v2247
      %2264 = vst.msk [vmem:[%s537 + $0x68] sm:$0xff] %vm808, %v2248
      %2265 = vst.msk [vmem:[%s537 + $0x70] sm:$0xff] %vm808, %v2249
      %2266 = vst.msk [vmem:[%s537 + $0x78] sm:$0xff] %vm808, %v2250
      %s2267 = smul.u32 8, %s26
      %p2268 = scmp.lt.s32.totalorder %s25, 1
      %s2269 = scalar_select %p2268, %s25, 1
      %p2270 = scmp.lt.s32.totalorder %s2267, 15
      %s2271 = scalar_select %p2270, %s2267, 15
      %s2272 = smul.addr %s2271, 2
      %s2273 = smul.addr %s2269, 32
      %s2274 = sadd.s32 %s2272, %s2273
      %s2275 = smul.addr %s2274, 8
      %s2276 = scalar_lea.vmem %s10, %s2275
      // Predicated region
      $region61: #{resnet_block_forward.5} parent=59 // pred_check
        %p2277 = pneg %p301
      $region62: #{resnet_block_forward.5} parent=59 // pred_check_branch
        %2279 = sbr.rel (%p2277) target = $region64
      $region63: #{resnet_block_forward.5} parent=59 // pred_region
        %s2280 = smul.u32 8, %s26
      $region64: #{resnet_block_forward.5} parent=59 // pred_fallthru
        _
    $region60: #{resnet_block_forward.5} parent=5 // pred_fallthru
      _
    %p2281 = scmp.le.s32.totalorder 2, %s16
    // Predicated region
    $region65: #{resnet_block_forward.5} parent=5 // pred_check
      %p2282 = pneg %p2281
    $region66: #{resnet_block_forward.5} parent=5 // pred_check_branch
      %2284 = sbr.rel (%p2282) target = $region68
    $region67: #{resnet_block_forward.5} parent=5 // pred_region
      %s2285 = ssub.s32 %s16, 2
      // Predicated region
      $region69: #{resnet_block_forward.5} parent=67 // pred_check
        %p2286 = pneg %p307
      $region70: #{resnet_block_forward.5} parent=67 // pred_check_branch
        %2288 = sbr.rel (%p2286) target = $region72
      $region71: #{resnet_block_forward.5} parent=67 // pred_region
        %s2289 = smul.u32 8, %s28
        %p2290 = scmp.lt.s32.totalorder %s27, 1
        %s2291 = scalar_select %p2290, %s27, 1
        %p2292 = scmp.lt.s32.totalorder %s2289, 15
        %s2293 = scalar_select %p2292, %s2289, 15
        %s2294 = smul.addr %s2293, 2
        %s2295 = smul.addr %s2291, 32
        %s2296 = sadd.s32 %s2294, %s2295
        %s2297 = smul.addr %s2296, 8
        %s2298 = scalar_lea.vmem %s10, %s2297
      $region72: #{resnet_block_forward.5} parent=67 // pred_fallthru
        _
    $region68: #{resnet_block_forward.5} parent=5 // pred_fallthru
      _
  $region6: #{resnet_block_forward.5} parent=0 // loop_footer
    %s20 = sadd.s32 1, %s16
  $region7: #{resnet_block_forward.5} parent=0 // loop_footer_branch
    %15 = sbr.rel target = $region3
  $region8: #{resnet_block_forward.5} parent=0 // loop_exit
    _

</llo_original>
